<compile_context>
chip_gen: v6e
topology: v6e:2x2x1
jax: 0.10.0
libtpu: 0.0.40
codegen_flags: <defaults>
</compile_context>

<pallas_src>
import functools

import jax
import jax.numpy as jnp
from jax import lax
from jax.experimental import pallas as pl
from jax.experimental.pallas import tpu as pltpu


# ----------------------------------------------------------------------------
# Pallas kernel
# ----------------------------------------------------------------------------
def _bilstm_kernel(x_ref,
                   wih0f_ref, wih0b_ref, b0_ref, whh0_ref,
                   wih1f_ref, wih1b_ref, b1_ref, whh1_ref,
                   wh_ref, bh_ref,
                   out_ref,
                   *, seq_len, nhid):
    T = seq_len
    H = nhid
    TB = x_ref.shape[0]
    B = TB // T                      # padded batch: multiple of 8 (wrapper)
    f32 = jnp.float32
    bf16 = jnp.bfloat16

    def dot32(a, b):
        return jnp.dot(a, b, preferred_element_type=f32)

    def blk(v, t):                   # 8-row-aligned sublane slice of a value
        return v[t * B:(t + 1) * B, :]

    def rev_time(v):                 # time reversal via aligned block concat
        return jnp.concatenate([blk(v, T - 1 - t) for t in range(T)], axis=0)

    def run_layer(chunks, wih_f, wih_b, b, whh):
        """One bidirectional layer with both directions fused per step.

        chunks: list of (input_nat_bf16, input_rev_bf16, row_offset) covering
        the rows of the (gate-interleaved, zero-padded) W_ih matrices; the
        layer-0/1 direction outputs are fed row-split so no lane concat of the
        two halves is ever materialized.

        Gate columns use [i_f,i_b,f_f,f_b,o_f,o_b,g_f,g_b]; the gate buffer gx
        row-block t holds the forward gates of time t and the backward gates
        of time T-1-t, so ONE (B,2H)@(2H,8H) matmul + one sigmoid + two tanh
        per step drive both directions, and h/c stay contiguous [fwd|bwd].
        """
        gx = b                       # (1, 8H) broadcasts once, outside the loop
        for nat, rev, r0 in chunks:
            r1 = r0 + nat.shape[1]
            gx = gx + dot32(nat, wih_f[r0:r1]) + dot32(rev, wih_b[r0:r1])

        h = jnp.zeros((B, 2 * H), f32)           # [h_fwd | h_bwd]
        c = jnp.zeros((B, 2 * H), f32)
        hs = []                                  # vreg-resident per-step h
        for t in range(T):                       # fully unrolled serial chain
            g = blk(gx, t) + dot32(h.astype(bf16), whh)
            sig = jax.nn.sigmoid(g[:, :6 * H])   # [i_f,i_b,f_f,f_b,o_f,o_b]
            i_g = sig[:, 0 * H:2 * H]
            f_g = sig[:, 2 * H:4 * H]
            o_g = sig[:, 4 * H:6 * H]
            g_g = jnp.tanh(g[:, 6 * H:8 * H])    # [g_f | g_b]
            c = f_g * c + i_g * g_g
            h = o_g * jnp.tanh(c)
            hs.append(h)
        return hs

    # ---- layer 0 -----------------------------------------------------------
    x = x_ref[...]                               # (T*B, F) f32
    x_rev = rev_time(x)
    hs0 = run_layer([(x.astype(bf16), x_rev.astype(bf16), 0)],
                    wih0f_ref[...], wih0b_ref[...], b0_ref[...], whh0_ref[...])

    # Time-ordered (and time-reversed) stacks of the two direction outputs,
    # assembled from values with 8-row-aligned concats only (no stores).
    h0f = jnp.concatenate([hs0[t][:, :H] for t in range(T)], axis=0)
    h0f_rev = jnp.concatenate([hs0[T - 1 - t][:, :H] for t in range(T)], axis=0)
    h0b = jnp.concatenate([hs0[T - 1 - t][:, H:] for t in range(T)], axis=0)
    h0b_rev = jnp.concatenate([hs0[t][:, H:] for t in range(T)], axis=0)

    # ---- layer 1 (consumes [h0f | h0b] via row-split W_ih) ------------------
    hs1 = run_layer([(h0f.astype(bf16), h0f_rev.astype(bf16), 0),
                     (h0b.astype(bf16), h0b_rev.astype(bf16), H)],
                    wih1f_ref[...], wih1b_ref[...], b1_ref[...], whh1_ref[...])

    h1f = jnp.concatenate([hs1[t][:, :H] for t in range(T)], axis=0)
    h1b = jnp.concatenate([hs1[T - 1 - t][:, H:] for t in range(T)], axis=0)

    # ---- fused linear heads: bulk epilogue on vreg-resident hiddens ---------
    wh = wh_ref[...]                             # (2H, 2) bf16
    out_ref[...] = (dot32(h1f.astype(bf16), wh[:H])
                    + dot32(h1b.astype(bf16), wh[H:])
                    + bh_ref[...])


# ----------------------------------------------------------------------------
# Wrapper
# ----------------------------------------------------------------------------
def bilstm_forward(kparams, x_date, x_feature, x_mask_data):
    """Forward pass of BILSTM: returns (act_pre, con_pre), each (T, B, 1)."""
    del x_date, x_mask_data                      # unused by the reference forward
    T, B, F = x_feature.shape
    H = kparams["nhid"]

    # Pad the batch to a multiple of 8 so every per-timestep row block is a
    # sublane-aligned (8, *) tile inside the kernel (padding rows are free:
    # they ride in the same vregs and are discarded on the way out).
    Bp = max(8, -(-B // 8) * 8)
    x_p = jnp.zeros((T, Bp, F), jnp.float32).at[:, :B, :].set(x_feature)
    x2d = x_p.reshape(T * Bp, F)

    args = (x2d,
            *kparams["l0"],                      # wih0f, wih0b, b0, whh0
            *kparams["l1"],                      # wih1f, wih1b, b1, whh1
            kparams["w_heads"], kparams["b_heads"])

    flops = (2 * (2 * T * Bp * F * 8 * H)        # layer-0 input projections
             + 4 * (2 * T * Bp * H * 8 * H)      # layer-1 input projections
             + 2 * T * (2 * Bp * 2 * H * 8 * H)  # recurrent matmuls (both layers)
             + 2 * (2 * T * Bp * H * 2))         # heads
    transcendentals = 2 * T * Bp * 10 * H        # sigmoid(6H)+tanh(2H)+tanh(2H)
    bytes_accessed = (sum(int(a.size) * a.dtype.itemsize for a in args)
                      + T * Bp * 2 * 4)

    vmem = pl.BlockSpec(memory_space=pltpu.MemorySpace.VMEM)
    heads2d = pl.pallas_call(
        functools.partial(_bilstm_kernel, seq_len=T, nhid=H),
        out_shape=jax.ShapeDtypeStruct((T * Bp, 2), jnp.float32),
        in_specs=[vmem] * len(args),
        out_specs=vmem,
        cost_estimate=pl.CostEstimate(flops=flops,
                                      transcendentals=transcendentals,
                                      bytes_accessed=bytes_accessed),
    )(*args)

    heads = heads2d.reshape(T, Bp, 2)[:, :B, :]
    return heads[..., 0:1], heads[..., 1:2]


# ----------------------------------------------------------------------------
# Parameter construction (PyTorch-style uniform init, gate order [i, f, o, g])
# ----------------------------------------------------------------------------
def init_params(key, nfeat, nhid):
    keys = iter(jax.random.split(key, 20))

    def uni(shape, bound):
        return jax.random.uniform(next(keys), shape, jnp.float32, -bound, bound)

    kb = 1.0 / (nhid ** 0.5)

    def lstm_dir(din):
        w_ih = uni((din, 4 * nhid), kb)          # (D_in, 4H), gates [i,f,o,g]
        w_hh = uni((nhid, 4 * nhid), kb)         # (H, 4H)
        b_ih = uni((1, 4 * nhid), kb)
        b_hh = uni((1, 4 * nhid), kb)
        return (w_ih, w_hh, b_ih + b_hh)         # biases pre-summed

    params = {
        "nhid": nhid,
        "l0_fwd": lstm_dir(nfeat),
        "l0_bwd": lstm_dir(nfeat),
        "l1_fwd": lstm_dir(2 * nhid),
        "l1_bwd": lstm_dir(2 * nhid),
    }
    kl = 1.0 / ((2 * nhid) ** 0.5)
    w_act, b_act = uni((2 * nhid, 1), kl), uni((1, 1), kl)
    w_con, b_con = uni((2 * nhid, 1), kl), uni((1, 1), kl)
    params["w_heads"] = jnp.concatenate([w_act, w_con], axis=1)   # (2H, 2)
    params["b_heads"] = jnp.concatenate([b_act, b_con], axis=1)   # (1, 2)
    return params


def _to_slots(w, slot, H):
    """Scatter a (D, 4H) per-direction matrix (gate order [i,f,o,g]) into a
    (D, 8H) matrix with the fused-direction column layout
    [i_f,i_b,f_f,f_b,o_f,o_b,g_f,g_b].  slot 0 = forward, 1 = backward."""
    wide = jnp.zeros((w.shape[0], 8 * H), w.dtype)
    for k in range(4):
        wide = wide.at[:, (2 * k + slot) * H:(2 * k + slot + 1) * H].set(
            w[:, k * H:(k + 1) * H])
    return wide


def prepare_kernel_params(p):
    """Build the fused/interleaved, bf16-pre-cast weights the kernel consumes."""
    H = p["nhid"]
    bf16 = jnp.bfloat16

    def layer(fwd, bwd):
        wih_f, whh_f, b_f = fwd
        wih_b, whh_b, b_b = bwd
        wih_f_w = _to_slots(wih_f, 0, H).astype(bf16)             # (Din, 8H)
        wih_b_w = _to_slots(wih_b, 1, H).astype(bf16)
        whh = jnp.concatenate([_to_slots(whh_f, 0, H),
                               _to_slots(whh_b, 1, H)], axis=0).astype(bf16)  # (2H, 8H)
        b = (_to_slots(b_f, 0, H) + _to_slots(b_b, 1, H)).astype(jnp.float32)  # (1, 8H)
        return (wih_f_w, wih_b_w, b, whh)

    return {
        "nhid": H,
        "l0": layer(p["l0_fwd"], p["l0_bwd"]),
        "l1": layer(p["l1_fwd"], p["l1_bwd"]),
        "w_heads": p["w_heads"].astype(bf16),                     # (2H, 2)
        "b_heads": p["b_heads"].astype(jnp.float32),              # (1, 2)
    }


# ----------------------------------------------------------------------------
# Pure-JAX reference (same math / same gate layout) for sanity checks
# ----------------------------------------------------------------------------
def _ref_lstm_dir(x, w_ih, w_hh, b, nhid, reverse, mm_dtype):
    xs = x[::-1] if reverse else x

    def mm(a, w):
        if mm_dtype is None:
            return jnp.dot(a, w, preferred_element_type=jnp.float32,
                           precision=lax.Precision.HIGHEST)
        return jnp.dot(a.astype(mm_dtype), w.astype(mm_dtype),
                       preferred_element_type=jnp.float32)

    def step(carry, x_t):
        h, c = carry
        gates = mm(x_t, w_ih) + mm(h, w_hh) + b
        i = jax.nn.sigmoid(gates[:, 0 * nhid:1 * nhid])
        f = jax.nn.sigmoid(gates[:, 1 * nhid:2 * nhid])
        o = jax.nn.sigmoid(gates[:, 2 * nhid:3 * nhid])
        g = jnp.tanh(gates[:, 3 * nhid:4 * nhid])
        c = f * c + i * g
        h = o * jnp.tanh(c)
        return (h, c), h

    init = (jnp.zeros((x.shape[1], nhid), jnp.float32),
            jnp.zeros((x.shape[1], nhid), jnp.float32))
    _, hs = lax.scan(step, init, xs)
    return hs[::-1] if reverse else hs


def bilstm_reference(params, x_feature, mm_dtype=None):
    nhid = params["nhid"]

    def mm(a, w):
        if mm_dtype is None:
            return jnp.dot(a, w, preferred_element_type=jnp.float32,
                           precision=lax.Precision.HIGHEST)
        return jnp.dot(a.astype(mm_dtype), w.astype(mm_dtype),
                       preferred_element_type=jnp.float32)

    x = x_feature
    x1 = jnp.concatenate(
        [_ref_lstm_dir(x, *params["l0_fwd"], nhid, False, mm_dtype),
         _ref_lstm_dir(x, *params["l0_bwd"], nhid, True, mm_dtype)], axis=-1)
    out = jnp.concatenate(
        [_ref_lstm_dir(x1, *params["l1_fwd"], nhid, False, mm_dtype),
         _ref_lstm_dir(x1, *params["l1_bwd"], nhid, True, mm_dtype)], axis=-1)
    heads = mm(out, params["w_heads"]) + params["b_heads"]
    return heads[..., 0:1], heads[..., 1:2]


# ----------------------------------------------------------------------------
if __name__ == "__main__":
    T, B, NFEAT, NHID = 8, 2, 16, 32
    DATE_EMB = (10, 4)  # (date_index_number, date_dim) — unused in forward

    key = jax.random.PRNGKey(0)
    k_par, k_feat, k_date = jax.random.split(key, 3)

    params = init_params(k_par, NFEAT, NHID)
    kparams = prepare_kernel_params(params)

    x_feature = jax.random.normal(k_feat, (T, B, NFEAT), jnp.float32)
    x_date = jax.random.randint(k_date, (T, B), 0, DATE_EMB[0])      # unused
    x_mask_data = jnp.ones((T, B), jnp.float32)                      # unused

    fwd = jax.jit(functools.partial(bilstm_forward, kparams))
    act_pre, con_pre = fwd(x_date, x_feature, x_mask_data)
    jax.block_until_ready((act_pre, con_pre))

    assert act_pre.shape == (T, B, 1) and con_pre.shape == (T, B, 1)

    # Structural check: identical math with bf16 matmul operands + f32
    # accumulation (what the kernel computes) — tight tolerance.
    ref_act, ref_con = bilstm_reference(params, x_feature, mm_dtype=jnp.bfloat16)
    err_struct = max(float(jnp.max(jnp.abs(act_pre - ref_act))),
                     float(jnp.max(jnp.abs(con_pre - ref_con))))
    assert err_struct < 5e-3, f"mismatch vs bf16-operand reference: {err_struct}"

    # Numeric sanity vs a full-f32 reference: the gap is bf16 operand
    # quantisation through the 2-layer recurrence (expected ~1e-2).
    ref_act32, ref_con32 = bilstm_reference(params, x_feature, mm_dtype=None)
    err_f32 = max(float(jnp.max(jnp.abs(act_pre - ref_act32))),
                  float(jnp.max(jnp.abs(con_pre - ref_con32))))
    assert err_f32 < 5e-2, f"mismatch vs f32 reference: {err_f32}"

    print("KERNEL_OK")
</pallas_src>

<mosaic_0001>
module attributes {stable_mosaic.version = 11 : i64} {
  func.func @_bilstm_kernel(%arg0: memref<64x16xf32, #tpu.memory_space<vmem>>, %arg1: memref<16x256xbf16, #tpu.memory_space<vmem>>, %arg2: memref<16x256xbf16, #tpu.memory_space<vmem>>, %arg3: memref<1x256xf32, #tpu.memory_space<vmem>>, %arg4: memref<64x256xbf16, #tpu.memory_space<vmem>>, %arg5: memref<64x256xbf16, #tpu.memory_space<vmem>>, %arg6: memref<64x256xbf16, #tpu.memory_space<vmem>>, %arg7: memref<1x256xf32, #tpu.memory_space<vmem>>, %arg8: memref<64x256xbf16, #tpu.memory_space<vmem>>, %arg9: memref<64x2xbf16, #tpu.memory_space<vmem>>, %arg10: memref<1x2xf32, #tpu.memory_space<vmem>>, %arg11: memref<64x2xf32, #tpu.memory_space<vmem>>) attributes {dimension_semantics = [], scalar_prefetch = 0 : i64, scratch_operands = 0 : i64, tpu.core_type = #tpu.core_type<tc>} {
    %c0 = arith.constant 0 : index
    %c0_0 = arith.constant 0 : index
    %0 = vector.load %arg0[%c0, %c0_0] : memref<64x16xf32, #tpu.memory_space<vmem>>, vector<64x16xf32>
    %1 = vector.extract_strided_slice %0 {offsets = [56, 0], sizes = [8, 16], strides = [1, 1]} : vector<64x16xf32> to vector<8x16xf32>
    %2 = vector.extract_strided_slice %0 {offsets = [48, 0], sizes = [8, 16], strides = [1, 1]} : vector<64x16xf32> to vector<8x16xf32>
    %3 = vector.extract_strided_slice %0 {offsets = [40, 0], sizes = [8, 16], strides = [1, 1]} : vector<64x16xf32> to vector<8x16xf32>
    %4 = vector.extract_strided_slice %0 {offsets = [32, 0], sizes = [8, 16], strides = [1, 1]} : vector<64x16xf32> to vector<8x16xf32>
    %5 = vector.extract_strided_slice %0 {offsets = [24, 0], sizes = [8, 16], strides = [1, 1]} : vector<64x16xf32> to vector<8x16xf32>
    %6 = vector.extract_strided_slice %0 {offsets = [16, 0], sizes = [8, 16], strides = [1, 1]} : vector<64x16xf32> to vector<8x16xf32>
    %7 = vector.extract_strided_slice %0 {offsets = [8, 0], sizes = [8, 16], strides = [1, 1]} : vector<64x16xf32> to vector<8x16xf32>
    %8 = vector.extract_strided_slice %0 {offsets = [0, 0], sizes = [8, 16], strides = [1, 1]} : vector<64x16xf32> to vector<8x16xf32>
    %9 = tpu.concatenate %1, %2, %3, %4, %5, %6, %7, %8 in 0 : vector<8x16xf32>, vector<8x16xf32>, vector<8x16xf32>, vector<8x16xf32>, vector<8x16xf32>, vector<8x16xf32>, vector<8x16xf32>, vector<8x16xf32> -> vector<64x16xf32>
    %10 = arith.truncf %0 : vector<64x16xf32> to vector<64x16xbf16>
    %11 = arith.truncf %9 : vector<64x16xf32> to vector<64x16xbf16>
    %c0_1 = arith.constant 0 : index
    %c0_2 = arith.constant 0 : index
    %12 = vector.load %arg1[%c0_1, %c0_2] : memref<16x256xbf16, #tpu.memory_space<vmem>>, vector<16x256xbf16>
    %c0_3 = arith.constant 0 : index
    %c0_4 = arith.constant 0 : index
    %13 = vector.load %arg2[%c0_3, %c0_4] : memref<16x256xbf16, #tpu.memory_space<vmem>>, vector<16x256xbf16>
    %c0_5 = arith.constant 0 : index
    %c0_6 = arith.constant 0 : index
    %14 = vector.load %arg3[%c0_5, %c0_6] : memref<1x256xf32, #tpu.memory_space<vmem>>, vector<1x256xf32>
    %c0_7 = arith.constant 0 : index
    %c0_8 = arith.constant 0 : index
    %15 = vector.load %arg4[%c0_7, %c0_8] : memref<64x256xbf16, #tpu.memory_space<vmem>>, vector<64x256xbf16>
    %cst = arith.constant dense<0.000000e+00> : vector<64x256xf32>
    %16 = tpu.matmul %10, %12, %cst {dimension_numbers = #tpu.dot_dimension_numbers<[1], [0], [0], [1], [0, 0, 1, 1], [], []>} : vector<64x16xbf16>, vector<16x256xbf16>, vector<64x256xf32> -> vector<64x256xf32>
    %17 = vector.broadcast %14 : vector<1x256xf32> to vector<64x256xf32>
    %18 = arith.addf %17, %16 : vector<64x256xf32>
    %cst_9 = arith.constant dense<0.000000e+00> : vector<64x256xf32>
    %19 = tpu.matmul %11, %13, %cst_9 {dimension_numbers = #tpu.dot_dimension_numbers<[1], [0], [0], [1], [0, 0, 1, 1], [], []>} : vector<64x16xbf16>, vector<16x256xbf16>, vector<64x256xf32> -> vector<64x256xf32>
    %20 = arith.addf %18, %19 : vector<64x256xf32>
    %cst_10 = arith.constant 0.000000e+00 : f32
    %21 = vector.broadcast %cst_10 : f32 to vector<8x64xf32>
    %cst_11 = arith.constant 0.000000e+00 : f32
    %22 = vector.broadcast %cst_11 : f32 to vector<8x64xf32>
    %23 = vector.extract_strided_slice %20 {offsets = [0, 0], sizes = [8, 256], strides = [1, 1]} : vector<64x256xf32> to vector<8x256xf32>
    %24 = arith.truncf %21 : vector<8x64xf32> to vector<8x64xbf16>
    %cst_12 = arith.constant dense<0.000000e+00> : vector<8x256xf32>
    %25 = tpu.matmul %24, %15, %cst_12 {dimension_numbers = #tpu.dot_dimension_numbers<[1], [0], [0], [1], [0, 0, 1, 1], [], []>} : vector<8x64xbf16>, vector<64x256xbf16>, vector<8x256xf32> -> vector<8x256xf32>
    %26 = arith.addf %23, %25 : vector<8x256xf32>
    %27 = vector.extract_strided_slice %26 {offsets = [0, 0], sizes = [8, 192], strides = [1, 1]} : vector<8x256xf32> to vector<8x192xf32>
    %28 = arith.negf %27 : vector<8x192xf32>
    %29 = math.exp %28 : vector<8x192xf32>
    %cst_13 = arith.constant 1.000000e+00 : f32
    %30 = vector.broadcast %cst_13 : f32 to vector<8x192xf32>
    %31 = arith.addf %30, %29 : vector<8x192xf32>
    %32 = arith.divf %30, %31 : vector<8x192xf32>
    %33 = vector.extract_strided_slice %32 {offsets = [0, 0], sizes = [8, 64], strides = [1, 1]} : vector<8x192xf32> to vector<8x64xf32>
    %34 = vector.extract_strided_slice %32 {offsets = [0, 64], sizes = [8, 64], strides = [1, 1]} : vector<8x192xf32> to vector<8x64xf32>
    %35 = vector.extract_strided_slice %32 {offsets = [0, 128], sizes = [8, 64], strides = [1, 1]} : vector<8x192xf32> to vector<8x64xf32>
    %36 = vector.extract_strided_slice %26 {offsets = [0, 192], sizes = [8, 64], strides = [1, 1]} : vector<8x256xf32> to vector<8x64xf32>
    %37 = math.tanh %36 : vector<8x64xf32>
    %38 = arith.mulf %34, %22 : vector<8x64xf32>
    %39 = arith.mulf %33, %37 : vector<8x64xf32>
    %40 = arith.addf %38, %39 : vector<8x64xf32>
    %41 = math.tanh %40 : vector<8x64xf32>
    %42 = arith.mulf %35, %41 : vector<8x64xf32>
    %43 = vector.extract_strided_slice %20 {offsets = [8, 0], sizes = [8, 256], strides = [1, 1]} : vector<64x256xf32> to vector<8x256xf32>
    %44 = arith.truncf %42 : vector<8x64xf32> to vector<8x64xbf16>
    %cst_14 = arith.constant dense<0.000000e+00> : vector<8x256xf32>
    %45 = tpu.matmul %44, %15, %cst_14 {dimension_numbers = #tpu.dot_dimension_numbers<[1], [0], [0], [1], [0, 0, 1, 1], [], []>} : vector<8x64xbf16>, vector<64x256xbf16>, vector<8x256xf32> -> vector<8x256xf32>
    %46 = arith.addf %43, %45 : vector<8x256xf32>
    %47 = vector.extract_strided_slice %46 {offsets = [0, 0], sizes = [8, 192], strides = [1, 1]} : vector<8x256xf32> to vector<8x192xf32>
    %48 = arith.negf %47 : vector<8x192xf32>
    %49 = math.exp %48 : vector<8x192xf32>
    %cst_15 = arith.constant 1.000000e+00 : f32
    %50 = vector.broadcast %cst_15 : f32 to vector<8x192xf32>
    %51 = arith.addf %50, %49 : vector<8x192xf32>
    %52 = arith.divf %50, %51 : vector<8x192xf32>
    %53 = vector.extract_strided_slice %52 {offsets = [0, 0], sizes = [8, 64], strides = [1, 1]} : vector<8x192xf32> to vector<8x64xf32>
    %54 = vector.extract_strided_slice %52 {offsets = [0, 64], sizes = [8, 64], strides = [1, 1]} : vector<8x192xf32> to vector<8x64xf32>
    %55 = vector.extract_strided_slice %52 {offsets = [0, 128], sizes = [8, 64], strides = [1, 1]} : vector<8x192xf32> to vector<8x64xf32>
    %56 = vector.extract_strided_slice %46 {offsets = [0, 192], sizes = [8, 64], strides = [1, 1]} : vector<8x256xf32> to vector<8x64xf32>
    %57 = math.tanh %56 : vector<8x64xf32>
    %58 = arith.mulf %54, %40 : vector<8x64xf32>
    %59 = arith.mulf %53, %57 : vector<8x64xf32>
    %60 = arith.addf %58, %59 : vector<8x64xf32>
    %61 = math.tanh %60 : vector<8x64xf32>
    %62 = arith.mulf %55, %61 : vector<8x64xf32>
    %63 = vector.extract_strided_slice %20 {offsets = [16, 0], sizes = [8, 256], strides = [1, 1]} : vector<64x256xf32> to vector<8x256xf32>
    %64 = arith.truncf %62 : vector<8x64xf32> to vector<8x64xbf16>
    %cst_16 = arith.constant dense<0.000000e+00> : vector<8x256xf32>
    %65 = tpu.matmul %64, %15, %cst_16 {dimension_numbers = #tpu.dot_dimension_numbers<[1], [0], [0], [1], [0, 0, 1, 1], [], []>} : vector<8x64xbf16>, vector<64x256xbf16>, vector<8x256xf32> -> vector<8x256xf32>
    %66 = arith.addf %63, %65 : vector<8x256xf32>
    %67 = vector.extract_strided_slice %66 {offsets = [0, 0], sizes = [8, 192], strides = [1, 1]} : vector<8x256xf32> to vector<8x192xf32>
    %68 = arith.negf %67 : vector<8x192xf32>
    %69 = math.exp %68 : vector<8x192xf32>
    %cst_17 = arith.constant 1.000000e+00 : f32
    %70 = vector.broadcast %cst_17 : f32 to vector<8x192xf32>
    %71 = arith.addf %70, %69 : vector<8x192xf32>
    %72 = arith.divf %70, %71 : vector<8x192xf32>
    %73 = vector.extract_strided_slice %72 {offsets = [0, 0], sizes = [8, 64], strides = [1, 1]} : vector<8x192xf32> to vector<8x64xf32>
    %74 = vector.extract_strided_slice %72 {offsets = [0, 64], sizes = [8, 64], strides = [1, 1]} : vector<8x192xf32> to vector<8x64xf32>
    %75 = vector.extract_strided_slice %72 {offsets = [0, 128], sizes = [8, 64], strides = [1, 1]} : vector<8x192xf32> to vector<8x64xf32>
    %76 = vector.extract_strided_slice %66 {offsets = [0, 192], sizes = [8, 64], strides = [1, 1]} : vector<8x256xf32> to vector<8x64xf32>
    %77 = math.tanh %76 : vector<8x64xf32>
    %78 = arith.mulf %74, %60 : vector<8x64xf32>
    %79 = arith.mulf %73, %77 : vector<8x64xf32>
    %80 = arith.addf %78, %79 : vector<8x64xf32>
    %81 = math.tanh %80 : vector<8x64xf32>
    %82 = arith.mulf %75, %81 : vector<8x64xf32>
    %83 = vector.extract_strided_slice %20 {offsets = [24, 0], sizes = [8, 256], strides = [1, 1]} : vector<64x256xf32> to vector<8x256xf32>
    %84 = arith.truncf %82 : vector<8x64xf32> to vector<8x64xbf16>
    %cst_18 = arith.constant dense<0.000000e+00> : vector<8x256xf32>
    %85 = tpu.matmul %84, %15, %cst_18 {dimension_numbers = #tpu.dot_dimension_numbers<[1], [0], [0], [1], [0, 0, 1, 1], [], []>} : vector<8x64xbf16>, vector<64x256xbf16>, vector<8x256xf32> -> vector<8x256xf32>
    %86 = arith.addf %83, %85 : vector<8x256xf32>
    %87 = vector.extract_strided_slice %86 {offsets = [0, 0], sizes = [8, 192], strides = [1, 1]} : vector<8x256xf32> to vector<8x192xf32>
    %88 = arith.negf %87 : vector<8x192xf32>
    %89 = math.exp %88 : vector<8x192xf32>
    %cst_19 = arith.constant 1.000000e+00 : f32
    %90 = vector.broadcast %cst_19 : f32 to vector<8x192xf32>
    %91 = arith.addf %90, %89 : vector<8x192xf32>
    %92 = arith.divf %90, %91 : vector<8x192xf32>
    %93 = vector.extract_strided_slice %92 {offsets = [0, 0], sizes = [8, 64], strides = [1, 1]} : vector<8x192xf32> to vector<8x64xf32>
    %94 = vector.extract_strided_slice %92 {offsets = [0, 64], sizes = [8, 64], strides = [1, 1]} : vector<8x192xf32> to vector<8x64xf32>
    %95 = vector.extract_strided_slice %92 {offsets = [0, 128], sizes = [8, 64], strides = [1, 1]} : vector<8x192xf32> to vector<8x64xf32>
    %96 = vector.extract_strided_slice %86 {offsets = [0, 192], sizes = [8, 64], strides = [1, 1]} : vector<8x256xf32> to vector<8x64xf32>
    %97 = math.tanh %96 : vector<8x64xf32>
    %98 = arith.mulf %94, %80 : vector<8x64xf32>
    %99 = arith.mulf %93, %97 : vector<8x64xf32>
    %100 = arith.addf %98, %99 : vector<8x64xf32>
    %101 = math.tanh %100 : vector<8x64xf32>
    %102 = arith.mulf %95, %101 : vector<8x64xf32>
    %103 = vector.extract_strided_slice %20 {offsets = [32, 0], sizes = [8, 256], strides = [1, 1]} : vector<64x256xf32> to vector<8x256xf32>
    %104 = arith.truncf %102 : vector<8x64xf32> to vector<8x64xbf16>
    %cst_20 = arith.constant dense<0.000000e+00> : vector<8x256xf32>
    %105 = tpu.matmul %104, %15, %cst_20 {dimension_numbers = #tpu.dot_dimension_numbers<[1], [0], [0], [1], [0, 0, 1, 1], [], []>} : vector<8x64xbf16>, vector<64x256xbf16>, vector<8x256xf32> -> vector<8x256xf32>
    %106 = arith.addf %103, %105 : vector<8x256xf32>
    %107 = vector.extract_strided_slice %106 {offsets = [0, 0], sizes = [8, 192], strides = [1, 1]} : vector<8x256xf32> to vector<8x192xf32>
    %108 = arith.negf %107 : vector<8x192xf32>
    %109 = math.exp %108 : vector<8x192xf32>
    %cst_21 = arith.constant 1.000000e+00 : f32
    %110 = vector.broadcast %cst_21 : f32 to vector<8x192xf32>
    %111 = arith.addf %110, %109 : vector<8x192xf32>
    %112 = arith.divf %110, %111 : vector<8x192xf32>
    %113 = vector.extract_strided_slice %112 {offsets = [0, 0], sizes = [8, 64], strides = [1, 1]} : vector<8x192xf32> to vector<8x64xf32>
    %114 = vector.extract_strided_slice %112 {offsets = [0, 64], sizes = [8, 64], strides = [1, 1]} : vector<8x192xf32> to vector<8x64xf32>
    %115 = vector.extract_strided_slice %112 {offsets = [0, 128], sizes = [8, 64], strides = [1, 1]} : vector<8x192xf32> to vector<8x64xf32>
    %116 = vector.extract_strided_slice %106 {offsets = [0, 192], sizes = [8, 64], strides = [1, 1]} : vector<8x256xf32> to vector<8x64xf32>
    %117 = math.tanh %116 : vector<8x64xf32>
    %118 = arith.mulf %114, %100 : vector<8x64xf32>
    %119 = arith.mulf %113, %117 : vector<8x64xf32>
    %120 = arith.addf %118, %119 : vector<8x64xf32>
    %121 = math.tanh %120 : vector<8x64xf32>
    %122 = arith.mulf %115, %121 : vector<8x64xf32>
    %123 = vector.extract_strided_slice %20 {offsets = [40, 0], sizes = [8, 256], strides = [1, 1]} : vector<64x256xf32> to vector<8x256xf32>
    %124 = arith.truncf %122 : vector<8x64xf32> to vector<8x64xbf16>
    %cst_22 = arith.constant dense<0.000000e+00> : vector<8x256xf32>
    %125 = tpu.matmul %124, %15, %cst_22 {dimension_numbers = #tpu.dot_dimension_numbers<[1], [0], [0], [1], [0, 0, 1, 1], [], []>} : vector<8x64xbf16>, vector<64x256xbf16>, vector<8x256xf32> -> vector<8x256xf32>
    %126 = arith.addf %123, %125 : vector<8x256xf32>
    %127 = vector.extract_strided_slice %126 {offsets = [0, 0], sizes = [8, 192], strides = [1, 1]} : vector<8x256xf32> to vector<8x192xf32>
    %128 = arith.negf %127 : vector<8x192xf32>
    %129 = math.exp %128 : vector<8x192xf32>
    %cst_23 = arith.constant 1.000000e+00 : f32
    %130 = vector.broadcast %cst_23 : f32 to vector<8x192xf32>
    %131 = arith.addf %130, %129 : vector<8x192xf32>
    %132 = arith.divf %130, %131 : vector<8x192xf32>
    %133 = vector.extract_strided_slice %132 {offsets = [0, 0], sizes = [8, 64], strides = [1, 1]} : vector<8x192xf32> to vector<8x64xf32>
    %134 = vector.extract_strided_slice %132 {offsets = [0, 64], sizes = [8, 64], strides = [1, 1]} : vector<8x192xf32> to vector<8x64xf32>
    %135 = vector.extract_strided_slice %132 {offsets = [0, 128], sizes = [8, 64], strides = [1, 1]} : vector<8x192xf32> to vector<8x64xf32>
    %136 = vector.extract_strided_slice %126 {offsets = [0, 192], sizes = [8, 64], strides = [1, 1]} : vector<8x256xf32> to vector<8x64xf32>
    %137 = math.tanh %136 : vector<8x64xf32>
    %138 = arith.mulf %134, %120 : vector<8x64xf32>
    %139 = arith.mulf %133, %137 : vector<8x64xf32>
    %140 = arith.addf %138, %139 : vector<8x64xf32>
    %141 = math.tanh %140 : vector<8x64xf32>
    %142 = arith.mulf %135, %141 : vector<8x64xf32>
    %143 = vector.extract_strided_slice %20 {offsets = [48, 0], sizes = [8, 256], strides = [1, 1]} : vector<64x256xf32> to vector<8x256xf32>
    %144 = arith.truncf %142 : vector<8x64xf32> to vector<8x64xbf16>
    %cst_24 = arith.constant dense<0.000000e+00> : vector<8x256xf32>
    %145 = tpu.matmul %144, %15, %cst_24 {dimension_numbers = #tpu.dot_dimension_numbers<[1], [0], [0], [1], [0, 0, 1, 1], [], []>} : vector<8x64xbf16>, vector<64x256xbf16>, vector<8x256xf32> -> vector<8x256xf32>
    %146 = arith.addf %143, %145 : vector<8x256xf32>
    %147 = vector.extract_strided_slice %146 {offsets = [0, 0], sizes = [8, 192], strides = [1, 1]} : vector<8x256xf32> to vector<8x192xf32>
    %148 = arith.negf %147 : vector<8x192xf32>
    %149 = math.exp %148 : vector<8x192xf32>
    %cst_25 = arith.constant 1.000000e+00 : f32
    %150 = vector.broadcast %cst_25 : f32 to vector<8x192xf32>
    %151 = arith.addf %150, %149 : vector<8x192xf32>
    %152 = arith.divf %150, %151 : vector<8x192xf32>
    %153 = vector.extract_strided_slice %152 {offsets = [0, 0], sizes = [8, 64], strides = [1, 1]} : vector<8x192xf32> to vector<8x64xf32>
    %154 = vector.extract_strided_slice %152 {offsets = [0, 64], sizes = [8, 64], strides = [1, 1]} : vector<8x192xf32> to vector<8x64xf32>
    %155 = vector.extract_strided_slice %152 {offsets = [0, 128], sizes = [8, 64], strides = [1, 1]} : vector<8x192xf32> to vector<8x64xf32>
    %156 = vector.extract_strided_slice %146 {offsets = [0, 192], sizes = [8, 64], strides = [1, 1]} : vector<8x256xf32> to vector<8x64xf32>
    %157 = math.tanh %156 : vector<8x64xf32>
    %158 = arith.mulf %154, %140 : vector<8x64xf32>
    %159 = arith.mulf %153, %157 : vector<8x64xf32>
    %160 = arith.addf %158, %159 : vector<8x64xf32>
    %161 = math.tanh %160 : vector<8x64xf32>
    %162 = arith.mulf %155, %161 : vector<8x64xf32>
    %163 = vector.extract_strided_slice %20 {offsets = [56, 0], sizes = [8, 256], strides = [1, 1]} : vector<64x256xf32> to vector<8x256xf32>
    %164 = arith.truncf %162 : vector<8x64xf32> to vector<8x64xbf16>
    %cst_26 = arith.constant dense<0.000000e+00> : vector<8x256xf32>
    %165 = tpu.matmul %164, %15, %cst_26 {dimension_numbers = #tpu.dot_dimension_numbers<[1], [0], [0], [1], [0, 0, 1, 1], [], []>} : vector<8x64xbf16>, vector<64x256xbf16>, vector<8x256xf32> -> vector<8x256xf32>
    %166 = arith.addf %163, %165 : vector<8x256xf32>
    %167 = vector.extract_strided_slice %166 {offsets = [0, 0], sizes = [8, 192], strides = [1, 1]} : vector<8x256xf32> to vector<8x192xf32>
    %168 = arith.negf %167 : vector<8x192xf32>
    %169 = math.exp %168 : vector<8x192xf32>
    %cst_27 = arith.constant 1.000000e+00 : f32
    %170 = vector.broadcast %cst_27 : f32 to vector<8x192xf32>
    %171 = arith.addf %170, %169 : vector<8x192xf32>
    %172 = arith.divf %170, %171 : vector<8x192xf32>
    %173 = vector.extract_strided_slice %172 {offsets = [0, 0], sizes = [8, 64], strides = [1, 1]} : vector<8x192xf32> to vector<8x64xf32>
    %174 = vector.extract_strided_slice %172 {offsets = [0, 64], sizes = [8, 64], strides = [1, 1]} : vector<8x192xf32> to vector<8x64xf32>
    %175 = vector.extract_strided_slice %172 {offsets = [0, 128], sizes = [8, 64], strides = [1, 1]} : vector<8x192xf32> to vector<8x64xf32>
    %176 = vector.extract_strided_slice %166 {offsets = [0, 192], sizes = [8, 64], strides = [1, 1]} : vector<8x256xf32> to vector<8x64xf32>
    %177 = math.tanh %176 : vector<8x64xf32>
    %178 = arith.mulf %174, %160 : vector<8x64xf32>
    %179 = arith.mulf %173, %177 : vector<8x64xf32>
    %180 = arith.addf %178, %179 : vector<8x64xf32>
    %181 = math.tanh %180 : vector<8x64xf32>
    %182 = arith.mulf %175, %181 : vector<8x64xf32>
    %183 = vector.extract_strided_slice %42 {offsets = [0, 0], sizes = [8, 32], strides = [1, 1]} : vector<8x64xf32> to vector<8x32xf32>
    %184 = vector.extract_strided_slice %62 {offsets = [0, 0], sizes = [8, 32], strides = [1, 1]} : vector<8x64xf32> to vector<8x32xf32>
    %185 = vector.extract_strided_slice %82 {offsets = [0, 0], sizes = [8, 32], strides = [1, 1]} : vector<8x64xf32> to vector<8x32xf32>
    %186 = vector.extract_strided_slice %102 {offsets = [0, 0], sizes = [8, 32], strides = [1, 1]} : vector<8x64xf32> to vector<8x32xf32>
    %187 = vector.extract_strided_slice %122 {offsets = [0, 0], sizes = [8, 32], strides = [1, 1]} : vector<8x64xf32> to vector<8x32xf32>
    %188 = vector.extract_strided_slice %142 {offsets = [0, 0], sizes = [8, 32], strides = [1, 1]} : vector<8x64xf32> to vector<8x32xf32>
    %189 = vector.extract_strided_slice %162 {offsets = [0, 0], sizes = [8, 32], strides = [1, 1]} : vector<8x64xf32> to vector<8x32xf32>
    %190 = vector.extract_strided_slice %182 {offsets = [0, 0], sizes = [8, 32], strides = [1, 1]} : vector<8x64xf32> to vector<8x32xf32>
    %191 = tpu.concatenate %183, %184, %185, %186, %187, %188, %189, %190 in 0 : vector<8x32xf32>, vector<8x32xf32>, vector<8x32xf32>, vector<8x32xf32>, vector<8x32xf32>, vector<8x32xf32>, vector<8x32xf32>, vector<8x32xf32> -> vector<64x32xf32>
    %192 = vector.extract_strided_slice %182 {offsets = [0, 0], sizes = [8, 32], strides = [1, 1]} : vector<8x64xf32> to vector<8x32xf32>
    %193 = vector.extract_strided_slice %162 {offsets = [0, 0], sizes = [8, 32], strides = [1, 1]} : vector<8x64xf32> to vector<8x32xf32>
    %194 = vector.extract_strided_slice %142 {offsets = [0, 0], sizes = [8, 32], strides = [1, 1]} : vector<8x64xf32> to vector<8x32xf32>
    %195 = vector.extract_strided_slice %122 {offsets = [0, 0], sizes = [8, 32], strides = [1, 1]} : vector<8x64xf32> to vector<8x32xf32>
    %196 = vector.extract_strided_slice %102 {offsets = [0, 0], sizes = [8, 32], strides = [1, 1]} : vector<8x64xf32> to vector<8x32xf32>
    %197 = vector.extract_strided_slice %82 {offsets = [0, 0], sizes = [8, 32], strides = [1, 1]} : vector<8x64xf32> to vector<8x32xf32>
    %198 = vector.extract_strided_slice %62 {offsets = [0, 0], sizes = [8, 32], strides = [1, 1]} : vector<8x64xf32> to vector<8x32xf32>
    %199 = vector.extract_strided_slice %42 {offsets = [0, 0], sizes = [8, 32], strides = [1, 1]} : vector<8x64xf32> to vector<8x32xf32>
    %200 = tpu.concatenate %192, %193, %194, %195, %196, %197, %198, %199 in 0 : vector<8x32xf32>, vector<8x32xf32>, vector<8x32xf32>, vector<8x32xf32>, vector<8x32xf32>, vector<8x32xf32>, vector<8x32xf32>, vector<8x32xf32> -> vector<64x32xf32>
    %201 = vector.extract_strided_slice %182 {offsets = [0, 32], sizes = [8, 32], strides = [1, 1]} : vector<8x64xf32> to vector<8x32xf32>
    %202 = vector.extract_strided_slice %162 {offsets = [0, 32], sizes = [8, 32], strides = [1, 1]} : vector<8x64xf32> to vector<8x32xf32>
    %203 = vector.extract_strided_slice %142 {offsets = [0, 32], sizes = [8, 32], strides = [1, 1]} : vector<8x64xf32> to vector<8x32xf32>
    %204 = vector.extract_strided_slice %122 {offsets = [0, 32], sizes = [8, 32], strides = [1, 1]} : vector<8x64xf32> to vector<8x32xf32>
    %205 = vector.extract_strided_slice %102 {offsets = [0, 32], sizes = [8, 32], strides = [1, 1]} : vector<8x64xf32> to vector<8x32xf32>
    %206 = vector.extract_strided_slice %82 {offsets = [0, 32], sizes = [8, 32], strides = [1, 1]} : vector<8x64xf32> to vector<8x32xf32>
    %207 = vector.extract_strided_slice %62 {offsets = [0, 32], sizes = [8, 32], strides = [1, 1]} : vector<8x64xf32> to vector<8x32xf32>
    %208 = vector.extract_strided_slice %42 {offsets = [0, 32], sizes = [8, 32], strides = [1, 1]} : vector<8x64xf32> to vector<8x32xf32>
    %209 = tpu.concatenate %201, %202, %203, %204, %205, %206, %207, %208 in 0 : vector<8x32xf32>, vector<8x32xf32>, vector<8x32xf32>, vector<8x32xf32>, vector<8x32xf32>, vector<8x32xf32>, vector<8x32xf32>, vector<8x32xf32> -> vector<64x32xf32>
    %210 = vector.extract_strided_slice %42 {offsets = [0, 32], sizes = [8, 32], strides = [1, 1]} : vector<8x64xf32> to vector<8x32xf32>
    %211 = vector.extract_strided_slice %62 {offsets = [0, 32], sizes = [8, 32], strides = [1, 1]} : vector<8x64xf32> to vector<8x32xf32>
    %212 = vector.extract_strided_slice %82 {offsets = [0, 32], sizes = [8, 32], strides = [1, 1]} : vector<8x64xf32> to vector<8x32xf32>
    %213 = vector.extract_strided_slice %102 {offsets = [0, 32], sizes = [8, 32], strides = [1, 1]} : vector<8x64xf32> to vector<8x32xf32>
    %214 = vector.extract_strided_slice %122 {offsets = [0, 32], sizes = [8, 32], strides = [1, 1]} : vector<8x64xf32> to vector<8x32xf32>
    %215 = vector.extract_strided_slice %142 {offsets = [0, 32], sizes = [8, 32], strides = [1, 1]} : vector<8x64xf32> to vector<8x32xf32>
    %216 = vector.extract_strided_slice %162 {offsets = [0, 32], sizes = [8, 32], strides = [1, 1]} : vector<8x64xf32> to vector<8x32xf32>
    %217 = vector.extract_strided_slice %182 {offsets = [0, 32], sizes = [8, 32], strides = [1, 1]} : vector<8x64xf32> to vector<8x32xf32>
    %218 = tpu.concatenate %210, %211, %212, %213, %214, %215, %216, %217 in 0 : vector<8x32xf32>, vector<8x32xf32>, vector<8x32xf32>, vector<8x32xf32>, vector<8x32xf32>, vector<8x32xf32>, vector<8x32xf32>, vector<8x32xf32> -> vector<64x32xf32>
    %219 = arith.truncf %191 : vector<64x32xf32> to vector<64x32xbf16>
    %220 = arith.truncf %200 : vector<64x32xf32> to vector<64x32xbf16>
    %221 = arith.truncf %209 : vector<64x32xf32> to vector<64x32xbf16>
    %222 = arith.truncf %218 : vector<64x32xf32> to vector<64x32xbf16>
    %c0_28 = arith.constant 0 : index
    %c0_29 = arith.constant 0 : index
    %223 = vector.load %arg5[%c0_28, %c0_29] : memref<64x256xbf16, #tpu.memory_space<vmem>>, vector<64x256xbf16>
    %c0_30 = arith.constant 0 : index
    %c0_31 = arith.constant 0 : index
    %224 = vector.load %arg6[%c0_30, %c0_31] : memref<64x256xbf16, #tpu.memory_space<vmem>>, vector<64x256xbf16>
    %c0_32 = arith.constant 0 : index
    %c0_33 = arith.constant 0 : index
    %225 = vector.load %arg7[%c0_32, %c0_33] : memref<1x256xf32, #tpu.memory_space<vmem>>, vector<1x256xf32>
    %c0_34 = arith.constant 0 : index
    %c0_35 = arith.constant 0 : index
    %226 = vector.load %arg8[%c0_34, %c0_35] : memref<64x256xbf16, #tpu.memory_space<vmem>>, vector<64x256xbf16>
    %227 = vector.extract_strided_slice %223 {offsets = [0, 0], sizes = [32, 256], strides = [1, 1]} : vector<64x256xbf16> to vector<32x256xbf16>
    %cst_36 = arith.constant dense<0.000000e+00> : vector<64x256xf32>
    %228 = tpu.matmul %219, %227, %cst_36 {dimension_numbers = #tpu.dot_dimension_numbers<[1], [0], [0], [1], [0, 0, 1, 1], [], []>} : vector<64x32xbf16>, vector<32x256xbf16>, vector<64x256xf32> -> vector<64x256xf32>
    %229 = vector.broadcast %225 : vector<1x256xf32> to vector<64x256xf32>
    %230 = arith.addf %229, %228 : vector<64x256xf32>
    %231 = vector.extract_strided_slice %224 {offsets = [0, 0], sizes = [32, 256], strides = [1, 1]} : vector<64x256xbf16> to vector<32x256xbf16>
    %cst_37 = arith.constant dense<0.000000e+00> : vector<64x256xf32>
    %232 = tpu.matmul %220, %231, %cst_37 {dimension_numbers = #tpu.dot_dimension_numbers<[1], [0], [0], [1], [0, 0, 1, 1], [], []>} : vector<64x32xbf16>, vector<32x256xbf16>, vector<64x256xf32> -> vector<64x256xf32>
    %233 = arith.addf %230, %232 : vector<64x256xf32>
    %234 = vector.extract_strided_slice %223 {offsets = [32, 0], sizes = [32, 256], strides = [1, 1]} : vector<64x256xbf16> to vector<32x256xbf16>
    %cst_38 = arith.constant dense<0.000000e+00> : vector<64x256xf32>
    %235 = tpu.matmul %221, %234, %cst_38 {dimension_numbers = #tpu.dot_dimension_numbers<[1], [0], [0], [1], [0, 0, 1, 1], [], []>} : vector<64x32xbf16>, vector<32x256xbf16>, vector<64x256xf32> -> vector<64x256xf32>
    %236 = arith.addf %233, %235 : vector<64x256xf32>
    %237 = vector.extract_strided_slice %224 {offsets = [32, 0], sizes = [32, 256], strides = [1, 1]} : vector<64x256xbf16> to vector<32x256xbf16>
    %cst_39 = arith.constant dense<0.000000e+00> : vector<64x256xf32>
    %238 = tpu.matmul %222, %237, %cst_39 {dimension_numbers = #tpu.dot_dimension_numbers<[1], [0], [0], [1], [0, 0, 1, 1], [], []>} : vector<64x32xbf16>, vector<32x256xbf16>, vector<64x256xf32> -> vector<64x256xf32>
    %239 = arith.addf %236, %238 : vector<64x256xf32>
    %cst_40 = arith.constant 0.000000e+00 : f32
    %240 = vector.broadcast %cst_40 : f32 to vector<8x64xf32>
    %cst_41 = arith.constant 0.000000e+00 : f32
    %241 = vector.broadcast %cst_41 : f32 to vector<8x64xf32>
    %242 = vector.extract_strided_slice %239 {offsets = [0, 0], sizes = [8, 256], strides = [1, 1]} : vector<64x256xf32> to vector<8x256xf32>
    %243 = arith.truncf %240 : vector<8x64xf32> to vector<8x64xbf16>
    %cst_42 = arith.constant dense<0.000000e+00> : vector<8x256xf32>
    %244 = tpu.matmul %243, %226, %cst_42 {dimension_numbers = #tpu.dot_dimension_numbers<[1], [0], [0], [1], [0, 0, 1, 1], [], []>} : vector<8x64xbf16>, vector<64x256xbf16>, vector<8x256xf32> -> vector<8x256xf32>
    %245 = arith.addf %242, %244 : vector<8x256xf32>
    %246 = vector.extract_strided_slice %245 {offsets = [0, 0], sizes = [8, 192], strides = [1, 1]} : vector<8x256xf32> to vector<8x192xf32>
    %247 = arith.negf %246 : vector<8x192xf32>
    %248 = math.exp %247 : vector<8x192xf32>
    %cst_43 = arith.constant 1.000000e+00 : f32
    %249 = vector.broadcast %cst_43 : f32 to vector<8x192xf32>
    %250 = arith.addf %249, %248 : vector<8x192xf32>
    %251 = arith.divf %249, %250 : vector<8x192xf32>
    %252 = vector.extract_strided_slice %251 {offsets = [0, 0], sizes = [8, 64], strides = [1, 1]} : vector<8x192xf32> to vector<8x64xf32>
    %253 = vector.extract_strided_slice %251 {offsets = [0, 64], sizes = [8, 64], strides = [1, 1]} : vector<8x192xf32> to vector<8x64xf32>
    %254 = vector.extract_strided_slice %251 {offsets = [0, 128], sizes = [8, 64], strides = [1, 1]} : vector<8x192xf32> to vector<8x64xf32>
    %255 = vector.extract_strided_slice %245 {offsets = [0, 192], sizes = [8, 64], strides = [1, 1]} : vector<8x256xf32> to vector<8x64xf32>
    %256 = math.tanh %255 : vector<8x64xf32>
    %257 = arith.mulf %253, %241 : vector<8x64xf32>
    %258 = arith.mulf %252, %256 : vector<8x64xf32>
    %259 = arith.addf %257, %258 : vector<8x64xf32>
    %260 = math.tanh %259 : vector<8x64xf32>
    %261 = arith.mulf %254, %260 : vector<8x64xf32>
    %262 = vector.extract_strided_slice %239 {offsets = [8, 0], sizes = [8, 256], strides = [1, 1]} : vector<64x256xf32> to vector<8x256xf32>
    %263 = arith.truncf %261 : vector<8x64xf32> to vector<8x64xbf16>
    %cst_44 = arith.constant dense<0.000000e+00> : vector<8x256xf32>
    %264 = tpu.matmul %263, %226, %cst_44 {dimension_numbers = #tpu.dot_dimension_numbers<[1], [0], [0], [1], [0, 0, 1, 1], [], []>} : vector<8x64xbf16>, vector<64x256xbf16>, vector<8x256xf32> -> vector<8x256xf32>
    %265 = arith.addf %262, %264 : vector<8x256xf32>
    %266 = vector.extract_strided_slice %265 {offsets = [0, 0], sizes = [8, 192], strides = [1, 1]} : vector<8x256xf32> to vector<8x192xf32>
    %267 = arith.negf %266 : vector<8x192xf32>
    %268 = math.exp %267 : vector<8x192xf32>
    %cst_45 = arith.constant 1.000000e+00 : f32
    %269 = vector.broadcast %cst_45 : f32 to vector<8x192xf32>
    %270 = arith.addf %269, %268 : vector<8x192xf32>
    %271 = arith.divf %269, %270 : vector<8x192xf32>
    %272 = vector.extract_strided_slice %271 {offsets = [0, 0], sizes = [8, 64], strides = [1, 1]} : vector<8x192xf32> to vector<8x64xf32>
    %273 = vector.extract_strided_slice %271 {offsets = [0, 64], sizes = [8, 64], strides = [1, 1]} : vector<8x192xf32> to vector<8x64xf32>
    %274 = vector.extract_strided_slice %271 {offsets = [0, 128], sizes = [8, 64], strides = [1, 1]} : vector<8x192xf32> to vector<8x64xf32>
    %275 = vector.extract_strided_slice %265 {offsets = [0, 192], sizes = [8, 64], strides = [1, 1]} : vector<8x256xf32> to vector<8x64xf32>
    %276 = math.tanh %275 : vector<8x64xf32>
    %277 = arith.mulf %273, %259 : vector<8x64xf32>
    %278 = arith.mulf %272, %276 : vector<8x64xf32>
    %279 = arith.addf %277, %278 : vector<8x64xf32>
    %280 = math.tanh %279 : vector<8x64xf32>
    %281 = arith.mulf %274, %280 : vector<8x64xf32>
    %282 = vector.extract_strided_slice %239 {offsets = [16, 0], sizes = [8, 256], strides = [1, 1]} : vector<64x256xf32> to vector<8x256xf32>
    %283 = arith.truncf %281 : vector<8x64xf32> to vector<8x64xbf16>
    %cst_46 = arith.constant dense<0.000000e+00> : vector<8x256xf32>
    %284 = tpu.matmul %283, %226, %cst_46 {dimension_numbers = #tpu.dot_dimension_numbers<[1], [0], [0], [1], [0, 0, 1, 1], [], []>} : vector<8x64xbf16>, vector<64x256xbf16>, vector<8x256xf32> -> vector<8x256xf32>
    %285 = arith.addf %282, %284 : vector<8x256xf32>
    %286 = vector.extract_strided_slice %285 {offsets = [0, 0], sizes = [8, 192], strides = [1, 1]} : vector<8x256xf32> to vector<8x192xf32>
    %287 = arith.negf %286 : vector<8x192xf32>
    %288 = math.exp %287 : vector<8x192xf32>
    %cst_47 = arith.constant 1.000000e+00 : f32
    %289 = vector.broadcast %cst_47 : f32 to vector<8x192xf32>
    %290 = arith.addf %289, %288 : vector<8x192xf32>
    %291 = arith.divf %289, %290 : vector<8x192xf32>
    %292 = vector.extract_strided_slice %291 {offsets = [0, 0], sizes = [8, 64], strides = [1, 1]} : vector<8x192xf32> to vector<8x64xf32>
    %293 = vector.extract_strided_slice %291 {offsets = [0, 64], sizes = [8, 64], strides = [1, 1]} : vector<8x192xf32> to vector<8x64xf32>
    %294 = vector.extract_strided_slice %291 {offsets = [0, 128], sizes = [8, 64], strides = [1, 1]} : vector<8x192xf32> to vector<8x64xf32>
    %295 = vector.extract_strided_slice %285 {offsets = [0, 192], sizes = [8, 64], strides = [1, 1]} : vector<8x256xf32> to vector<8x64xf32>
    %296 = math.tanh %295 : vector<8x64xf32>
    %297 = arith.mulf %293, %279 : vector<8x64xf32>
    %298 = arith.mulf %292, %296 : vector<8x64xf32>
    %299 = arith.addf %297, %298 : vector<8x64xf32>
    %300 = math.tanh %299 : vector<8x64xf32>
    %301 = arith.mulf %294, %300 : vector<8x64xf32>
    %302 = vector.extract_strided_slice %239 {offsets = [24, 0], sizes = [8, 256], strides = [1, 1]} : vector<64x256xf32> to vector<8x256xf32>
    %303 = arith.truncf %301 : vector<8x64xf32> to vector<8x64xbf16>
    %cst_48 = arith.constant dense<0.000000e+00> : vector<8x256xf32>
    %304 = tpu.matmul %303, %226, %cst_48 {dimension_numbers = #tpu.dot_dimension_numbers<[1], [0], [0], [1], [0, 0, 1, 1], [], []>} : vector<8x64xbf16>, vector<64x256xbf16>, vector<8x256xf32> -> vector<8x256xf32>
    %305 = arith.addf %302, %304 : vector<8x256xf32>
    %306 = vector.extract_strided_slice %305 {offsets = [0, 0], sizes = [8, 192], strides = [1, 1]} : vector<8x256xf32> to vector<8x192xf32>
    %307 = arith.negf %306 : vector<8x192xf32>
    %308 = math.exp %307 : vector<8x192xf32>
    %cst_49 = arith.constant 1.000000e+00 : f32
    %309 = vector.broadcast %cst_49 : f32 to vector<8x192xf32>
    %310 = arith.addf %309, %308 : vector<8x192xf32>
    %311 = arith.divf %309, %310 : vector<8x192xf32>
    %312 = vector.extract_strided_slice %311 {offsets = [0, 0], sizes = [8, 64], strides = [1, 1]} : vector<8x192xf32> to vector<8x64xf32>
    %313 = vector.extract_strided_slice %311 {offsets = [0, 64], sizes = [8, 64], strides = [1, 1]} : vector<8x192xf32> to vector<8x64xf32>
    %314 = vector.extract_strided_slice %311 {offsets = [0, 128], sizes = [8, 64], strides = [1, 1]} : vector<8x192xf32> to vector<8x64xf32>
    %315 = vector.extract_strided_slice %305 {offsets = [0, 192], sizes = [8, 64], strides = [1, 1]} : vector<8x256xf32> to vector<8x64xf32>
    %316 = math.tanh %315 : vector<8x64xf32>
    %317 = arith.mulf %313, %299 : vector<8x64xf32>
    %318 = arith.mulf %312, %316 : vector<8x64xf32>
    %319 = arith.addf %317, %318 : vector<8x64xf32>
    %320 = math.tanh %319 : vector<8x64xf32>
    %321 = arith.mulf %314, %320 : vector<8x64xf32>
    %322 = vector.extract_strided_slice %239 {offsets = [32, 0], sizes = [8, 256], strides = [1, 1]} : vector<64x256xf32> to vector<8x256xf32>
    %323 = arith.truncf %321 : vector<8x64xf32> to vector<8x64xbf16>
    %cst_50 = arith.constant dense<0.000000e+00> : vector<8x256xf32>
    %324 = tpu.matmul %323, %226, %cst_50 {dimension_numbers = #tpu.dot_dimension_numbers<[1], [0], [0], [1], [0, 0, 1, 1], [], []>} : vector<8x64xbf16>, vector<64x256xbf16>, vector<8x256xf32> -> vector<8x256xf32>
    %325 = arith.addf %322, %324 : vector<8x256xf32>
    %326 = vector.extract_strided_slice %325 {offsets = [0, 0], sizes = [8, 192], strides = [1, 1]} : vector<8x256xf32> to vector<8x192xf32>
    %327 = arith.negf %326 : vector<8x192xf32>
    %328 = math.exp %327 : vector<8x192xf32>
    %cst_51 = arith.constant 1.000000e+00 : f32
    %329 = vector.broadcast %cst_51 : f32 to vector<8x192xf32>
    %330 = arith.addf %329, %328 : vector<8x192xf32>
    %331 = arith.divf %329, %330 : vector<8x192xf32>
    %332 = vector.extract_strided_slice %331 {offsets = [0, 0], sizes = [8, 64], strides = [1, 1]} : vector<8x192xf32> to vector<8x64xf32>
    %333 = vector.extract_strided_slice %331 {offsets = [0, 64], sizes = [8, 64], strides = [1, 1]} : vector<8x192xf32> to vector<8x64xf32>
    %334 = vector.extract_strided_slice %331 {offsets = [0, 128], sizes = [8, 64], strides = [1, 1]} : vector<8x192xf32> to vector<8x64xf32>
    %335 = vector.extract_strided_slice %325 {offsets = [0, 192], sizes = [8, 64], strides = [1, 1]} : vector<8x256xf32> to vector<8x64xf32>
    %336 = math.tanh %335 : vector<8x64xf32>
    %337 = arith.mulf %333, %319 : vector<8x64xf32>
    %338 = arith.mulf %332, %336 : vector<8x64xf32>
    %339 = arith.addf %337, %338 : vector<8x64xf32>
    %340 = math.tanh %339 : vector<8x64xf32>
    %341 = arith.mulf %334, %340 : vector<8x64xf32>
    %342 = vector.extract_strided_slice %239 {offsets = [40, 0], sizes = [8, 256], strides = [1, 1]} : vector<64x256xf32> to vector<8x256xf32>
    %343 = arith.truncf %341 : vector<8x64xf32> to vector<8x64xbf16>
    %cst_52 = arith.constant dense<0.000000e+00> : vector<8x256xf32>
    %344 = tpu.matmul %343, %226, %cst_52 {dimension_numbers = #tpu.dot_dimension_numbers<[1], [0], [0], [1], [0, 0, 1, 1], [], []>} : vector<8x64xbf16>, vector<64x256xbf16>, vector<8x256xf32> -> vector<8x256xf32>
    %345 = arith.addf %342, %344 : vector<8x256xf32>
    %346 = vector.extract_strided_slice %345 {offsets = [0, 0], sizes = [8, 192], strides = [1, 1]} : vector<8x256xf32> to vector<8x192xf32>
    %347 = arith.negf %346 : vector<8x192xf32>
    %348 = math.exp %347 : vector<8x192xf32>
    %cst_53 = arith.constant 1.000000e+00 : f32
    %349 = vector.broadcast %cst_53 : f32 to vector<8x192xf32>
    %350 = arith.addf %349, %348 : vector<8x192xf32>
    %351 = arith.divf %349, %350 : vector<8x192xf32>
    %352 = vector.extract_strided_slice %351 {offsets = [0, 0], sizes = [8, 64], strides = [1, 1]} : vector<8x192xf32> to vector<8x64xf32>
    %353 = vector.extract_strided_slice %351 {offsets = [0, 64], sizes = [8, 64], strides = [1, 1]} : vector<8x192xf32> to vector<8x64xf32>
    %354 = vector.extract_strided_slice %351 {offsets = [0, 128], sizes = [8, 64], strides = [1, 1]} : vector<8x192xf32> to vector<8x64xf32>
    %355 = vector.extract_strided_slice %345 {offsets = [0, 192], sizes = [8, 64], strides = [1, 1]} : vector<8x256xf32> to vector<8x64xf32>
    %356 = math.tanh %355 : vector<8x64xf32>
    %357 = arith.mulf %353, %339 : vector<8x64xf32>
    %358 = arith.mulf %352, %356 : vector<8x64xf32>
    %359 = arith.addf %357, %358 : vector<8x64xf32>
    %360 = math.tanh %359 : vector<8x64xf32>
    %361 = arith.mulf %354, %360 : vector<8x64xf32>
    %362 = vector.extract_strided_slice %239 {offsets = [48, 0], sizes = [8, 256], strides = [1, 1]} : vector<64x256xf32> to vector<8x256xf32>
    %363 = arith.truncf %361 : vector<8x64xf32> to vector<8x64xbf16>
    %cst_54 = arith.constant dense<0.000000e+00> : vector<8x256xf32>
    %364 = tpu.matmul %363, %226, %cst_54 {dimension_numbers = #tpu.dot_dimension_numbers<[1], [0], [0], [1], [0, 0, 1, 1], [], []>} : vector<8x64xbf16>, vector<64x256xbf16>, vector<8x256xf32> -> vector<8x256xf32>
    %365 = arith.addf %362, %364 : vector<8x256xf32>
    %366 = vector.extract_strided_slice %365 {offsets = [0, 0], sizes = [8, 192], strides = [1, 1]} : vector<8x256xf32> to vector<8x192xf32>
    %367 = arith.negf %366 : vector<8x192xf32>
    %368 = math.exp %367 : vector<8x192xf32>
    %cst_55 = arith.constant 1.000000e+00 : f32
    %369 = vector.broadcast %cst_55 : f32 to vector<8x192xf32>
    %370 = arith.addf %369, %368 : vector<8x192xf32>
    %371 = arith.divf %369, %370 : vector<8x192xf32>
    %372 = vector.extract_strided_slice %371 {offsets = [0, 0], sizes = [8, 64], strides = [1, 1]} : vector<8x192xf32> to vector<8x64xf32>
    %373 = vector.extract_strided_slice %371 {offsets = [0, 64], sizes = [8, 64], strides = [1, 1]} : vector<8x192xf32> to vector<8x64xf32>
    %374 = vector.extract_strided_slice %371 {offsets = [0, 128], sizes = [8, 64], strides = [1, 1]} : vector<8x192xf32> to vector<8x64xf32>
    %375 = vector.extract_strided_slice %365 {offsets = [0, 192], sizes = [8, 64], strides = [1, 1]} : vector<8x256xf32> to vector<8x64xf32>
    %376 = math.tanh %375 : vector<8x64xf32>
    %377 = arith.mulf %373, %359 : vector<8x64xf32>
    %378 = arith.mulf %372, %376 : vector<8x64xf32>
    %379 = arith.addf %377, %378 : vector<8x64xf32>
    %380 = math.tanh %379 : vector<8x64xf32>
    %381 = arith.mulf %374, %380 : vector<8x64xf32>
    %382 = vector.extract_strided_slice %239 {offsets = [56, 0], sizes = [8, 256], strides = [1, 1]} : vector<64x256xf32> to vector<8x256xf32>
    %383 = arith.truncf %381 : vector<8x64xf32> to vector<8x64xbf16>
    %cst_56 = arith.constant dense<0.000000e+00> : vector<8x256xf32>
    %384 = tpu.matmul %383, %226, %cst_56 {dimension_numbers = #tpu.dot_dimension_numbers<[1], [0], [0], [1], [0, 0, 1, 1], [], []>} : vector<8x64xbf16>, vector<64x256xbf16>, vector<8x256xf32> -> vector<8x256xf32>
    %385 = arith.addf %382, %384 : vector<8x256xf32>
    %386 = vector.extract_strided_slice %385 {offsets = [0, 0], sizes = [8, 192], strides = [1, 1]} : vector<8x256xf32> to vector<8x192xf32>
    %387 = arith.negf %386 : vector<8x192xf32>
    %388 = math.exp %387 : vector<8x192xf32>
    %cst_57 = arith.constant 1.000000e+00 : f32
    %389 = vector.broadcast %cst_57 : f32 to vector<8x192xf32>
    %390 = arith.addf %389, %388 : vector<8x192xf32>
    %391 = arith.divf %389, %390 : vector<8x192xf32>
    %392 = vector.extract_strided_slice %391 {offsets = [0, 0], sizes = [8, 64], strides = [1, 1]} : vector<8x192xf32> to vector<8x64xf32>
    %393 = vector.extract_strided_slice %391 {offsets = [0, 64], sizes = [8, 64], strides = [1, 1]} : vector<8x192xf32> to vector<8x64xf32>
    %394 = vector.extract_strided_slice %391 {offsets = [0, 128], sizes = [8, 64], strides = [1, 1]} : vector<8x192xf32> to vector<8x64xf32>
    %395 = vector.extract_strided_slice %385 {offsets = [0, 192], sizes = [8, 64], strides = [1, 1]} : vector<8x256xf32> to vector<8x64xf32>
    %396 = math.tanh %395 : vector<8x64xf32>
    %397 = arith.mulf %393, %379 : vector<8x64xf32>
    %398 = arith.mulf %392, %396 : vector<8x64xf32>
    %399 = arith.addf %397, %398 : vector<8x64xf32>
    %400 = math.tanh %399 : vector<8x64xf32>
    %401 = arith.mulf %394, %400 : vector<8x64xf32>
    %402 = vector.extract_strided_slice %261 {offsets = [0, 0], sizes = [8, 32], strides = [1, 1]} : vector<8x64xf32> to vector<8x32xf32>
    %403 = vector.extract_strided_slice %281 {offsets = [0, 0], sizes = [8, 32], strides = [1, 1]} : vector<8x64xf32> to vector<8x32xf32>
    %404 = vector.extract_strided_slice %301 {offsets = [0, 0], sizes = [8, 32], strides = [1, 1]} : vector<8x64xf32> to vector<8x32xf32>
    %405 = vector.extract_strided_slice %321 {offsets = [0, 0], sizes = [8, 32], strides = [1, 1]} : vector<8x64xf32> to vector<8x32xf32>
    %406 = vector.extract_strided_slice %341 {offsets = [0, 0], sizes = [8, 32], strides = [1, 1]} : vector<8x64xf32> to vector<8x32xf32>
    %407 = vector.extract_strided_slice %361 {offsets = [0, 0], sizes = [8, 32], strides = [1, 1]} : vector<8x64xf32> to vector<8x32xf32>
    %408 = vector.extract_strided_slice %381 {offsets = [0, 0], sizes = [8, 32], strides = [1, 1]} : vector<8x64xf32> to vector<8x32xf32>
    %409 = vector.extract_strided_slice %401 {offsets = [0, 0], sizes = [8, 32], strides = [1, 1]} : vector<8x64xf32> to vector<8x32xf32>
    %410 = tpu.concatenate %402, %403, %404, %405, %406, %407, %408, %409 in 0 : vector<8x32xf32>, vector<8x32xf32>, vector<8x32xf32>, vector<8x32xf32>, vector<8x32xf32>, vector<8x32xf32>, vector<8x32xf32>, vector<8x32xf32> -> vector<64x32xf32>
    %411 = vector.extract_strided_slice %401 {offsets = [0, 32], sizes = [8, 32], strides = [1, 1]} : vector<8x64xf32> to vector<8x32xf32>
    %412 = vector.extract_strided_slice %381 {offsets = [0, 32], sizes = [8, 32], strides = [1, 1]} : vector<8x64xf32> to vector<8x32xf32>
    %413 = vector.extract_strided_slice %361 {offsets = [0, 32], sizes = [8, 32], strides = [1, 1]} : vector<8x64xf32> to vector<8x32xf32>
    %414 = vector.extract_strided_slice %341 {offsets = [0, 32], sizes = [8, 32], strides = [1, 1]} : vector<8x64xf32> to vector<8x32xf32>
    %415 = vector.extract_strided_slice %321 {offsets = [0, 32], sizes = [8, 32], strides = [1, 1]} : vector<8x64xf32> to vector<8x32xf32>
    %416 = vector.extract_strided_slice %301 {offsets = [0, 32], sizes = [8, 32], strides = [1, 1]} : vector<8x64xf32> to vector<8x32xf32>
    %417 = vector.extract_strided_slice %281 {offsets = [0, 32], sizes = [8, 32], strides = [1, 1]} : vector<8x64xf32> to vector<8x32xf32>
    %418 = vector.extract_strided_slice %261 {offsets = [0, 32], sizes = [8, 32], strides = [1, 1]} : vector<8x64xf32> to vector<8x32xf32>
    %419 = tpu.concatenate %411, %412, %413, %414, %415, %416, %417, %418 in 0 : vector<8x32xf32>, vector<8x32xf32>, vector<8x32xf32>, vector<8x32xf32>, vector<8x32xf32>, vector<8x32xf32>, vector<8x32xf32>, vector<8x32xf32> -> vector<64x32xf32>
    %c0_58 = arith.constant 0 : index
    %c0_59 = arith.constant 0 : index
    %420 = vector.load %arg9[%c0_58, %c0_59] : memref<64x2xbf16, #tpu.memory_space<vmem>>, vector<64x2xbf16>
    %421 = arith.truncf %410 : vector<64x32xf32> to vector<64x32xbf16>
    %422 = vector.extract_strided_slice %420 {offsets = [0, 0], sizes = [32, 2], strides = [1, 1]} : vector<64x2xbf16> to vector<32x2xbf16>
    %cst_60 = arith.constant dense<0.000000e+00> : vector<64x2xf32>
    %423 = tpu.matmul %421, %422, %cst_60 {dimension_numbers = #tpu.dot_dimension_numbers<[1], [0], [0], [1], [0, 0, 1, 1], [], []>} : vector<64x32xbf16>, vector<32x2xbf16>, vector<64x2xf32> -> vector<64x2xf32>
    %424 = arith.truncf %419 : vector<64x32xf32> to vector<64x32xbf16>
    %425 = vector.extract_strided_slice %420 {offsets = [32, 0], sizes = [32, 2], strides = [1, 1]} : vector<64x2xbf16> to vector<32x2xbf16>
    %cst_61 = arith.constant dense<0.000000e+00> : vector<64x2xf32>
    %426 = tpu.matmul %424, %425, %cst_61 {dimension_numbers = #tpu.dot_dimension_numbers<[1], [0], [0], [1], [0, 0, 1, 1], [], []>} : vector<64x32xbf16>, vector<32x2xbf16>, vector<64x2xf32> -> vector<64x2xf32>
    %427 = arith.addf %423, %426 : vector<64x2xf32>
    %c0_62 = arith.constant 0 : index
    %c0_63 = arith.constant 0 : index
    %428 = vector.load %arg10[%c0_62, %c0_63] : memref<1x2xf32, #tpu.memory_space<vmem>>, vector<1x2xf32>
    %429 = vector.broadcast %428 : vector<1x2xf32> to vector<64x2xf32>
    %430 = arith.addf %427, %429 : vector<64x2xf32>
    %c0_64 = arith.constant 0 : index
    %c0_65 = arith.constant 0 : index
    %431 = vector.load %arg11[%c0_64, %c0_65] : memref<64x2xf32, #tpu.memory_space<vmem>>, vector<64x2xf32>
    tpu.vector_store %arg11[%c0_64, %c0_65], %430 {strides = array<i32>} : memref<64x2xf32, #tpu.memory_space<vmem>>, vector<64x2xf32>,
    return
  }
}

</mosaic_0001>

<llo_original>
// kernel: bilstm_forward.1
$region0: #{bilstm_forward.1}
  #allocation0 [shape = 'u32[]', space=smem, size = 0x4, offset = 0x4, fixed_abs, tag = 'smem constant byte address 0x4 - core index']
  #allocation1 [shape = 'u32[144,128]{1,0:T(1,128)}', space=vmem, size = 0x12000, scoped, tag = 'internal scratch']
  %s0 = inlined_call_operand.vmem [shape: f32[64,16], index: 0, kind: input, shape index: {}]
  %s1 = inlined_call_operand.hbm [shape: bf16[16,256], index: 1, kind: input, shape index: {}]
  %s2 = inlined_call_operand.hbm [shape: bf16[16,256], index: 2, kind: input, shape index: {}]
  %s3 = inlined_call_operand.hbm [shape: f32[1,256], index: 3, kind: input, shape index: {}]
  %s4 = inlined_call_operand.hbm [shape: bf16[64,256], index: 4, kind: input, shape index: {}]
  %s5 = inlined_call_operand.hbm [shape: bf16[64,256], index: 5, kind: input, shape index: {}]
  %s6 = inlined_call_operand.hbm [shape: bf16[64,256], index: 6, kind: input, shape index: {}]
  %s7 = inlined_call_operand.hbm [shape: f32[1,256], index: 7, kind: input, shape index: {}]
  %s8 = inlined_call_operand.vmem [shape: bf16[64,256], index: 8, kind: input, shape index: {}]
  %s9 = inlined_call_operand.vmem [shape: bf16[64,2], index: 9, kind: input, shape index: {}]
  %s10 = inlined_call_operand.vmem [shape: f32[1,2], index: 10, kind: input, shape index: {}]
  %s11 = inlined_call_operand.vmem [shape: f32[64,2], index: 11, kind: output, shape index: {}]
  %s12 = sld [smem:[#allocation0]]
  $region82: #{bilstm_forward.1} parent=0
    _
  %s14 = ssub.s32 1, %s12
  %s15 = scalar_select 0, %s14, %s12
  $region1: #{bilstm_forward.1} parent=0
    #allocation2 [shape = 'u8[8192]{0}', space=vmem, size = 0x2000, scoped, tag = 'input window, operand 1, single buffered']
    #allocation3 [shape = 's32[1]{0}', space=sflag, size = 0x4, scoped, tag = 'scoped memory for bilstm_forward.1']
    #allocation4 [shape = 'u8[8192]{0}', space=vmem, size = 0x2000, scoped, tag = 'input window, operand 2, single buffered']
    #allocation5 [shape = 's32[1]{0}', space=sflag, size = 0x4, scoped, tag = 'scoped memory for bilstm_forward.1']
    #allocation6 [shape = 'u8[1024]{0}', space=vmem, size = 0x400, scoped, tag = 'input window, operand 3, single buffered']
    #allocation7 [shape = 'u8[32768]{0}', space=vmem, size = 0x8000, scoped, tag = 'input window, operand 4, single buffered']
    #allocation8 [shape = 's32[1]{0}', space=sflag, size = 0x4, scoped, tag = 'scoped memory for bilstm_forward.1']
    #allocation9 [shape = 'u8[32768]{0}', space=vmem, size = 0x8000, scoped, tag = 'input window, operand 5, single buffered']
    #allocation10 [shape = 'u8[32768]{0}', space=vmem, size = 0x8000, scoped, tag = 'input window, operand 6, single buffered']
    #allocation11 [shape = 's32[1]{0}', space=sflag, size = 0x4, scoped, tag = 'scoped memory for bilstm_forward.1']
    #allocation12 [shape = 'u8[1024]{0}', space=vmem, size = 0x400, scoped, tag = 'input window, operand 7, single buffered']
    %16 = vsyncpa [#allocation3], 0
    %17 = vsyncpa [#allocation5], 0
    %18 = vsyncpa [#allocation8], 0
    %19 = vsyncpa [#allocation11], 0
    // Predicated region
    $region2: #{bilstm_forward.1} parent=1 // pred_check
      _
    $region3: #{bilstm_forward.1} parent=1 // pred_check_branch
      %21 = sbr.rel (0) target = $region5
    $region4: #{bilstm_forward.1} parent=1 // pred_region
      _
    $region5: #{bilstm_forward.1} parent=1 // pred_fallthru
      _
    // Predicated region
    $region6: #{bilstm_forward.1} parent=1 // pred_check
      _
    $region7: #{bilstm_forward.1} parent=1 // pred_check_branch
      %23 = sbr.rel (0) target = $region9
    $region8: #{bilstm_forward.1} parent=1 // pred_region
      %s25 = ssub.s32 256, 256
      %26 = vsyncadd [#allocation3], %s25
      %s27 = sshll.u32 [#allocation2], 4
      %s28 = int_to_ptr.vmem [resolvable:$true] %s27
      %33 = dma.hbm_to_vmem [thread:$0]  %s1, 256, %s28, [#allocation3], 128, 128, 8
    $region9: #{bilstm_forward.1} parent=1 // pred_fallthru
      _
    // Predicated region
    $region10: #{bilstm_forward.1} parent=1 // pred_check
      _
    $region11: #{bilstm_forward.1} parent=1 // pred_check_branch
      %35 = sbr.rel (0) target = $region13
    $region12: #{bilstm_forward.1} parent=1 // pred_region
      %s37 = ssub.s32 256, 256
      %38 = vsyncadd [#allocation5], %s37
      %s39 = sshll.u32 [#allocation4], 4
      %s40 = int_to_ptr.vmem [resolvable:$true] %s39
      %45 = dma.hbm_to_vmem [thread:$0]  %s2, 256, %s40, [#allocation5], 128, 128, 8
    $region13: #{bilstm_forward.1} parent=1 // pred_fallthru
      _
    // Predicated region
    $region14: #{bilstm_forward.1} parent=1 // pred_check
      _
    $region15: #{bilstm_forward.1} parent=1 // pred_check_branch
      %47 = sbr.rel (0) target = $region17
    $region16: #{bilstm_forward.1} parent=1 // pred_region
      %s49 = ssub.s32 32, 32
      %50 = vsyncadd [#allocation5], %s49
      %s52 = sshll.u32 [#allocation6], 4
      %s53 = int_to_ptr.vmem [resolvable:$true] %s52
      %55 = dma.hbm_to_vmem [thread:$0]  %s3, 32, %s53, [#allocation5]
    $region17: #{bilstm_forward.1} parent=1 // pred_fallthru
      _
    // Predicated region
    $region18: #{bilstm_forward.1} parent=1 // pred_check
      _
    $region19: #{bilstm_forward.1} parent=1 // pred_check_branch
      %57 = sbr.rel (0) target = $region21
    $region20: #{bilstm_forward.1} parent=1 // pred_region
      %s59 = ssub.s32 1024, 1024
      %60 = vsyncadd [#allocation8], %s59
      %s61 = sshll.u32 [#allocation7], 4
      %s62 = int_to_ptr.vmem [resolvable:$true] %s61
      %67 = dma.hbm_to_vmem [thread:$0]  %s4, 1024, %s62, [#allocation8], 128, 128, 8
    $region21: #{bilstm_forward.1} parent=1 // pred_fallthru
      _
    // Predicated region
    $region22: #{bilstm_forward.1} parent=1 // pred_check
      _
    $region23: #{bilstm_forward.1} parent=1 // pred_check_branch
      %69 = sbr.rel (0) target = $region25
    $region24: #{bilstm_forward.1} parent=1 // pred_region
      %s71 = ssub.s32 1024, 1024
      %72 = vsyncadd [#allocation8], %s71
      %s73 = sshll.u32 [#allocation9], 4
      %s74 = int_to_ptr.vmem [resolvable:$true] %s73
      %79 = dma.hbm_to_vmem [thread:$0]  %s5, 1024, %s74, [#allocation8], 128, 128, 8
    $region25: #{bilstm_forward.1} parent=1 // pred_fallthru
      _
    // Predicated region
    $region26: #{bilstm_forward.1} parent=1 // pred_check
      _
    $region27: #{bilstm_forward.1} parent=1 // pred_check_branch
      %81 = sbr.rel (0) target = $region29
    $region28: #{bilstm_forward.1} parent=1 // pred_region
      %s83 = ssub.s32 1024, 1024
      %84 = vsyncadd [#allocation11], %s83
      %s85 = sshll.u32 [#allocation10], 4
      %s86 = int_to_ptr.vmem [resolvable:$true] %s85
      %91 = dma.hbm_to_vmem [thread:$0]  %s6, 1024, %s86, [#allocation11], 128, 128, 8
    $region29: #{bilstm_forward.1} parent=1 // pred_fallthru
      _
    // Predicated region
    $region30: #{bilstm_forward.1} parent=1 // pred_check
      _
    $region31: #{bilstm_forward.1} parent=1 // pred_check_branch
      %93 = sbr.rel (0) target = $region33
    $region32: #{bilstm_forward.1} parent=1 // pred_region
      %s95 = ssub.s32 32, 32
      %96 = vsyncadd [#allocation11], %s95
      %s98 = sshll.u32 [#allocation12], 4
      %s99 = int_to_ptr.vmem [resolvable:$true] %s98
      %101 = dma.hbm_to_vmem [thread:$0]  %s7, 32, %s99, [#allocation11]
    $region33: #{bilstm_forward.1} parent=1 // pred_fallthru
      _
    // Predicated region
    $region34: #{bilstm_forward.1} parent=1 // pred_check
      _
    $region35: #{bilstm_forward.1} parent=1 // pred_check_branch
      %103 = sbr.rel (0) target = $region37
    $region36: #{bilstm_forward.1} parent=1 // pred_region
      _
    $region37: #{bilstm_forward.1} parent=1 // pred_fallthru
      _
    // Predicated region
    $region38: #{bilstm_forward.1} parent=1 // pred_check
      _
    $region39: #{bilstm_forward.1} parent=1 // pred_check_branch
      %105 = sbr.rel (0) target = $region41
    $region40: #{bilstm_forward.1} parent=1 // pred_region
      _
    $region41: #{bilstm_forward.1} parent=1 // pred_fallthru
      _
    // Predicated region
    $region42: #{bilstm_forward.1} parent=1 // pred_check
      _
    $region43: #{bilstm_forward.1} parent=1 // pred_check_branch
      %107 = sbr.rel (0) target = $region45
    $region44: #{bilstm_forward.1} parent=1 // pred_region
      _
    $region45: #{bilstm_forward.1} parent=1 // pred_fallthru
      _
    // Predicated region
    $region46: #{bilstm_forward.1} parent=1 // pred_check
      _
    $region47: #{bilstm_forward.1} parent=1 // pred_check_branch
      %109 = sbr.rel (0) target = $region49
    $region48: #{bilstm_forward.1} parent=1 // pred_region
      %110 = dma.done [#allocation3], 256
    $region49: #{bilstm_forward.1} parent=1 // pred_fallthru
      _
    // Predicated region
    $region50: #{bilstm_forward.1} parent=1 // pred_check
      _
    $region51: #{bilstm_forward.1} parent=1 // pred_check_branch
      %112 = sbr.rel (0) target = $region53
    $region52: #{bilstm_forward.1} parent=1 // pred_region
      %113 = dma.done [#allocation5], 256
    $region53: #{bilstm_forward.1} parent=1 // pred_fallthru
      _
    // Predicated region
    $region54: #{bilstm_forward.1} parent=1 // pred_check
      _
    $region55: #{bilstm_forward.1} parent=1 // pred_check_branch
      %115 = sbr.rel (0) target = $region57
    $region56: #{bilstm_forward.1} parent=1 // pred_region
      %116 = dma.done [#allocation5], 32
    $region57: #{bilstm_forward.1} parent=1 // pred_fallthru
      _
    // Predicated region
    $region58: #{bilstm_forward.1} parent=1 // pred_check
      _
    $region59: #{bilstm_forward.1} parent=1 // pred_check_branch
      %118 = sbr.rel (0) target = $region61
    $region60: #{bilstm_forward.1} parent=1 // pred_region
      %119 = dma.done [#allocation8], 1024
    $region61: #{bilstm_forward.1} parent=1 // pred_fallthru
      _
    // Predicated region
    $region62: #{bilstm_forward.1} parent=1 // pred_check
      _
    $region63: #{bilstm_forward.1} parent=1 // pred_check_branch
      %121 = sbr.rel (0) target = $region65
    $region64: #{bilstm_forward.1} parent=1 // pred_region
      %122 = dma.done [#allocation8], 1024
    $region65: #{bilstm_forward.1} parent=1 // pred_fallthru
      _
    // Predicated region
    $region66: #{bilstm_forward.1} parent=1 // pred_check
      _
    $region67: #{bilstm_forward.1} parent=1 // pred_check_branch
      %124 = sbr.rel (0) target = $region69
    $region68: #{bilstm_forward.1} parent=1 // pred_region
      %125 = dma.done [#allocation11], 1024
    $region69: #{bilstm_forward.1} parent=1 // pred_fallthru
      _
    // Predicated region
    $region70: #{bilstm_forward.1} parent=1 // pred_check
      _
    $region71: #{bilstm_forward.1} parent=1 // pred_check_branch
      %127 = sbr.rel (0) target = $region73
    $region72: #{bilstm_forward.1} parent=1 // pred_region
      %128 = dma.done [#allocation11], 32
    $region73: #{bilstm_forward.1} parent=1 // pred_fallthru
      _
    %v130 = vld [vmem:[%s0] sm:$0xff]
    %v131 = vld [vmem:[%s0 + $0x8] sm:$0xff]
    %v132 = vld [vmem:[%s0 + $0x10] sm:$0xff]
    %v133 = vld [vmem:[%s0 + $0x18] sm:$0xff]
    %v134 = vld [vmem:[%s0 + $0x20] sm:$0xff]
    %v135 = vld [vmem:[%s0 + $0x28] sm:$0xff]
    %v136 = vld [vmem:[%s0 + $0x30] sm:$0xff]
    %v137 = vld [vmem:[%s0 + $0x38] sm:$0xff]
    %v138 = vpack.c.bf16 %v131, %v130
    %v139 = vpack.c.bf16 %v133, %v132
    %v140 = vpack.c.bf16 %v135, %v134
    %v141 = vpack.c.bf16 %v137, %v136
    %v142 = vpack.c.bf16 %v136, %v137
    %v143 = vpack.c.bf16 %v134, %v135
    %v144 = vpack.c.bf16 %v132, %v133
    %v145 = vpack.c.bf16 %v130, %v131
    %v146 = vld [vmem:[#allocation2] sm:$0xff]
    %v147 = vld [vmem:[#allocation2 + $0x8] sm:$0xff]
    %v148 = vld [vmem:[#allocation4] sm:$0xff]
    %v149 = vld [vmem:[#allocation4 + $0x8] sm:$0xff]
    %v150 = vld [vmem:[#allocation6] sm:$0x3]
    %v151 = vld [vmem:[#allocation7] sm:$0xff]
    %v152 = vld [vmem:[#allocation7 + $0x8] sm:$0xff]
    %v153 = vld [vmem:[#allocation7 + $0x10] sm:$0xff]
    %v154 = vld [vmem:[#allocation7 + $0x18] sm:$0xff]
    %v155 = vld [vmem:[#allocation7 + $0x20] sm:$0xff]
    %v156 = vld [vmem:[#allocation7 + $0x28] sm:$0xff]
    %v157 = vld [vmem:[#allocation7 + $0x30] sm:$0xff]
    %v158 = vld [vmem:[#allocation7 + $0x38] sm:$0xff]
    %v161 = vunpack.c.l.b16 %v146
    %v162 = vunpack.c.h.b16 %v146
    %v163 = vunpack.c.l.b16 %v147
    %v164 = vunpack.c.h.b16 %v147
    %v165 = vpack.c.b16 %v163, %v161
    %v166 = vpack.c.b16 %v164, %v162
    %vm169 = vcmask 130048
    %v171 = vsel %vm169, %v138, 0
    %v174 = vsel %vm169, %v139, 0
    %v177 = vsel %vm169, %v140, 0
    %v180 = vsel %vm169, %v141, 0
    %182 = vmatprep.subr.bf16.mxu0 0
    %183 = vmatpush1.bf16.msra.mxu0 0
    %184 = vmatprep.subr.bf16.mxu0 0
    %185 = vmatpush1.bf16.msra.mxu0 0
    %186 = vmatprep.subr.bf16.mxu0 0
    %187 = vmatpush1.bf16.msra.mxu0 0
    %188 = vmatprep.subr.bf16.mxu0 0
    %189 = vmatpush1.bf16.msra.mxu0 0
    %190 = vmatprep.subr.bf16.mxu0 0
    %191 = vmatpush1.bf16.msra.mxu0 0
    %192 = vmatprep.subr.bf16.mxu0 0
    %193 = vmatpush1.bf16.msra.mxu0 0
    %194 = vmatprep.subr.bf16.mxu0 0
    %195 = vmatpush1.bf16.msra.mxu0 0
    %196 = vmatprep.subr.bf16.mxu0 %v166
    %197 = vmatpush1.bf16.msra.mxu0 %v165
    %198 = vmatprep.subr.bf16.mxu0 0
    %199 = vmatpush2.bf16.msra.mxu0 0
    %200 = vmatprep.subr.bf16.mxu0 0
    %201 = vmatpush2.bf16.msra.mxu0 0
    %202 = vmatprep.subr.bf16.mxu0 0
    %203 = vmatpush2.bf16.msra.mxu0 0
    %204 = vmatprep.subr.bf16.mxu0 0
    %205 = vmatpush2.bf16.msra.mxu0 0
    %206 = vmatprep.subr.bf16.mxu0 0
    %207 = vmatpush2.bf16.msra.mxu0 0
    %208 = vmatprep.subr.bf16.mxu0 0
    %209 = vmatpush2.bf16.msra.mxu0 0
    %210 = vmatprep.subr.bf16.mxu0 0
    %211 = vmatpush2.bf16.msra.mxu0 0
    %212 = vmatprep.subr.bf16.mxu0 0
    %213 = vmatpush2.bf16.msra.mxu0 0
    %214 = vmatprep.mubr.bf16.mxu0 0
    %215 = vmatmul.mubr.bf16.gmra.mxu0 %v171
    %v216 = vpop.f32.mrf.mxu0
    %v217 = vadd.f32 0.0, %v216
    %v218 = vpop.f32.mrf.mxu0
    %v219 = vadd.f32 0.0, %v218
    %v220 = vpop.f32.mrf.mxu0
    %v221 = vadd.f32 0.0, %v220
    %v222 = vpop.f32.mrf.mxu0
    %v223 = vadd.f32 0.0, %v222
    %224 = vmatprep.mubr.bf16.mxu0 0
    %225 = vmatmul.mubr.bf16.gmra.mxu0 %v174
    %v226 = vpop.f32.mrf.mxu0
    %v227 = vadd.f32 0.0, %v226
    %v228 = vpop.f32.mrf.mxu0
    %v229 = vadd.f32 0.0, %v228
    %v230 = vpop.f32.mrf.mxu0
    %v231 = vadd.f32 0.0, %v230
    %v232 = vpop.f32.mrf.mxu0
    %v233 = vadd.f32 0.0, %v232
    %234 = vmatprep.mubr.bf16.mxu0 0
    %235 = vmatmul.mubr.bf16.gmra.mxu0 %v177
    %v236 = vpop.f32.mrf.mxu0
    %v237 = vadd.f32 0.0, %v236
    %v238 = vpop.f32.mrf.mxu0
    %v239 = vadd.f32 0.0, %v238
    %v240 = vpop.f32.mrf.mxu0
    %v241 = vadd.f32 0.0, %v240
    %v242 = vpop.f32.mrf.mxu0
    %v243 = vadd.f32 0.0, %v242
    %244 = vmatprep.mubr.bf16.mxu0 0
    %245 = vmatmul.mubr.bf16.gmra.mxu0 %v180
    %v246 = vpop.f32.mrf.mxu0
    %v247 = vadd.f32 0.0, %v246
    %v248 = vpop.f32.mrf.mxu0
    %v249 = vadd.f32 0.0, %v248
    %v250 = vpop.f32.mrf.mxu0
    %v251 = vadd.f32 0.0, %v250
    %v252 = vpop.f32.mrf.mxu0
    %v253 = vadd.f32 0.0, %v252
    %254 = vdwg.mxu0
    %v256 = vlaneseq
    %v257 = vshrl.u32 %v256, 7
    %v258 = vsub.s32 0, %v257
    %v259 = vrot.slane %v150, %v258
    %v260 = vlaneseq
    %v261 = vshrl.u32 %v260, 7
    %v262 = vsub.s32 1, %v261
    %v263 = vrot.slane %v150, %v262
    %v266 = vadd.f32 %v259, %v217
    %v267 = vadd.f32 %v263, %v219
    %v268 = vadd.f32 %v259, %v221
    %v269 = vadd.f32 %v263, %v223
    %v270 = vadd.f32 %v259, %v227
    %v271 = vadd.f32 %v263, %v229
    %v272 = vadd.f32 %v259, %v231
    %v273 = vadd.f32 %v263, %v233
    %v274 = vadd.f32 %v259, %v237
    %v275 = vadd.f32 %v263, %v239
    %v276 = vadd.f32 %v259, %v241
    %v277 = vadd.f32 %v263, %v243
    %v278 = vadd.f32 %v259, %v247
    %v279 = vadd.f32 %v263, %v249
    %v280 = vadd.f32 %v259, %v251
    %v281 = vadd.f32 %v263, %v253
    %v284 = vunpack.c.l.b16 %v148
    %v285 = vunpack.c.h.b16 %v148
    %v286 = vunpack.c.l.b16 %v149
    %v287 = vunpack.c.h.b16 %v149
    %v288 = vpack.c.b16 %v286, %v284
    %v289 = vpack.c.b16 %v287, %v285
    %v293 = vsel %vm169, %v142, 0
    %v296 = vsel %vm169, %v143, 0
    %v299 = vsel %vm169, %v144, 0
    %v302 = vsel %vm169, %v145, 0
    %304 = vmatprep.subr.bf16.mxu0 0
    %305 = vmatpush1.bf16.msra.mxu0 0
    %306 = vmatprep.subr.bf16.mxu0 0
    %307 = vmatpush1.bf16.msra.mxu0 0
    %308 = vmatprep.subr.bf16.mxu0 0
    %309 = vmatpush1.bf16.msra.mxu0 0
    %310 = vmatprep.subr.bf16.mxu0 0
    %311 = vmatpush1.bf16.msra.mxu0 0
    %312 = vmatprep.subr.bf16.mxu0 0
    %313 = vmatpush1.bf16.msra.mxu0 0
    %314 = vmatprep.subr.bf16.mxu0 0
    %315 = vmatpush1.bf16.msra.mxu0 0
    %316 = vmatprep.subr.bf16.mxu0 0
    %317 = vmatpush1.bf16.msra.mxu0 0
    %318 = vmatprep.subr.bf16.mxu0 %v289
    %319 = vmatpush1.bf16.msra.mxu0 %v288
    %320 = vmatprep.subr.bf16.mxu0 0
    %321 = vmatpush2.bf16.msra.mxu0 0
    %322 = vmatprep.subr.bf16.mxu0 0
    %323 = vmatpush2.bf16.msra.mxu0 0
    %324 = vmatprep.subr.bf16.mxu0 0
    %325 = vmatpush2.bf16.msra.mxu0 0
    %326 = vmatprep.subr.bf16.mxu0 0
    %327 = vmatpush2.bf16.msra.mxu0 0
    %328 = vmatprep.subr.bf16.mxu0 0
    %329 = vmatpush2.bf16.msra.mxu0 0
    %330 = vmatprep.subr.bf16.mxu0 0
    %331 = vmatpush2.bf16.msra.mxu0 0
    %332 = vmatprep.subr.bf16.mxu0 0
    %333 = vmatpush2.bf16.msra.mxu0 0
    %334 = vmatprep.subr.bf16.mxu0 0
    %335 = vmatpush2.bf16.msra.mxu0 0
    %336 = vmatprep.mubr.bf16.mxu0 0
    %337 = vmatmul.mubr.bf16.gmra.mxu0 %v293
    %v338 = vpop.f32.mrf.mxu0
    %v339 = vadd.f32 0.0, %v338
    %v340 = vpop.f32.mrf.mxu0
    %v341 = vadd.f32 0.0, %v340
    %v342 = vpop.f32.mrf.mxu0
    %v343 = vadd.f32 0.0, %v342
    %v344 = vpop.f32.mrf.mxu0
    %v345 = vadd.f32 0.0, %v344
    %346 = vmatprep.mubr.bf16.mxu0 0
    %347 = vmatmul.mubr.bf16.gmra.mxu0 %v296
    %v348 = vpop.f32.mrf.mxu0
    %v349 = vadd.f32 0.0, %v348
    %v350 = vpop.f32.mrf.mxu0
    %v351 = vadd.f32 0.0, %v350
    %v352 = vpop.f32.mrf.mxu0
    %v353 = vadd.f32 0.0, %v352
    %v354 = vpop.f32.mrf.mxu0
    %v355 = vadd.f32 0.0, %v354
    %356 = vmatprep.mubr.bf16.mxu0 0
    %357 = vmatmul.mubr.bf16.gmra.mxu0 %v299
    %v358 = vpop.f32.mrf.mxu0
    %v359 = vadd.f32 0.0, %v358
    %v360 = vpop.f32.mrf.mxu0
    %v361 = vadd.f32 0.0, %v360
    %v362 = vpop.f32.mrf.mxu0
    %v363 = vadd.f32 0.0, %v362
    %v364 = vpop.f32.mrf.mxu0
    %v365 = vadd.f32 0.0, %v364
    %366 = vmatprep.mubr.bf16.mxu0 0
    %367 = vmatmul.mubr.bf16.gmra.mxu0 %v302
    %v368 = vpop.f32.mrf.mxu0
    %v369 = vadd.f32 0.0, %v368
    %v370 = vpop.f32.mrf.mxu0
    %v371 = vadd.f32 0.0, %v370
    %v372 = vpop.f32.mrf.mxu0
    %v373 = vadd.f32 0.0, %v372
    %v374 = vpop.f32.mrf.mxu0
    %v375 = vadd.f32 0.0, %v374
    %376 = vdwg.mxu0
    %v377 = vadd.f32 %v266, %v339
    %v378 = vadd.f32 %v267, %v341
    %v379 = vadd.f32 %v268, %v343
    %v380 = vadd.f32 %v269, %v345
    %v381 = vadd.f32 %v270, %v349
    %v382 = vadd.f32 %v271, %v351
    %v383 = vadd.f32 %v272, %v353
    %v384 = vadd.f32 %v273, %v355
    %v385 = vadd.f32 %v274, %v359
    %v386 = vadd.f32 %v275, %v361
    %v387 = vadd.f32 %v276, %v363
    %v388 = vadd.f32 %v277, %v365
    %v389 = vadd.f32 %v278, %v369
    %v390 = vadd.f32 %v279, %v371
    %v391 = vadd.f32 %v280, %v373
    %v392 = vadd.f32 %v281, %v375
    %v401 = vunpack.c.l.b16 %v151
    %v402 = vunpack.c.h.b16 %v151
    %v403 = vunpack.c.l.b16 %v152
    %v404 = vunpack.c.h.b16 %v152
    %v405 = vunpack.c.l.b16 %v153
    %v406 = vunpack.c.h.b16 %v153
    %v407 = vunpack.c.l.b16 %v154
    %v408 = vunpack.c.h.b16 %v154
    %v409 = vunpack.c.l.b16 %v155
    %v410 = vunpack.c.h.b16 %v155
    %v411 = vunpack.c.l.b16 %v156
    %v412 = vunpack.c.h.b16 %v156
    %v413 = vunpack.c.l.b16 %v157
    %v414 = vunpack.c.h.b16 %v157
    %v415 = vunpack.c.l.b16 %v158
    %v416 = vunpack.c.h.b16 %v158
    %v417 = vpack.c.b16 %v403, %v401
    %v418 = vpack.c.b16 %v404, %v402
    %v419 = vpack.c.b16 %v407, %v405
    %v420 = vpack.c.b16 %v408, %v406
    %v421 = vpack.c.b16 %v411, %v409
    %v422 = vpack.c.b16 %v412, %v410
    %v423 = vpack.c.b16 %v415, %v413
    %v424 = vpack.c.b16 %v416, %v414
    %vm433 = vcmask 523264
    %v435 = vsel %vm433, 0, 0
    %437 = vmatprep.subr.bf16.mxu0 0
    %438 = vmatpush1.bf16.msra.mxu0 0
    %439 = vmatprep.subr.bf16.mxu0 0
    %440 = vmatpush1.bf16.msra.mxu0 0
    %441 = vmatprep.subr.bf16.mxu0 0
    %442 = vmatpush1.bf16.msra.mxu0 0
    %443 = vmatprep.subr.bf16.mxu0 0
    %444 = vmatpush1.bf16.msra.mxu0 0
    %445 = vmatprep.subr.bf16.mxu0 %v424
    %446 = vmatpush1.bf16.msra.mxu0 %v423
    %447 = vmatprep.subr.bf16.mxu0 %v422
    %448 = vmatpush1.bf16.msra.mxu0 %v421
    %449 = vmatprep.subr.bf16.mxu0 %v420
    %450 = vmatpush1.bf16.msra.mxu0 %v419
    %451 = vmatprep.subr.bf16.mxu0 %v418
    %452 = vmatpush1.bf16.msra.mxu0 %v417
    %453 = vmatprep.subr.bf16.mxu0 0
    %454 = vmatpush2.bf16.msra.mxu0 0
    %455 = vmatprep.subr.bf16.mxu0 0
    %456 = vmatpush2.bf16.msra.mxu0 0
    %457 = vmatprep.subr.bf16.mxu0 0
    %458 = vmatpush2.bf16.msra.mxu0 0
    %459 = vmatprep.subr.bf16.mxu0 0
    %460 = vmatpush2.bf16.msra.mxu0 0
    %461 = vmatprep.subr.bf16.mxu0 0
    %462 = vmatpush2.bf16.msra.mxu0 0
    %463 = vmatprep.subr.bf16.mxu0 0
    %464 = vmatpush2.bf16.msra.mxu0 0
    %465 = vmatprep.subr.bf16.mxu0 0
    %466 = vmatpush2.bf16.msra.mxu0 0
    %467 = vmatprep.subr.bf16.mxu0 0
    %468 = vmatpush2.bf16.msra.mxu0 0
    %469 = vmatprep.mubr.bf16.mxu0 0
    %470 = vmatmul.mubr.bf16.gmra.mxu0 %v435
    %v471 = vpop.f32.mrf.mxu0
    %v472 = vadd.f32 0.0, %v471
    %v473 = vpop.f32.mrf.mxu0
    %v474 = vadd.f32 0.0, %v473
    %v475 = vpop.f32.mrf.mxu0
    %v476 = vpop.f32.mrf.mxu0
    %477 = vdwg.mxu0
    %v478 = vadd.f32 %v377, %v472
    %v479 = vadd.f32 %v378, %v474
    %v480 = vxor.u32 %v478, 2147483648
    %v481 = vxor.u32 %v479, 2147483648
    %v482 = vmul.f32 %v480, 1.442695
    %v483 = vpow.pop %v482
    %v484 = vmul.f32 %v481, 1.442695
    %v485 = vpow.pop %v484
    %v486 = vadd.f32 %v483, 1.0
    %v487 = vadd.f32 %v485, 1.0
    %v488 = vrcp.pop %v486
    %v489 = vmul.f32 1.0, %v488
    %v490 = vrcp.pop %v487
    %v491 = vmul.f32 1.0, %v490
    %v492 = vtanh.pop %v479
    %v493 = vmul.f32 %v489, 0.0
    %495 = vrot.lane.b32.xlu0 %v492, 64
    %v496 = vpop.permute.xlu0 %495
    %v498 = vmul.f32 %v489, %v496
    %500 = vrot.lane.b32.xlu0 %v498, 64
    %v501 = vpop.permute.xlu0 %500
    %v503 = vadd.f32 %v493, %v501
    %v504 = vtanh.pop %v503
    %506 = vrot.lane.b32.xlu0 %v504, 64
    %v507 = vpop.permute.xlu0 %506
    %v509 = vmul.f32 %v491, %v507
    %v510 = vpack.c.bf16 %v509, %v509
    %v512 = vsel %vm433, %v510, 0
    %514 = vmatprep.subr.bf16.mxu0 0
    %515 = vmatpush1.bf16.msra.mxu0 0
    %516 = vmatprep.subr.bf16.mxu0 0
    %517 = vmatpush1.bf16.msra.mxu0 0
    %518 = vmatprep.subr.bf16.mxu0 0
    %519 = vmatpush1.bf16.msra.mxu0 0
    %520 = vmatprep.subr.bf16.mxu0 0
    %521 = vmatpush1.bf16.msra.mxu0 0
    %522 = vmatprep.subr.bf16.mxu0 %v424
    %523 = vmatpush1.bf16.msra.mxu0 %v423
    %524 = vmatprep.subr.bf16.mxu0 %v422
    %525 = vmatpush1.bf16.msra.mxu0 %v421
    %526 = vmatprep.subr.bf16.mxu0 %v420
    %527 = vmatpush1.bf16.msra.mxu0 %v419
    %528 = vmatprep.subr.bf16.mxu0 %v418
    %529 = vmatpush1.bf16.msra.mxu0 %v417
    %530 = vmatprep.subr.bf16.mxu0 0
    %531 = vmatpush2.bf16.msra.mxu0 0
    %532 = vmatprep.subr.bf16.mxu0 0
    %533 = vmatpush2.bf16.msra.mxu0 0
    %534 = vmatprep.subr.bf16.mxu0 0
    %535 = vmatpush2.bf16.msra.mxu0 0
    %536 = vmatprep.subr.bf16.mxu0 0
    %537 = vmatpush2.bf16.msra.mxu0 0
    %538 = vmatprep.subr.bf16.mxu0 0
    %539 = vmatpush2.bf16.msra.mxu0 0
    %540 = vmatprep.subr.bf16.mxu0 0
    %541 = vmatpush2.bf16.msra.mxu0 0
    %542 = vmatprep.subr.bf16.mxu0 0
    %543 = vmatpush2.bf16.msra.mxu0 0
    %544 = vmatprep.subr.bf16.mxu0 0
    %545 = vmatpush2.bf16.msra.mxu0 0
    %546 = vmatprep.mubr.bf16.mxu0 0
    %547 = vmatmul.mubr.bf16.gmra.mxu0 %v512
    %v548 = vpop.f32.mrf.mxu0
    %v549 = vadd.f32 0.0, %v548
    %v550 = vpop.f32.mrf.mxu0
    %v551 = vadd.f32 0.0, %v550
    %v552 = vpop.f32.mrf.mxu0
    %v553 = vpop.f32.mrf.mxu0
    %554 = vdwg.mxu0
    %v555 = vadd.f32 %v379, %v549
    %v556 = vadd.f32 %v380, %v551
    %v557 = vxor.u32 %v555, 2147483648
    %v558 = vxor.u32 %v556, 2147483648
    %v559 = vmul.f32 %v557, 1.442695
    %v560 = vpow.pop %v559
    %v561 = vmul.f32 %v558, 1.442695
    %v562 = vpow.pop %v561
    %v563 = vadd.f32 %v560, 1.0
    %v564 = vadd.f32 %v562, 1.0
    %v565 = vrcp.pop %v563
    %v566 = vmul.f32 1.0, %v565
    %v567 = vrcp.pop %v564
    %v568 = vmul.f32 1.0, %v567
    %v569 = vtanh.pop %v556
    %v570 = vmul.f32 %v566, %v503
    %572 = vrot.lane.b32.xlu0 %v569, 64
    %v573 = vpop.permute.xlu0 %572
    %v575 = vmul.f32 %v566, %v573
    %577 = vrot.lane.b32.xlu0 %v575, 64
    %v578 = vpop.permute.xlu0 %577
    %v580 = vadd.f32 %v570, %v578
    %v581 = vtanh.pop %v580
    %583 = vrot.lane.b32.xlu0 %v581, 64
    %v584 = vpop.permute.xlu0 %583
    %v586 = vmul.f32 %v568, %v584
    %v587 = vpack.c.bf16 %v586, %v586
    %v589 = vsel %vm433, %v587, 0
    %591 = vmatprep.subr.bf16.mxu0 0
    %592 = vmatpush1.bf16.msra.mxu0 0
    %593 = vmatprep.subr.bf16.mxu0 0
    %594 = vmatpush1.bf16.msra.mxu0 0
    %595 = vmatprep.subr.bf16.mxu0 0
    %596 = vmatpush1.bf16.msra.mxu0 0
    %597 = vmatprep.subr.bf16.mxu0 0
    %598 = vmatpush1.bf16.msra.mxu0 0
    %599 = vmatprep.subr.bf16.mxu0 %v424
    %600 = vmatpush1.bf16.msra.mxu0 %v423
    %601 = vmatprep.subr.bf16.mxu0 %v422
    %602 = vmatpush1.bf16.msra.mxu0 %v421
    %603 = vmatprep.subr.bf16.mxu0 %v420
    %604 = vmatpush1.bf16.msra.mxu0 %v419
    %605 = vmatprep.subr.bf16.mxu0 %v418
    %606 = vmatpush1.bf16.msra.mxu0 %v417
    %607 = vmatprep.subr.bf16.mxu0 0
    %608 = vmatpush2.bf16.msra.mxu0 0
    %609 = vmatprep.subr.bf16.mxu0 0
    %610 = vmatpush2.bf16.msra.mxu0 0
    %611 = vmatprep.subr.bf16.mxu0 0
    %612 = vmatpush2.bf16.msra.mxu0 0
    %613 = vmatprep.subr.bf16.mxu0 0
    %614 = vmatpush2.bf16.msra.mxu0 0
    %615 = vmatprep.subr.bf16.mxu0 0
    %616 = vmatpush2.bf16.msra.mxu0 0
    %617 = vmatprep.subr.bf16.mxu0 0
    %618 = vmatpush2.bf16.msra.mxu0 0
    %619 = vmatprep.subr.bf16.mxu0 0
    %620 = vmatpush2.bf16.msra.mxu0 0
    %621 = vmatprep.subr.bf16.mxu0 0
    %622 = vmatpush2.bf16.msra.mxu0 0
    %623 = vmatprep.mubr.bf16.mxu0 0
    %624 = vmatmul.mubr.bf16.gmra.mxu0 %v589
    %v625 = vpop.f32.mrf.mxu0
    %v626 = vadd.f32 0.0, %v625
    %v627 = vpop.f32.mrf.mxu0
    %v628 = vadd.f32 0.0, %v627
    %v629 = vpop.f32.mrf.mxu0
    %v630 = vpop.f32.mrf.mxu0
    %631 = vdwg.mxu0
    %v632 = vadd.f32 %v381, %v626
    %v633 = vadd.f32 %v382, %v628
    %v634 = vxor.u32 %v632, 2147483648
    %v635 = vxor.u32 %v633, 2147483648
    %v636 = vmul.f32 %v634, 1.442695
    %v637 = vpow.pop %v636
    %v638 = vmul.f32 %v635, 1.442695
    %v639 = vpow.pop %v638
    %v640 = vadd.f32 %v637, 1.0
    %v641 = vadd.f32 %v639, 1.0
    %v642 = vrcp.pop %v640
    %v643 = vmul.f32 1.0, %v642
    %v644 = vrcp.pop %v641
    %v645 = vmul.f32 1.0, %v644
    %v646 = vtanh.pop %v633
    %v647 = vmul.f32 %v643, %v580
    %649 = vrot.lane.b32.xlu0 %v646, 64
    %v650 = vpop.permute.xlu0 %649
    %v652 = vmul.f32 %v643, %v650
    %654 = vrot.lane.b32.xlu0 %v652, 64
    %v655 = vpop.permute.xlu0 %654
    %v657 = vadd.f32 %v647, %v655
    %v658 = vtanh.pop %v657
    %660 = vrot.lane.b32.xlu0 %v658, 64
    %v661 = vpop.permute.xlu0 %660
    %v663 = vmul.f32 %v645, %v661
    %v664 = vpack.c.bf16 %v663, %v663
    %v666 = vsel %vm433, %v664, 0
    %668 = vmatprep.subr.bf16.mxu0 0
    %669 = vmatpush1.bf16.msra.mxu0 0
    %670 = vmatprep.subr.bf16.mxu0 0
    %671 = vmatpush1.bf16.msra.mxu0 0
    %672 = vmatprep.subr.bf16.mxu0 0
    %673 = vmatpush1.bf16.msra.mxu0 0
    %674 = vmatprep.subr.bf16.mxu0 0
    %675 = vmatpush1.bf16.msra.mxu0 0
    %676 = vmatprep.subr.bf16.mxu0 %v424
    %677 = vmatpush1.bf16.msra.mxu0 %v423
    %678 = vmatprep.subr.bf16.mxu0 %v422
    %679 = vmatpush1.bf16.msra.mxu0 %v421
    %680 = vmatprep.subr.bf16.mxu0 %v420
    %681 = vmatpush1.bf16.msra.mxu0 %v419
    %682 = vmatprep.subr.bf16.mxu0 %v418
    %683 = vmatpush1.bf16.msra.mxu0 %v417
    %684 = vmatprep.subr.bf16.mxu0 0
    %685 = vmatpush2.bf16.msra.mxu0 0
    %686 = vmatprep.subr.bf16.mxu0 0
    %687 = vmatpush2.bf16.msra.mxu0 0
    %688 = vmatprep.subr.bf16.mxu0 0
    %689 = vmatpush2.bf16.msra.mxu0 0
    %690 = vmatprep.subr.bf16.mxu0 0
    %691 = vmatpush2.bf16.msra.mxu0 0
    %692 = vmatprep.subr.bf16.mxu0 0
    %693 = vmatpush2.bf16.msra.mxu0 0
    %694 = vmatprep.subr.bf16.mxu0 0
    %695 = vmatpush2.bf16.msra.mxu0 0
    %696 = vmatprep.subr.bf16.mxu0 0
    %697 = vmatpush2.bf16.msra.mxu0 0
    %698 = vmatprep.subr.bf16.mxu0 0
    %699 = vmatpush2.bf16.msra.mxu0 0
    %700 = vmatprep.mubr.bf16.mxu0 0
    %701 = vmatmul.mubr.bf16.gmra.mxu0 %v666
    %v702 = vpop.f32.mrf.mxu0
    %v703 = vadd.f32 0.0, %v702
    %v704 = vpop.f32.mrf.mxu0
    %v705 = vadd.f32 0.0, %v704
    %v706 = vpop.f32.mrf.mxu0
    %v707 = vpop.f32.mrf.mxu0
    %708 = vdwg.mxu0
    %v709 = vadd.f32 %v383, %v703
    %v710 = vadd.f32 %v384, %v705
    %v711 = vxor.u32 %v709, 2147483648
    %v712 = vxor.u32 %v710, 2147483648
    %v713 = vmul.f32 %v711, 1.442695
    %v714 = vpow.pop %v713
    %v715 = vmul.f32 %v712, 1.442695
    %v716 = vpow.pop %v715
    %v717 = vadd.f32 %v714, 1.0
    %v718 = vadd.f32 %v716, 1.0
    %v719 = vrcp.pop %v717
    %v720 = vmul.f32 1.0, %v719
    %v721 = vrcp.pop %v718
    %v722 = vmul.f32 1.0, %v721
    %v723 = vtanh.pop %v710
    %v724 = vmul.f32 %v720, %v657
    %726 = vrot.lane.b32.xlu0 %v723, 64
    %v727 = vpop.permute.xlu0 %726
    %v729 = vmul.f32 %v720, %v727
    %731 = vrot.lane.b32.xlu0 %v729, 64
    %v732 = vpop.permute.xlu0 %731
    %v734 = vadd.f32 %v724, %v732
    %v735 = vtanh.pop %v734
    %737 = vrot.lane.b32.xlu0 %v735, 64
    %v738 = vpop.permute.xlu0 %737
    %v740 = vmul.f32 %v722, %v738
    %v741 = vpack.c.bf16 %v740, %v740
    %v743 = vsel %vm433, %v741, 0
    %745 = vmatprep.subr.bf16.mxu0 0
    %746 = vmatpush1.bf16.msra.mxu0 0
    %747 = vmatprep.subr.bf16.mxu0 0
    %748 = vmatpush1.bf16.msra.mxu0 0
    %749 = vmatprep.subr.bf16.mxu0 0
    %750 = vmatpush1.bf16.msra.mxu0 0
    %751 = vmatprep.subr.bf16.mxu0 0
    %752 = vmatpush1.bf16.msra.mxu0 0
    %753 = vmatprep.subr.bf16.mxu0 %v424
    %754 = vmatpush1.bf16.msra.mxu0 %v423
    %755 = vmatprep.subr.bf16.mxu0 %v422
    %756 = vmatpush1.bf16.msra.mxu0 %v421
    %757 = vmatprep.subr.bf16.mxu0 %v420
    %758 = vmatpush1.bf16.msra.mxu0 %v419
    %759 = vmatprep.subr.bf16.mxu0 %v418
    %760 = vmatpush1.bf16.msra.mxu0 %v417
    %761 = vmatprep.subr.bf16.mxu0 0
    %762 = vmatpush2.bf16.msra.mxu0 0
    %763 = vmatprep.subr.bf16.mxu0 0
    %764 = vmatpush2.bf16.msra.mxu0 0
    %765 = vmatprep.subr.bf16.mxu0 0
    %766 = vmatpush2.bf16.msra.mxu0 0
    %767 = vmatprep.subr.bf16.mxu0 0
    %768 = vmatpush2.bf16.msra.mxu0 0
    %769 = vmatprep.subr.bf16.mxu0 0
    %770 = vmatpush2.bf16.msra.mxu0 0
    %771 = vmatprep.subr.bf16.mxu0 0
    %772 = vmatpush2.bf16.msra.mxu0 0
    %773 = vmatprep.subr.bf16.mxu0 0
    %774 = vmatpush2.bf16.msra.mxu0 0
    %775 = vmatprep.subr.bf16.mxu0 0
    %776 = vmatpush2.bf16.msra.mxu0 0
    %777 = vmatprep.mubr.bf16.mxu0 0
    %778 = vmatmul.mubr.bf16.gmra.mxu0 %v743
    %v779 = vpop.f32.mrf.mxu0
    %v780 = vadd.f32 0.0, %v779
    %v781 = vpop.f32.mrf.mxu0
    %v782 = vadd.f32 0.0, %v781
    %v783 = vpop.f32.mrf.mxu0
    %v784 = vpop.f32.mrf.mxu0
    %785 = vdwg.mxu0
    %v786 = vadd.f32 %v385, %v780
    %v787 = vadd.f32 %v386, %v782
    %v788 = vxor.u32 %v786, 2147483648
    %v789 = vxor.u32 %v787, 2147483648
    %v790 = vmul.f32 %v788, 1.442695
    %v791 = vpow.pop %v790
    %v792 = vmul.f32 %v789, 1.442695
    %v793 = vpow.pop %v792
    %v794 = vadd.f32 %v791, 1.0
    %v795 = vadd.f32 %v793, 1.0
    %v796 = vrcp.pop %v794
    %v797 = vmul.f32 1.0, %v796
    %v798 = vrcp.pop %v795
    %v799 = vmul.f32 1.0, %v798
    %v800 = vtanh.pop %v787
    %v801 = vmul.f32 %v797, %v734
    %803 = vrot.lane.b32.xlu0 %v800, 64
    %v804 = vpop.permute.xlu0 %803
    %v806 = vmul.f32 %v797, %v804
    %808 = vrot.lane.b32.xlu0 %v806, 64
    %v809 = vpop.permute.xlu0 %808
    %v811 = vadd.f32 %v801, %v809
    %v812 = vtanh.pop %v811
    %814 = vrot.lane.b32.xlu0 %v812, 64
    %v815 = vpop.permute.xlu0 %814
    %v817 = vmul.f32 %v799, %v815
    %v818 = vpack.c.bf16 %v817, %v817
    %v820 = vsel %vm433, %v818, 0
    %822 = vmatprep.subr.bf16.mxu0 0
    %823 = vmatpush1.bf16.msra.mxu0 0
    %824 = vmatprep.subr.bf16.mxu0 0
    %825 = vmatpush1.bf16.msra.mxu0 0
    %826 = vmatprep.subr.bf16.mxu0 0
    %827 = vmatpush1.bf16.msra.mxu0 0
    %828 = vmatprep.subr.bf16.mxu0 0
    %829 = vmatpush1.bf16.msra.mxu0 0
    %830 = vmatprep.subr.bf16.mxu0 %v424
    %831 = vmatpush1.bf16.msra.mxu0 %v423
    %832 = vmatprep.subr.bf16.mxu0 %v422
    %833 = vmatpush1.bf16.msra.mxu0 %v421
    %834 = vmatprep.subr.bf16.mxu0 %v420
    %835 = vmatpush1.bf16.msra.mxu0 %v419
    %836 = vmatprep.subr.bf16.mxu0 %v418
    %837 = vmatpush1.bf16.msra.mxu0 %v417
    %838 = vmatprep.subr.bf16.mxu0 0
    %839 = vmatpush2.bf16.msra.mxu0 0
    %840 = vmatprep.subr.bf16.mxu0 0
    %841 = vmatpush2.bf16.msra.mxu0 0
    %842 = vmatprep.subr.bf16.mxu0 0
    %843 = vmatpush2.bf16.msra.mxu0 0
    %844 = vmatprep.subr.bf16.mxu0 0
    %845 = vmatpush2.bf16.msra.mxu0 0
    %846 = vmatprep.subr.bf16.mxu0 0
    %847 = vmatpush2.bf16.msra.mxu0 0
    %848 = vmatprep.subr.bf16.mxu0 0
    %849 = vmatpush2.bf16.msra.mxu0 0
    %850 = vmatprep.subr.bf16.mxu0 0
    %851 = vmatpush2.bf16.msra.mxu0 0
    %852 = vmatprep.subr.bf16.mxu0 0
    %853 = vmatpush2.bf16.msra.mxu0 0
    %854 = vmatprep.mubr.bf16.mxu0 0
    %855 = vmatmul.mubr.bf16.gmra.mxu0 %v820
    %v856 = vpop.f32.mrf.mxu0
    %v857 = vadd.f32 0.0, %v856
    %v858 = vpop.f32.mrf.mxu0
    %v859 = vadd.f32 0.0, %v858
    %v860 = vpop.f32.mrf.mxu0
    %v861 = vpop.f32.mrf.mxu0
    %862 = vdwg.mxu0
    %v863 = vadd.f32 %v387, %v857
    %v864 = vadd.f32 %v388, %v859
    %v865 = vxor.u32 %v863, 2147483648
    %v866 = vxor.u32 %v864, 2147483648
    %v867 = vmul.f32 %v865, 1.442695
    %v868 = vpow.pop %v867
    %v869 = vmul.f32 %v866, 1.442695
    %v870 = vpow.pop %v869
    %v871 = vadd.f32 %v868, 1.0
    %v872 = vadd.f32 %v870, 1.0
    %v873 = vrcp.pop %v871
    %v874 = vmul.f32 1.0, %v873
    %v875 = vrcp.pop %v872
    %v876 = vmul.f32 1.0, %v875
    %v877 = vtanh.pop %v864
    %v878 = vmul.f32 %v874, %v811
    %880 = vrot.lane.b32.xlu0 %v877, 64
    %v881 = vpop.permute.xlu0 %880
    %v883 = vmul.f32 %v874, %v881
    %885 = vrot.lane.b32.xlu0 %v883, 64
    %v886 = vpop.permute.xlu0 %885
    %v888 = vadd.f32 %v878, %v886
    %v889 = vtanh.pop %v888
    %891 = vrot.lane.b32.xlu0 %v889, 64
    %v892 = vpop.permute.xlu0 %891
    %v894 = vmul.f32 %v876, %v892
    %v895 = vpack.c.bf16 %v894, %v894
    %v897 = vsel %vm433, %v895, 0
    %899 = vmatprep.subr.bf16.mxu0 0
    %900 = vmatpush1.bf16.msra.mxu0 0
    %901 = vmatprep.subr.bf16.mxu0 0
    %902 = vmatpush1.bf16.msra.mxu0 0
    %903 = vmatprep.subr.bf16.mxu0 0
    %904 = vmatpush1.bf16.msra.mxu0 0
    %905 = vmatprep.subr.bf16.mxu0 0
    %906 = vmatpush1.bf16.msra.mxu0 0
    %907 = vmatprep.subr.bf16.mxu0 %v424
    %908 = vmatpush1.bf16.msra.mxu0 %v423
    %909 = vmatprep.subr.bf16.mxu0 %v422
    %910 = vmatpush1.bf16.msra.mxu0 %v421
    %911 = vmatprep.subr.bf16.mxu0 %v420
    %912 = vmatpush1.bf16.msra.mxu0 %v419
    %913 = vmatprep.subr.bf16.mxu0 %v418
    %914 = vmatpush1.bf16.msra.mxu0 %v417
    %915 = vmatprep.subr.bf16.mxu0 0
    %916 = vmatpush2.bf16.msra.mxu0 0
    %917 = vmatprep.subr.bf16.mxu0 0
    %918 = vmatpush2.bf16.msra.mxu0 0
    %919 = vmatprep.subr.bf16.mxu0 0
    %920 = vmatpush2.bf16.msra.mxu0 0
    %921 = vmatprep.subr.bf16.mxu0 0
    %922 = vmatpush2.bf16.msra.mxu0 0
    %923 = vmatprep.subr.bf16.mxu0 0
    %924 = vmatpush2.bf16.msra.mxu0 0
    %925 = vmatprep.subr.bf16.mxu0 0
    %926 = vmatpush2.bf16.msra.mxu0 0
    %927 = vmatprep.subr.bf16.mxu0 0
    %928 = vmatpush2.bf16.msra.mxu0 0
    %929 = vmatprep.subr.bf16.mxu0 0
    %930 = vmatpush2.bf16.msra.mxu0 0
    %931 = vmatprep.mubr.bf16.mxu0 0
    %932 = vmatmul.mubr.bf16.gmra.mxu0 %v897
    %v933 = vpop.f32.mrf.mxu0
    %v934 = vadd.f32 0.0, %v933
    %v935 = vpop.f32.mrf.mxu0
    %v936 = vadd.f32 0.0, %v935
    %v937 = vpop.f32.mrf.mxu0
    %v938 = vpop.f32.mrf.mxu0
    %939 = vdwg.mxu0
    %v940 = vadd.f32 %v389, %v934
    %v941 = vadd.f32 %v390, %v936
    %v942 = vxor.u32 %v940, 2147483648
    %v943 = vxor.u32 %v941, 2147483648
    %v944 = vmul.f32 %v942, 1.442695
    %v945 = vpow.pop %v944
    %v946 = vmul.f32 %v943, 1.442695
    %v947 = vpow.pop %v946
    %v948 = vadd.f32 %v945, 1.0
    %v949 = vadd.f32 %v947, 1.0
    %v950 = vrcp.pop %v948
    %v951 = vmul.f32 1.0, %v950
    %v952 = vrcp.pop %v949
    %v953 = vmul.f32 1.0, %v952
    %v954 = vtanh.pop %v941
    %v955 = vmul.f32 %v951, %v888
    %957 = vrot.lane.b32.xlu0 %v954, 64
    %v958 = vpop.permute.xlu0 %957
    %v960 = vmul.f32 %v951, %v958
    %962 = vrot.lane.b32.xlu0 %v960, 64
    %v963 = vpop.permute.xlu0 %962
    %v965 = vadd.f32 %v955, %v963
    %v966 = vtanh.pop %v965
    %968 = vrot.lane.b32.xlu0 %v966, 64
    %v969 = vpop.permute.xlu0 %968
    %v971 = vmul.f32 %v953, %v969
    %v972 = vpack.c.bf16 %v971, %v971
    %v974 = vsel %vm433, %v972, 0
    %976 = vmatprep.subr.bf16.mxu0 0
    %977 = vmatpush1.bf16.msra.mxu0 0
    %978 = vmatprep.subr.bf16.mxu0 0
    %979 = vmatpush1.bf16.msra.mxu0 0
    %980 = vmatprep.subr.bf16.mxu0 0
    %981 = vmatpush1.bf16.msra.mxu0 0
    %982 = vmatprep.subr.bf16.mxu0 0
    %983 = vmatpush1.bf16.msra.mxu0 0
    %984 = vmatprep.subr.bf16.mxu0 %v424
    %985 = vmatpush1.bf16.msra.mxu0 %v423
    %986 = vmatprep.subr.bf16.mxu0 %v422
    %987 = vmatpush1.bf16.msra.mxu0 %v421
    %988 = vmatprep.subr.bf16.mxu0 %v420
    %989 = vmatpush1.bf16.msra.mxu0 %v419
    %990 = vmatprep.subr.bf16.mxu0 %v418
    %991 = vmatpush1.bf16.msra.mxu0 %v417
    %992 = vmatprep.subr.bf16.mxu0 0
    %993 = vmatpush2.bf16.msra.mxu0 0
    %994 = vmatprep.subr.bf16.mxu0 0
    %995 = vmatpush2.bf16.msra.mxu0 0
    %996 = vmatprep.subr.bf16.mxu0 0
    %997 = vmatpush2.bf16.msra.mxu0 0
    %998 = vmatprep.subr.bf16.mxu0 0
    %999 = vmatpush2.bf16.msra.mxu0 0
    %1000 = vmatprep.subr.bf16.mxu0 0
    %1001 = vmatpush2.bf16.msra.mxu0 0
    %1002 = vmatprep.subr.bf16.mxu0 0
    %1003 = vmatpush2.bf16.msra.mxu0 0
    %1004 = vmatprep.subr.bf16.mxu0 0
    %1005 = vmatpush2.bf16.msra.mxu0 0
    %1006 = vmatprep.subr.bf16.mxu0 0
    %1007 = vmatpush2.bf16.msra.mxu0 0
    %1008 = vmatprep.mubr.bf16.mxu0 0
    %1009 = vmatmul.mubr.bf16.gmra.mxu0 %v974
    %v1010 = vpop.f32.mrf.mxu0
    %v1011 = vadd.f32 0.0, %v1010
    %v1012 = vpop.f32.mrf.mxu0
    %v1013 = vadd.f32 0.0, %v1012
    %v1014 = vpop.f32.mrf.mxu0
    %v1015 = vpop.f32.mrf.mxu0
    %1016 = vdwg.mxu0
    %v1017 = vadd.f32 %v391, %v1011
    %v1018 = vadd.f32 %v392, %v1013
    %v1019 = vxor.u32 %v1017, 2147483648
    %v1020 = vxor.u32 %v1018, 2147483648
    %v1021 = vmul.f32 %v1019, 1.442695
    %v1022 = vpow.pop %v1021
    %v1023 = vmul.f32 %v1020, 1.442695
    %v1024 = vpow.pop %v1023
    %v1025 = vadd.f32 %v1022, 1.0
    %v1026 = vadd.f32 %v1024, 1.0
    %v1027 = vrcp.pop %v1025
    %v1028 = vmul.f32 1.0, %v1027
    %v1029 = vrcp.pop %v1026
    %v1030 = vmul.f32 1.0, %v1029
    %v1031 = vtanh.pop %v1018
    %v1032 = vmul.f32 %v1028, %v965
    %1034 = vrot.lane.b32.xlu0 %v1031, 64
    %v1035 = vpop.permute.xlu0 %1034
    %v1037 = vmul.f32 %v1028, %v1035
    %1039 = vrot.lane.b32.xlu0 %v1037, 64
    %v1040 = vpop.permute.xlu0 %1039
    %v1042 = vadd.f32 %v1032, %v1040
    %v1043 = vtanh.pop %v1042
    %1045 = vrot.lane.b32.xlu0 %v1043, 64
    %v1046 = vpop.permute.xlu0 %1045
    %v1048 = vmul.f32 %v1030, %v1046
    %v1049 = vpack.c.bf16 %v586, %v509
    %v1050 = vpack.c.bf16 %v740, %v663
    %v1051 = vpack.c.bf16 %v894, %v817
    %v1052 = vpack.c.bf16 %v1048, %v971
    %v1053 = vpack.c.bf16 %v971, %v1048
    %v1054 = vpack.c.bf16 %v817, %v894
    %v1055 = vpack.c.bf16 %v663, %v740
    %v1056 = vpack.c.bf16 %v509, %v586
    %v1057 = vld [vmem:[#allocation9] sm:$0xff]
    %v1058 = vld [vmem:[#allocation9 + $0x8] sm:$0xff]
    %v1059 = vld [vmem:[#allocation9 + $0x10] sm:$0xff]
    %v1060 = vld [vmem:[#allocation9 + $0x18] sm:$0xff]
    %v1061 = vld [vmem:[#allocation9 + $0x20] sm:$0xff]
    %v1062 = vld [vmem:[#allocation9 + $0x28] sm:$0xff]
    %v1063 = vld [vmem:[#allocation9 + $0x30] sm:$0xff]
    %v1064 = vld [vmem:[#allocation9 + $0x38] sm:$0xff]
    %v1065 = vld [vmem:[#allocation10] sm:$0xff]
    %v1066 = vld [vmem:[#allocation10 + $0x8] sm:$0xff]
    %v1067 = vld [vmem:[#allocation10 + $0x10] sm:$0xff]
    %v1068 = vld [vmem:[#allocation10 + $0x18] sm:$0xff]
    %v1069 = vld [vmem:[#allocation10 + $0x20] sm:$0xff]
    %v1070 = vld [vmem:[#allocation10 + $0x28] sm:$0xff]
    %v1071 = vld [vmem:[#allocation10 + $0x30] sm:$0xff]
    %v1072 = vld [vmem:[#allocation10 + $0x38] sm:$0xff]
    %v1073 = vld [vmem:[#allocation12] sm:$0x3]
    %v1074 = vld [vmem:[%s8] sm:$0xff]
    %v1075 = vld [vmem:[%s8 + $0x8] sm:$0xff]
    %v1076 = vld [vmem:[%s8 + $0x10] sm:$0xff]
    %v1077 = vld [vmem:[%s8 + $0x18] sm:$0xff]
    %v1078 = vld [vmem:[%s8 + $0x20] sm:$0xff]
    %v1079 = vld [vmem:[%s8 + $0x28] sm:$0xff]
    %v1080 = vld [vmem:[%s8 + $0x30] sm:$0xff]
    %v1081 = vld [vmem:[%s8 + $0x38] sm:$0xff]
    %v1086 = vunpack.c.l.b16 %v1057
    %v1087 = vunpack.c.h.b16 %v1057
    %v1088 = vunpack.c.l.b16 %v1058
    %v1089 = vunpack.c.h.b16 %v1058
    %v1090 = vunpack.c.l.b16 %v1059
    %v1091 = vunpack.c.h.b16 %v1059
    %v1092 = vunpack.c.l.b16 %v1060
    %v1093 = vunpack.c.h.b16 %v1060
    %v1094 = vpack.c.b16 %v1088, %v1086
    %v1095 = vpack.c.b16 %v1089, %v1087
    %v1096 = vpack.c.b16 %v1092, %v1090
    %v1097 = vpack.c.b16 %v1093, %v1091
    %vm1102 = vcmask 261120
    %v1104 = vsel %vm1102, %v1049, 0
    %v1107 = vsel %vm1102, %v1050, 0
    %v1110 = vsel %vm1102, %v1051, 0
    %v1113 = vsel %vm1102, %v1052, 0
    %1115 = vmatprep.subr.bf16.mxu0 0
    %1116 = vmatpush1.bf16.msra.mxu0 0
    %1117 = vmatprep.subr.bf16.mxu0 0
    %1118 = vmatpush1.bf16.msra.mxu0 0
    %1119 = vmatprep.subr.bf16.mxu0 0
    %1120 = vmatpush1.bf16.msra.mxu0 0
    %1121 = vmatprep.subr.bf16.mxu0 0
    %1122 = vmatpush1.bf16.msra.mxu0 0
    %1123 = vmatprep.subr.bf16.mxu0 0
    %1124 = vmatpush1.bf16.msra.mxu0 0
    %1125 = vmatprep.subr.bf16.mxu0 0
    %1126 = vmatpush1.bf16.msra.mxu0 0
    %1127 = vmatprep.subr.bf16.mxu0 %v1097
    %1128 = vmatpush1.bf16.msra.mxu0 %v1096
    %1129 = vmatprep.subr.bf16.mxu0 %v1095
    %1130 = vmatpush1.bf16.msra.mxu0 %v1094
    %1131 = vmatprep.subr.bf16.mxu0 0
    %1132 = vmatpush2.bf16.msra.mxu0 0
    %1133 = vmatprep.subr.bf16.mxu0 0
    %1134 = vmatpush2.bf16.msra.mxu0 0
    %1135 = vmatprep.subr.bf16.mxu0 0
    %1136 = vmatpush2.bf16.msra.mxu0 0
    %1137 = vmatprep.subr.bf16.mxu0 0
    %1138 = vmatpush2.bf16.msra.mxu0 0
    %1139 = vmatprep.subr.bf16.mxu0 0
    %1140 = vmatpush2.bf16.msra.mxu0 0
    %1141 = vmatprep.subr.bf16.mxu0 0
    %1142 = vmatpush2.bf16.msra.mxu0 0
    %1143 = vmatprep.subr.bf16.mxu0 0
    %1144 = vmatpush2.bf16.msra.mxu0 0
    %1145 = vmatprep.subr.bf16.mxu0 0
    %1146 = vmatpush2.bf16.msra.mxu0 0
    %1147 = vmatprep.mubr.bf16.mxu0 0
    %1148 = vmatmul.mubr.bf16.gmra.mxu0 %v1104
    %v1149 = vpop.f32.mrf.mxu0
    %v1150 = vadd.f32 0.0, %v1149
    %v1151 = vpop.f32.mrf.mxu0
    %v1152 = vadd.f32 0.0, %v1151
    %v1153 = vpop.f32.mrf.mxu0
    %v1154 = vadd.f32 0.0, %v1153
    %v1155 = vpop.f32.mrf.mxu0
    %v1156 = vadd.f32 0.0, %v1155
    %1157 = vmatprep.mubr.bf16.mxu0 0
    %1158 = vmatmul.mubr.bf16.gmra.mxu0 %v1107
    %v1159 = vpop.f32.mrf.mxu0
    %v1160 = vadd.f32 0.0, %v1159
    %v1161 = vpop.f32.mrf.mxu0
    %v1162 = vadd.f32 0.0, %v1161
    %v1163 = vpop.f32.mrf.mxu0
    %v1164 = vadd.f32 0.0, %v1163
    %v1165 = vpop.f32.mrf.mxu0
    %v1166 = vadd.f32 0.0, %v1165
    %1167 = vmatprep.mubr.bf16.mxu0 0
    %1168 = vmatmul.mubr.bf16.gmra.mxu0 %v1110
    %v1169 = vpop.f32.mrf.mxu0
    %v1170 = vadd.f32 0.0, %v1169
    %v1171 = vpop.f32.mrf.mxu0
    %v1172 = vadd.f32 0.0, %v1171
    %v1173 = vpop.f32.mrf.mxu0
    %v1174 = vadd.f32 0.0, %v1173
    %v1175 = vpop.f32.mrf.mxu0
    %v1176 = vadd.f32 0.0, %v1175
    %1177 = vmatprep.mubr.bf16.mxu0 0
    %1178 = vmatmul.mubr.bf16.gmra.mxu0 %v1113
    %v1179 = vpop.f32.mrf.mxu0
    %v1180 = vadd.f32 0.0, %v1179
    %v1181 = vpop.f32.mrf.mxu0
    %v1182 = vadd.f32 0.0, %v1181
    %v1183 = vpop.f32.mrf.mxu0
    %v1184 = vadd.f32 0.0, %v1183
    %v1185 = vpop.f32.mrf.mxu0
    %v1186 = vadd.f32 0.0, %v1185
    %1187 = vdwg.mxu0
    %v1189 = vlaneseq
    %v1190 = vshrl.u32 %v1189, 7
    %v1191 = vsub.s32 0, %v1190
    %v1192 = vrot.slane %v1073, %v1191
    %v1193 = vlaneseq
    %v1194 = vshrl.u32 %v1193, 7
    %v1195 = vsub.s32 1, %v1194
    %v1196 = vrot.slane %v1073, %v1195
    %v1199 = vadd.f32 %v1192, %v1150
    %v1200 = vadd.f32 %v1196, %v1152
    %v1201 = vadd.f32 %v1192, %v1154
    %v1202 = vadd.f32 %v1196, %v1156
    %v1203 = vadd.f32 %v1192, %v1160
    %v1204 = vadd.f32 %v1196, %v1162
    %v1205 = vadd.f32 %v1192, %v1164
    %v1206 = vadd.f32 %v1196, %v1166
    %v1207 = vadd.f32 %v1192, %v1170
    %v1208 = vadd.f32 %v1196, %v1172
    %v1209 = vadd.f32 %v1192, %v1174
    %v1210 = vadd.f32 %v1196, %v1176
    %v1211 = vadd.f32 %v1192, %v1180
    %v1212 = vadd.f32 %v1196, %v1182
    %v1213 = vadd.f32 %v1192, %v1184
    %v1214 = vadd.f32 %v1196, %v1186
    %v1219 = vunpack.c.l.b16 %v1065
    %v1220 = vunpack.c.h.b16 %v1065
    %v1221 = vunpack.c.l.b16 %v1066
    %v1222 = vunpack.c.h.b16 %v1066
    %v1223 = vunpack.c.l.b16 %v1067
    %v1224 = vunpack.c.h.b16 %v1067
    %v1225 = vunpack.c.l.b16 %v1068
    %v1226 = vunpack.c.h.b16 %v1068
    %v1227 = vpack.c.b16 %v1221, %v1219
    %v1228 = vpack.c.b16 %v1222, %v1220
    %v1229 = vpack.c.b16 %v1225, %v1223
    %v1230 = vpack.c.b16 %v1226, %v1224
    %v1236 = vsel %vm1102, %v1053, 0
    %v1239 = vsel %vm1102, %v1054, 0
    %v1242 = vsel %vm1102, %v1055, 0
    %v1245 = vsel %vm1102, %v1056, 0
    %1247 = vmatprep.subr.bf16.mxu0 0
    %1248 = vmatpush1.bf16.msra.mxu0 0
    %1249 = vmatprep.subr.bf16.mxu0 0
    %1250 = vmatpush1.bf16.msra.mxu0 0
    %1251 = vmatprep.subr.bf16.mxu0 0
    %1252 = vmatpush1.bf16.msra.mxu0 0
    %1253 = vmatprep.subr.bf16.mxu0 0
    %1254 = vmatpush1.bf16.msra.mxu0 0
    %1255 = vmatprep.subr.bf16.mxu0 0
    %1256 = vmatpush1.bf16.msra.mxu0 0
    %1257 = vmatprep.subr.bf16.mxu0 0
    %1258 = vmatpush1.bf16.msra.mxu0 0
    %1259 = vmatprep.subr.bf16.mxu0 %v1230
    %1260 = vmatpush1.bf16.msra.mxu0 %v1229
    %1261 = vmatprep.subr.bf16.mxu0 %v1228
    %1262 = vmatpush1.bf16.msra.mxu0 %v1227
    %1263 = vmatprep.subr.bf16.mxu0 0
    %1264 = vmatpush2.bf16.msra.mxu0 0
    %1265 = vmatprep.subr.bf16.mxu0 0
    %1266 = vmatpush2.bf16.msra.mxu0 0
    %1267 = vmatprep.subr.bf16.mxu0 0
    %1268 = vmatpush2.bf16.msra.mxu0 0
    %1269 = vmatprep.subr.bf16.mxu0 0
    %1270 = vmatpush2.bf16.msra.mxu0 0
    %1271 = vmatprep.subr.bf16.mxu0 0
    %1272 = vmatpush2.bf16.msra.mxu0 0
    %1273 = vmatprep.subr.bf16.mxu0 0
    %1274 = vmatpush2.bf16.msra.mxu0 0
    %1275 = vmatprep.subr.bf16.mxu0 0
    %1276 = vmatpush2.bf16.msra.mxu0 0
    %1277 = vmatprep.subr.bf16.mxu0 0
    %1278 = vmatpush2.bf16.msra.mxu0 0
    %1279 = vmatprep.mubr.bf16.mxu0 0
    %1280 = vmatmul.mubr.bf16.gmra.mxu0 %v1236
    %v1281 = vpop.f32.mrf.mxu0
    %v1282 = vadd.f32 0.0, %v1281
    %v1283 = vpop.f32.mrf.mxu0
    %v1284 = vadd.f32 0.0, %v1283
    %v1285 = vpop.f32.mrf.mxu0
    %v1286 = vadd.f32 0.0, %v1285
    %v1287 = vpop.f32.mrf.mxu0
    %v1288 = vadd.f32 0.0, %v1287
    %1289 = vmatprep.mubr.bf16.mxu0 0
    %1290 = vmatmul.mubr.bf16.gmra.mxu0 %v1239
    %v1291 = vpop.f32.mrf.mxu0
    %v1292 = vadd.f32 0.0, %v1291
    %v1293 = vpop.f32.mrf.mxu0
    %v1294 = vadd.f32 0.0, %v1293
    %v1295 = vpop.f32.mrf.mxu0
    %v1296 = vadd.f32 0.0, %v1295
    %v1297 = vpop.f32.mrf.mxu0
    %v1298 = vadd.f32 0.0, %v1297
    %1299 = vmatprep.mubr.bf16.mxu0 0
    %1300 = vmatmul.mubr.bf16.gmra.mxu0 %v1242
    %v1301 = vpop.f32.mrf.mxu0
    %v1302 = vadd.f32 0.0, %v1301
    %v1303 = vpop.f32.mrf.mxu0
    %v1304 = vadd.f32 0.0, %v1303
    %v1305 = vpop.f32.mrf.mxu0
    %v1306 = vadd.f32 0.0, %v1305
    %v1307 = vpop.f32.mrf.mxu0
    %v1308 = vadd.f32 0.0, %v1307
    %1309 = vmatprep.mubr.bf16.mxu0 0
    %1310 = vmatmul.mubr.bf16.gmra.mxu0 %v1245
    %v1311 = vpop.f32.mrf.mxu0
    %v1312 = vadd.f32 0.0, %v1311
    %v1313 = vpop.f32.mrf.mxu0
    %v1314 = vadd.f32 0.0, %v1313
    %v1315 = vpop.f32.mrf.mxu0
    %v1316 = vadd.f32 0.0, %v1315
    %v1317 = vpop.f32.mrf.mxu0
    %v1318 = vadd.f32 0.0, %v1317
    %1319 = vdwg.mxu0
    %v1320 = vadd.f32 %v1199, %v1282
    %v1321 = vadd.f32 %v1200, %v1284
    %v1322 = vadd.f32 %v1201, %v1286
    %v1323 = vadd.f32 %v1202, %v1288
    %v1324 = vadd.f32 %v1203, %v1292
    %v1325 = vadd.f32 %v1204, %v1294
    %v1326 = vadd.f32 %v1205, %v1296
    %v1327 = vadd.f32 %v1206, %v1298
    %v1328 = vadd.f32 %v1207, %v1302
    %v1329 = vadd.f32 %v1208, %v1304
    %v1330 = vadd.f32 %v1209, %v1306
    %v1331 = vadd.f32 %v1210, %v1308
    %v1332 = vadd.f32 %v1211, %v1312
    %v1333 = vadd.f32 %v1212, %v1314
    %v1334 = vadd.f32 %v1213, %v1316
    %v1335 = vadd.f32 %v1214, %v1318
    %1340 = vrot.lane.b32.xlu0 %v1053, 96
    %v1341 = vpop.permute.xlu0 %1340
    %1342 = vrot.lane.b32.xlu0 %v1054, 96
    %v1343 = vpop.permute.xlu0 %1342
    %1344 = vrot.lane.b32.xlu0 %v1055, 96
    %v1345 = vpop.permute.xlu0 %1344
    %1346 = vrot.lane.b32.xlu0 %v1056, 96
    %v1347 = vpop.permute.xlu0 %1346
    %v1352 = vunpack.c.l.b16 %v1061
    %v1353 = vunpack.c.h.b16 %v1061
    %v1354 = vunpack.c.l.b16 %v1062
    %v1355 = vunpack.c.h.b16 %v1062
    %v1356 = vunpack.c.l.b16 %v1063
    %v1357 = vunpack.c.h.b16 %v1063
    %v1358 = vunpack.c.l.b16 %v1064
    %v1359 = vunpack.c.h.b16 %v1064
    %v1360 = vpack.c.b16 %v1354, %v1352
    %v1361 = vpack.c.b16 %v1355, %v1353
    %v1362 = vpack.c.b16 %v1358, %v1356
    %v1363 = vpack.c.b16 %v1359, %v1357
    %v1369 = vsel %vm1102, %v1341, 0
    %v1372 = vsel %vm1102, %v1343, 0
    %v1375 = vsel %vm1102, %v1345, 0
    %v1378 = vsel %vm1102, %v1347, 0
    %1380 = vmatprep.subr.bf16.mxu0 0
    %1381 = vmatpush1.bf16.msra.mxu0 0
    %1382 = vmatprep.subr.bf16.mxu0 0
    %1383 = vmatpush1.bf16.msra.mxu0 0
    %1384 = vmatprep.subr.bf16.mxu0 0
    %1385 = vmatpush1.bf16.msra.mxu0 0
    %1386 = vmatprep.subr.bf16.mxu0 0
    %1387 = vmatpush1.bf16.msra.mxu0 0
    %1388 = vmatprep.subr.bf16.mxu0 0
    %1389 = vmatpush1.bf16.msra.mxu0 0
    %1390 = vmatprep.subr.bf16.mxu0 0
    %1391 = vmatpush1.bf16.msra.mxu0 0
    %1392 = vmatprep.subr.bf16.mxu0 %v1363
    %1393 = vmatpush1.bf16.msra.mxu0 %v1362
    %1394 = vmatprep.subr.bf16.mxu0 %v1361
    %1395 = vmatpush1.bf16.msra.mxu0 %v1360
    %1396 = vmatprep.subr.bf16.mxu0 0
    %1397 = vmatpush2.bf16.msra.mxu0 0
    %1398 = vmatprep.subr.bf16.mxu0 0
    %1399 = vmatpush2.bf16.msra.mxu0 0
    %1400 = vmatprep.subr.bf16.mxu0 0
    %1401 = vmatpush2.bf16.msra.mxu0 0
    %1402 = vmatprep.subr.bf16.mxu0 0
    %1403 = vmatpush2.bf16.msra.mxu0 0
    %1404 = vmatprep.subr.bf16.mxu0 0
    %1405 = vmatpush2.bf16.msra.mxu0 0
    %1406 = vmatprep.subr.bf16.mxu0 0
    %1407 = vmatpush2.bf16.msra.mxu0 0
    %1408 = vmatprep.subr.bf16.mxu0 0
    %1409 = vmatpush2.bf16.msra.mxu0 0
    %1410 = vmatprep.subr.bf16.mxu0 0
    %1411 = vmatpush2.bf16.msra.mxu0 0
    %1412 = vmatprep.mubr.bf16.mxu0 0
    %1413 = vmatmul.mubr.bf16.gmra.mxu0 %v1369
    %v1414 = vpop.f32.mrf.mxu0
    %v1415 = vadd.f32 0.0, %v1414
    %v1416 = vpop.f32.mrf.mxu0
    %v1417 = vadd.f32 0.0, %v1416
    %v1418 = vpop.f32.mrf.mxu0
    %v1419 = vadd.f32 0.0, %v1418
    %v1420 = vpop.f32.mrf.mxu0
    %v1421 = vadd.f32 0.0, %v1420
    %1422 = vmatprep.mubr.bf16.mxu0 0
    %1423 = vmatmul.mubr.bf16.gmra.mxu0 %v1372
    %v1424 = vpop.f32.mrf.mxu0
    %v1425 = vadd.f32 0.0, %v1424
    %v1426 = vpop.f32.mrf.mxu0
    %v1427 = vadd.f32 0.0, %v1426
    %v1428 = vpop.f32.mrf.mxu0
    %v1429 = vadd.f32 0.0, %v1428
    %v1430 = vpop.f32.mrf.mxu0
    %v1431 = vadd.f32 0.0, %v1430
    %1432 = vmatprep.mubr.bf16.mxu0 0
    %1433 = vmatmul.mubr.bf16.gmra.mxu0 %v1375
    %v1434 = vpop.f32.mrf.mxu0
    %v1435 = vadd.f32 0.0, %v1434
    %v1436 = vpop.f32.mrf.mxu0
    %v1437 = vadd.f32 0.0, %v1436
    %v1438 = vpop.f32.mrf.mxu0
    %v1439 = vadd.f32 0.0, %v1438
    %v1440 = vpop.f32.mrf.mxu0
    %v1441 = vadd.f32 0.0, %v1440
    %1442 = vmatprep.mubr.bf16.mxu0 0
    %1443 = vmatmul.mubr.bf16.gmra.mxu0 %v1378
    %v1444 = vpop.f32.mrf.mxu0
    %v1445 = vadd.f32 0.0, %v1444
    %v1446 = vpop.f32.mrf.mxu0
    %v1447 = vadd.f32 0.0, %v1446
    %v1448 = vpop.f32.mrf.mxu0
    %v1449 = vadd.f32 0.0, %v1448
    %v1450 = vpop.f32.mrf.mxu0
    %v1451 = vadd.f32 0.0, %v1450
    %1452 = vdwg.mxu0
    %v1453 = vadd.f32 %v1320, %v1415
    %v1454 = vadd.f32 %v1321, %v1417
    %v1455 = vadd.f32 %v1322, %v1419
    %v1456 = vadd.f32 %v1323, %v1421
    %v1457 = vadd.f32 %v1324, %v1425
    %v1458 = vadd.f32 %v1325, %v1427
    %v1459 = vadd.f32 %v1326, %v1429
    %v1460 = vadd.f32 %v1327, %v1431
    %v1461 = vadd.f32 %v1328, %v1435
    %v1462 = vadd.f32 %v1329, %v1437
    %v1463 = vadd.f32 %v1330, %v1439
    %v1464 = vadd.f32 %v1331, %v1441
    %v1465 = vadd.f32 %v1332, %v1445
    %v1466 = vadd.f32 %v1333, %v1447
    %v1467 = vadd.f32 %v1334, %v1449
    %v1468 = vadd.f32 %v1335, %v1451
    %1473 = vrot.lane.b32.xlu0 %v1049, 96
    %v1474 = vpop.permute.xlu0 %1473
    %1475 = vrot.lane.b32.xlu0 %v1050, 96
    %v1476 = vpop.permute.xlu0 %1475
    %1477 = vrot.lane.b32.xlu0 %v1051, 96
    %v1478 = vpop.permute.xlu0 %1477
    %1479 = vrot.lane.b32.xlu0 %v1052, 96
    %v1480 = vpop.permute.xlu0 %1479
    %v1485 = vunpack.c.l.b16 %v1069
    %v1486 = vunpack.c.h.b16 %v1069
    %v1487 = vunpack.c.l.b16 %v1070
    %v1488 = vunpack.c.h.b16 %v1070
    %v1489 = vunpack.c.l.b16 %v1071
    %v1490 = vunpack.c.h.b16 %v1071
    %v1491 = vunpack.c.l.b16 %v1072
    %v1492 = vunpack.c.h.b16 %v1072
    %v1493 = vpack.c.b16 %v1487, %v1485
    %v1494 = vpack.c.b16 %v1488, %v1486
    %v1495 = vpack.c.b16 %v1491, %v1489
    %v1496 = vpack.c.b16 %v1492, %v1490
    %v1502 = vsel %vm1102, %v1474, 0
    %v1505 = vsel %vm1102, %v1476, 0
    %v1508 = vsel %vm1102, %v1478, 0
    %v1511 = vsel %vm1102, %v1480, 0
    %1513 = vmatprep.subr.bf16.mxu0 0
    %1514 = vmatpush1.bf16.msra.mxu0 0
    %1515 = vmatprep.subr.bf16.mxu0 0
    %1516 = vmatpush1.bf16.msra.mxu0 0
    %1517 = vmatprep.subr.bf16.mxu0 0
    %1518 = vmatpush1.bf16.msra.mxu0 0
    %1519 = vmatprep.subr.bf16.mxu0 0
    %1520 = vmatpush1.bf16.msra.mxu0 0
    %1521 = vmatprep.subr.bf16.mxu0 0
    %1522 = vmatpush1.bf16.msra.mxu0 0
    %1523 = vmatprep.subr.bf16.mxu0 0
    %1524 = vmatpush1.bf16.msra.mxu0 0
    %1525 = vmatprep.subr.bf16.mxu0 %v1496
    %1526 = vmatpush1.bf16.msra.mxu0 %v1495
    %1527 = vmatprep.subr.bf16.mxu0 %v1494
    %1528 = vmatpush1.bf16.msra.mxu0 %v1493
    %1529 = vmatprep.subr.bf16.mxu0 0
    %1530 = vmatpush2.bf16.msra.mxu0 0
    %1531 = vmatprep.subr.bf16.mxu0 0
    %1532 = vmatpush2.bf16.msra.mxu0 0
    %1533 = vmatprep.subr.bf16.mxu0 0
    %1534 = vmatpush2.bf16.msra.mxu0 0
    %1535 = vmatprep.subr.bf16.mxu0 0
    %1536 = vmatpush2.bf16.msra.mxu0 0
    %1537 = vmatprep.subr.bf16.mxu0 0
    %1538 = vmatpush2.bf16.msra.mxu0 0
    %1539 = vmatprep.subr.bf16.mxu0 0
    %1540 = vmatpush2.bf16.msra.mxu0 0
    %1541 = vmatprep.subr.bf16.mxu0 0
    %1542 = vmatpush2.bf16.msra.mxu0 0
    %1543 = vmatprep.subr.bf16.mxu0 0
    %1544 = vmatpush2.bf16.msra.mxu0 0
    %1545 = vmatprep.mubr.bf16.mxu0 0
    %1546 = vmatmul.mubr.bf16.gmra.mxu0 %v1502
    %v1547 = vpop.f32.mrf.mxu0
    %v1548 = vadd.f32 0.0, %v1547
    %v1549 = vpop.f32.mrf.mxu0
    %v1550 = vadd.f32 0.0, %v1549
    %v1551 = vpop.f32.mrf.mxu0
    %v1552 = vadd.f32 0.0, %v1551
    %v1553 = vpop.f32.mrf.mxu0
    %v1554 = vadd.f32 0.0, %v1553
    %1555 = vmatprep.mubr.bf16.mxu0 0
    %1556 = vmatmul.mubr.bf16.gmra.mxu0 %v1505
    %v1557 = vpop.f32.mrf.mxu0
    %v1558 = vadd.f32 0.0, %v1557
    %v1559 = vpop.f32.mrf.mxu0
    %v1560 = vadd.f32 0.0, %v1559
    %v1561 = vpop.f32.mrf.mxu0
    %v1562 = vadd.f32 0.0, %v1561
    %v1563 = vpop.f32.mrf.mxu0
    %v1564 = vadd.f32 0.0, %v1563
    %1565 = vmatprep.mubr.bf16.mxu0 0
    %1566 = vmatmul.mubr.bf16.gmra.mxu0 %v1508
    %v1567 = vpop.f32.mrf.mxu0
    %v1568 = vadd.f32 0.0, %v1567
    %v1569 = vpop.f32.mrf.mxu0
    %v1570 = vadd.f32 0.0, %v1569
    %v1571 = vpop.f32.mrf.mxu0
    %v1572 = vadd.f32 0.0, %v1571
    %v1573 = vpop.f32.mrf.mxu0
    %v1574 = vadd.f32 0.0, %v1573
    %1575 = vmatprep.mubr.bf16.mxu0 0
    %1576 = vmatmul.mubr.bf16.gmra.mxu0 %v1511
    %v1577 = vpop.f32.mrf.mxu0
    %v1578 = vadd.f32 0.0, %v1577
    %v1579 = vpop.f32.mrf.mxu0
    %v1580 = vadd.f32 0.0, %v1579
    %v1581 = vpop.f32.mrf.mxu0
    %v1582 = vadd.f32 0.0, %v1581
    %v1583 = vpop.f32.mrf.mxu0
    %v1584 = vadd.f32 0.0, %v1583
    %1585 = vdwg.mxu0
    %v1586 = vadd.f32 %v1453, %v1548
    %v1587 = vadd.f32 %v1454, %v1550
    %v1588 = vadd.f32 %v1455, %v1552
    %v1589 = vadd.f32 %v1456, %v1554
    %v1590 = vadd.f32 %v1457, %v1558
    %v1591 = vadd.f32 %v1458, %v1560
    %v1592 = vadd.f32 %v1459, %v1562
    %v1593 = vadd.f32 %v1460, %v1564
    %v1594 = vadd.f32 %v1461, %v1568
    %v1595 = vadd.f32 %v1462, %v1570
    %v1596 = vadd.f32 %v1463, %v1572
    %v1597 = vadd.f32 %v1464, %v1574
    %v1598 = vadd.f32 %v1465, %v1578
    %v1599 = vadd.f32 %v1466, %v1580
    %v1600 = vadd.f32 %v1467, %v1582
    %v1601 = vadd.f32 %v1468, %v1584
    %v1610 = vunpack.c.l.b16 %v1074
    %v1611 = vunpack.c.h.b16 %v1074
    %v1612 = vunpack.c.l.b16 %v1075
    %v1613 = vunpack.c.h.b16 %v1075
    %v1614 = vunpack.c.l.b16 %v1076
    %v1615 = vunpack.c.h.b16 %v1076
    %v1616 = vunpack.c.l.b16 %v1077
    %v1617 = vunpack.c.h.b16 %v1077
    %v1618 = vunpack.c.l.b16 %v1078
    %v1619 = vunpack.c.h.b16 %v1078
    %v1620 = vunpack.c.l.b16 %v1079
    %v1621 = vunpack.c.h.b16 %v1079
    %v1622 = vunpack.c.l.b16 %v1080
    %v1623 = vunpack.c.h.b16 %v1080
    %v1624 = vunpack.c.l.b16 %v1081
    %v1625 = vunpack.c.h.b16 %v1081
    %v1626 = vpack.c.b16 %v1612, %v1610
    %v1627 = vpack.c.b16 %v1613, %v1611
    %v1628 = vpack.c.b16 %v1616, %v1614
    %v1629 = vpack.c.b16 %v1617, %v1615
    %v1630 = vpack.c.b16 %v1620, %v1618
    %v1631 = vpack.c.b16 %v1621, %v1619
    %v1632 = vpack.c.b16 %v1624, %v1622
    %v1633 = vpack.c.b16 %v1625, %v1623
    %1642 = vmatprep.subr.bf16.mxu0 0
    %1643 = vmatpush1.bf16.msra.mxu0 0
    %1644 = vmatprep.subr.bf16.mxu0 0
    %1645 = vmatpush1.bf16.msra.mxu0 0
    %1646 = vmatprep.subr.bf16.mxu0 0
    %1647 = vmatpush1.bf16.msra.mxu0 0
    %1648 = vmatprep.subr.bf16.mxu0 0
    %1649 = vmatpush1.bf16.msra.mxu0 0
    %1650 = vmatprep.subr.bf16.mxu0 %v1633
    %1651 = vmatpush1.bf16.msra.mxu0 %v1632
    %1652 = vmatprep.subr.bf16.mxu0 %v1631
    %1653 = vmatpush1.bf16.msra.mxu0 %v1630
    %1654 = vmatprep.subr.bf16.mxu0 %v1629
    %1655 = vmatpush1.bf16.msra.mxu0 %v1628
    %1656 = vmatprep.subr.bf16.mxu0 %v1627
    %1657 = vmatpush1.bf16.msra.mxu0 %v1626
    %1658 = vmatprep.subr.bf16.mxu0 0
    %1659 = vmatpush2.bf16.msra.mxu0 0
    %1660 = vmatprep.subr.bf16.mxu0 0
    %1661 = vmatpush2.bf16.msra.mxu0 0
    %1662 = vmatprep.subr.bf16.mxu0 0
    %1663 = vmatpush2.bf16.msra.mxu0 0
    %1664 = vmatprep.subr.bf16.mxu0 0
    %1665 = vmatpush2.bf16.msra.mxu0 0
    %1666 = vmatprep.subr.bf16.mxu0 0
    %1667 = vmatpush2.bf16.msra.mxu0 0
    %1668 = vmatprep.subr.bf16.mxu0 0
    %1669 = vmatpush2.bf16.msra.mxu0 0
    %1670 = vmatprep.subr.bf16.mxu0 0
    %1671 = vmatpush2.bf16.msra.mxu0 0
    %1672 = vmatprep.subr.bf16.mxu0 0
    %1673 = vmatpush2.bf16.msra.mxu0 0
    %1674 = vmatprep.mubr.bf16.mxu0 0
    %1675 = vmatmul.mubr.bf16.gmra.mxu0 %v435
    %v1676 = vpop.f32.mrf.mxu0
    %v1677 = vadd.f32 0.0, %v1676
    %v1678 = vpop.f32.mrf.mxu0
    %v1679 = vadd.f32 0.0, %v1678
    %v1680 = vpop.f32.mrf.mxu0
    %v1681 = vpop.f32.mrf.mxu0
    %1682 = vdwg.mxu0
    %v1683 = vadd.f32 %v1586, %v1677
    %v1684 = vadd.f32 %v1587, %v1679
    %v1685 = vxor.u32 %v1683, 2147483648
    %v1686 = vxor.u32 %v1684, 2147483648
    %v1687 = vmul.f32 %v1685, 1.442695
    %v1688 = vpow.pop %v1687
    %v1689 = vmul.f32 %v1686, 1.442695
    %v1690 = vpow.pop %v1689
    %v1691 = vadd.f32 %v1688, 1.0
    %v1692 = vadd.f32 %v1690, 1.0
    %v1693 = vrcp.pop %v1691
    %v1694 = vmul.f32 1.0, %v1693
    %v1695 = vrcp.pop %v1692
    %v1696 = vmul.f32 1.0, %v1695
    %v1697 = vtanh.pop %v1684
    %v1698 = vmul.f32 %v1694, 0.0
    %1700 = vrot.lane.b32.xlu0 %v1697, 64
    %v1701 = vpop.permute.xlu0 %1700
    %v1703 = vmul.f32 %v1694, %v1701
    %1705 = vrot.lane.b32.xlu0 %v1703, 64
    %v1706 = vpop.permute.xlu0 %1705
    %v1708 = vadd.f32 %v1698, %v1706
    %v1709 = vtanh.pop %v1708
    %1711 = vrot.lane.b32.xlu0 %v1709, 64
    %v1712 = vpop.permute.xlu0 %1711
    %v1714 = vmul.f32 %v1696, %v1712
    %v1715 = vpack.c.bf16 %v1714, %v1714
    %v1717 = vsel %vm433, %v1715, 0
    %1719 = vmatprep.subr.bf16.mxu0 0
    %1720 = vmatpush1.bf16.msra.mxu0 0
    %1721 = vmatprep.subr.bf16.mxu0 0
    %1722 = vmatpush1.bf16.msra.mxu0 0
    %1723 = vmatprep.subr.bf16.mxu0 0
    %1724 = vmatpush1.bf16.msra.mxu0 0
    %1725 = vmatprep.subr.bf16.mxu0 0
    %1726 = vmatpush1.bf16.msra.mxu0 0
    %1727 = vmatprep.subr.bf16.mxu0 %v1633
    %1728 = vmatpush1.bf16.msra.mxu0 %v1632
    %1729 = vmatprep.subr.bf16.mxu0 %v1631
    %1730 = vmatpush1.bf16.msra.mxu0 %v1630
    %1731 = vmatprep.subr.bf16.mxu0 %v1629
    %1732 = vmatpush1.bf16.msra.mxu0 %v1628
    %1733 = vmatprep.subr.bf16.mxu0 %v1627
    %1734 = vmatpush1.bf16.msra.mxu0 %v1626
    %1735 = vmatprep.subr.bf16.mxu0 0
    %1736 = vmatpush2.bf16.msra.mxu0 0
    %1737 = vmatprep.subr.bf16.mxu0 0
    %1738 = vmatpush2.bf16.msra.mxu0 0
    %1739 = vmatprep.subr.bf16.mxu0 0
    %1740 = vmatpush2.bf16.msra.mxu0 0
    %1741 = vmatprep.subr.bf16.mxu0 0
    %1742 = vmatpush2.bf16.msra.mxu0 0
    %1743 = vmatprep.subr.bf16.mxu0 0
    %1744 = vmatpush2.bf16.msra.mxu0 0
    %1745 = vmatprep.subr.bf16.mxu0 0
    %1746 = vmatpush2.bf16.msra.mxu0 0
    %1747 = vmatprep.subr.bf16.mxu0 0
    %1748 = vmatpush2.bf16.msra.mxu0 0
    %1749 = vmatprep.subr.bf16.mxu0 0
    %1750 = vmatpush2.bf16.msra.mxu0 0
    %1751 = vmatprep.mubr.bf16.mxu0 0
    %1752 = vmatmul.mubr.bf16.gmra.mxu0 %v1717
    %v1753 = vpop.f32.mrf.mxu0
    %v1754 = vadd.f32 0.0, %v1753
    %v1755 = vpop.f32.mrf.mxu0
    %v1756 = vadd.f32 0.0, %v1755
    %v1757 = vpop.f32.mrf.mxu0
    %v1758 = vpop.f32.mrf.mxu0
    %1759 = vdwg.mxu0
    %v1760 = vadd.f32 %v1588, %v1754
    %v1761 = vadd.f32 %v1589, %v1756
    %v1762 = vxor.u32 %v1760, 2147483648
    %v1763 = vxor.u32 %v1761, 2147483648
    %v1764 = vmul.f32 %v1762, 1.442695
    %v1765 = vpow.pop %v1764
    %v1766 = vmul.f32 %v1763, 1.442695
    %v1767 = vpow.pop %v1766
    %v1768 = vadd.f32 %v1765, 1.0
    %v1769 = vadd.f32 %v1767, 1.0
    %v1770 = vrcp.pop %v1768
    %v1771 = vmul.f32 1.0, %v1770
    %v1772 = vrcp.pop %v1769
    %v1773 = vmul.f32 1.0, %v1772
    %v1774 = vtanh.pop %v1761
    %v1775 = vmul.f32 %v1771, %v1708
    %1777 = vrot.lane.b32.xlu0 %v1774, 64
    %v1778 = vpop.permute.xlu0 %1777
    %v1780 = vmul.f32 %v1771, %v1778
    %1782 = vrot.lane.b32.xlu0 %v1780, 64
    %v1783 = vpop.permute.xlu0 %1782
    %v1785 = vadd.f32 %v1775, %v1783
    %v1786 = vtanh.pop %v1785
    %1788 = vrot.lane.b32.xlu0 %v1786, 64
    %v1789 = vpop.permute.xlu0 %1788
    %v1791 = vmul.f32 %v1773, %v1789
    %v1792 = vpack.c.bf16 %v1791, %v1791
    %v1794 = vsel %vm433, %v1792, 0
    %1796 = vmatprep.subr.bf16.mxu0 0
    %1797 = vmatpush1.bf16.msra.mxu0 0
    %1798 = vmatprep.subr.bf16.mxu0 0
    %1799 = vmatpush1.bf16.msra.mxu0 0
    %1800 = vmatprep.subr.bf16.mxu0 0
    %1801 = vmatpush1.bf16.msra.mxu0 0
    %1802 = vmatprep.subr.bf16.mxu0 0
    %1803 = vmatpush1.bf16.msra.mxu0 0
    %1804 = vmatprep.subr.bf16.mxu0 %v1633
    %1805 = vmatpush1.bf16.msra.mxu0 %v1632
    %1806 = vmatprep.subr.bf16.mxu0 %v1631
    %1807 = vmatpush1.bf16.msra.mxu0 %v1630
    %1808 = vmatprep.subr.bf16.mxu0 %v1629
    %1809 = vmatpush1.bf16.msra.mxu0 %v1628
    %1810 = vmatprep.subr.bf16.mxu0 %v1627
    %1811 = vmatpush1.bf16.msra.mxu0 %v1626
    %1812 = vmatprep.subr.bf16.mxu0 0
    %1813 = vmatpush2.bf16.msra.mxu0 0
    %1814 = vmatprep.subr.bf16.mxu0 0
    %1815 = vmatpush2.bf16.msra.mxu0 0
    %1816 = vmatprep.subr.bf16.mxu0 0
    %1817 = vmatpush2.bf16.msra.mxu0 0
    %1818 = vmatprep.subr.bf16.mxu0 0
    %1819 = vmatpush2.bf16.msra.mxu0 0
    %1820 = vmatprep.subr.bf16.mxu0 0
    %1821 = vmatpush2.bf16.msra.mxu0 0
    %1822 = vmatprep.subr.bf16.mxu0 0
    %1823 = vmatpush2.bf16.msra.mxu0 0
    %1824 = vmatprep.subr.bf16.mxu0 0
    %1825 = vmatpush2.bf16.msra.mxu0 0
    %1826 = vmatprep.subr.bf16.mxu0 0
    %1827 = vmatpush2.bf16.msra.mxu0 0
    %1828 = vmatprep.mubr.bf16.mxu0 0
    %1829 = vmatmul.mubr.bf16.gmra.mxu0 %v1794
    %v1830 = vpop.f32.mrf.mxu0
    %v1831 = vadd.f32 0.0, %v1830
    %v1832 = vpop.f32.mrf.mxu0
    %v1833 = vadd.f32 0.0, %v1832
    %v1834 = vpop.f32.mrf.mxu0
    %v1835 = vpop.f32.mrf.mxu0
    %1836 = vdwg.mxu0
    %v1837 = vadd.f32 %v1590, %v1831
    %v1838 = vadd.f32 %v1591, %v1833
    %v1839 = vxor.u32 %v1837, 2147483648
    %v1840 = vxor.u32 %v1838, 2147483648
    %v1841 = vmul.f32 %v1839, 1.442695
    %v1842 = vpow.pop %v1841
    %v1843 = vmul.f32 %v1840, 1.442695
    %v1844 = vpow.pop %v1843
    %v1845 = vadd.f32 %v1842, 1.0
    %v1846 = vadd.f32 %v1844, 1.0
    %v1847 = vrcp.pop %v1845
    %v1848 = vmul.f32 1.0, %v1847
    %v1849 = vrcp.pop %v1846
    %v1850 = vmul.f32 1.0, %v1849
    %v1851 = vtanh.pop %v1838
    %v1852 = vmul.f32 %v1848, %v1785
    %1854 = vrot.lane.b32.xlu0 %v1851, 64
    %v1855 = vpop.permute.xlu0 %1854
    %v1857 = vmul.f32 %v1848, %v1855
    %1859 = vrot.lane.b32.xlu0 %v1857, 64
    %v1860 = vpop.permute.xlu0 %1859
    %v1862 = vadd.f32 %v1852, %v1860
    %v1863 = vtanh.pop %v1862
    %1865 = vrot.lane.b32.xlu0 %v1863, 64
    %v1866 = vpop.permute.xlu0 %1865
    %v1868 = vmul.f32 %v1850, %v1866
    %v1869 = vpack.c.bf16 %v1868, %v1868
    %v1871 = vsel %vm433, %v1869, 0
    %1873 = vmatprep.subr.bf16.mxu0 0
    %1874 = vmatpush1.bf16.msra.mxu0 0
    %1875 = vmatprep.subr.bf16.mxu0 0
    %1876 = vmatpush1.bf16.msra.mxu0 0
    %1877 = vmatprep.subr.bf16.mxu0 0
    %1878 = vmatpush1.bf16.msra.mxu0 0
    %1879 = vmatprep.subr.bf16.mxu0 0
    %1880 = vmatpush1.bf16.msra.mxu0 0
    %1881 = vmatprep.subr.bf16.mxu0 %v1633
    %1882 = vmatpush1.bf16.msra.mxu0 %v1632
    %1883 = vmatprep.subr.bf16.mxu0 %v1631
    %1884 = vmatpush1.bf16.msra.mxu0 %v1630
    %1885 = vmatprep.subr.bf16.mxu0 %v1629
    %1886 = vmatpush1.bf16.msra.mxu0 %v1628
    %1887 = vmatprep.subr.bf16.mxu0 %v1627
    %1888 = vmatpush1.bf16.msra.mxu0 %v1626
    %1889 = vmatprep.subr.bf16.mxu0 0
    %1890 = vmatpush2.bf16.msra.mxu0 0
    %1891 = vmatprep.subr.bf16.mxu0 0
    %1892 = vmatpush2.bf16.msra.mxu0 0
    %1893 = vmatprep.subr.bf16.mxu0 0
    %1894 = vmatpush2.bf16.msra.mxu0 0
    %1895 = vmatprep.subr.bf16.mxu0 0
    %1896 = vmatpush2.bf16.msra.mxu0 0
    %1897 = vmatprep.subr.bf16.mxu0 0
    %1898 = vmatpush2.bf16.msra.mxu0 0
    %1899 = vmatprep.subr.bf16.mxu0 0
    %1900 = vmatpush2.bf16.msra.mxu0 0
    %1901 = vmatprep.subr.bf16.mxu0 0
    %1902 = vmatpush2.bf16.msra.mxu0 0
    %1903 = vmatprep.subr.bf16.mxu0 0
    %1904 = vmatpush2.bf16.msra.mxu0 0
    %1905 = vmatprep.mubr.bf16.mxu0 0
    %1906 = vmatmul.mubr.bf16.gmra.mxu0 %v1871
    %v1907 = vpop.f32.mrf.mxu0
    %v1908 = vadd.f32 0.0, %v1907
    %v1909 = vpop.f32.mrf.mxu0
    %v1910 = vadd.f32 0.0, %v1909
    %v1911 = vpop.f32.mrf.mxu0
    %v1912 = vpop.f32.mrf.mxu0
    %1913 = vdwg.mxu0
    %v1914 = vadd.f32 %v1592, %v1908
    %v1915 = vadd.f32 %v1593, %v1910
    %v1916 = vxor.u32 %v1914, 2147483648
    %v1917 = vxor.u32 %v1915, 2147483648
    %v1918 = vmul.f32 %v1916, 1.442695
    %v1919 = vpow.pop %v1918
    %v1920 = vmul.f32 %v1917, 1.442695
    %v1921 = vpow.pop %v1920
    %v1922 = vadd.f32 %v1919, 1.0
    %v1923 = vadd.f32 %v1921, 1.0
    %v1924 = vrcp.pop %v1922
    %v1925 = vmul.f32 1.0, %v1924
    %v1926 = vrcp.pop %v1923
    %v1927 = vmul.f32 1.0, %v1926
    %v1928 = vtanh.pop %v1915
    %v1929 = vmul.f32 %v1925, %v1862
    %1931 = vrot.lane.b32.xlu0 %v1928, 64
    %v1932 = vpop.permute.xlu0 %1931
    %v1934 = vmul.f32 %v1925, %v1932
    %1936 = vrot.lane.b32.xlu0 %v1934, 64
    %v1937 = vpop.permute.xlu0 %1936
    %v1939 = vadd.f32 %v1929, %v1937
    %v1940 = vtanh.pop %v1939
    %1942 = vrot.lane.b32.xlu0 %v1940, 64
    %v1943 = vpop.permute.xlu0 %1942
    %v1945 = vmul.f32 %v1927, %v1943
    %v1946 = vpack.c.bf16 %v1945, %v1945
    %v1948 = vsel %vm433, %v1946, 0
    %1950 = vmatprep.subr.bf16.mxu0 0
    %1951 = vmatpush1.bf16.msra.mxu0 0
    %1952 = vmatprep.subr.bf16.mxu0 0
    %1953 = vmatpush1.bf16.msra.mxu0 0
    %1954 = vmatprep.subr.bf16.mxu0 0
    %1955 = vmatpush1.bf16.msra.mxu0 0
    %1956 = vmatprep.subr.bf16.mxu0 0
    %1957 = vmatpush1.bf16.msra.mxu0 0
    %1958 = vmatprep.subr.bf16.mxu0 %v1633
    %1959 = vmatpush1.bf16.msra.mxu0 %v1632
    %1960 = vmatprep.subr.bf16.mxu0 %v1631
    %1961 = vmatpush1.bf16.msra.mxu0 %v1630
    %1962 = vmatprep.subr.bf16.mxu0 %v1629
    %1963 = vmatpush1.bf16.msra.mxu0 %v1628
    %1964 = vmatprep.subr.bf16.mxu0 %v1627
    %1965 = vmatpush1.bf16.msra.mxu0 %v1626
    %1966 = vmatprep.subr.bf16.mxu0 0
    %1967 = vmatpush2.bf16.msra.mxu0 0
    %1968 = vmatprep.subr.bf16.mxu0 0
    %1969 = vmatpush2.bf16.msra.mxu0 0
    %1970 = vmatprep.subr.bf16.mxu0 0
    %1971 = vmatpush2.bf16.msra.mxu0 0
    %1972 = vmatprep.subr.bf16.mxu0 0
    %1973 = vmatpush2.bf16.msra.mxu0 0
    %1974 = vmatprep.subr.bf16.mxu0 0
    %1975 = vmatpush2.bf16.msra.mxu0 0
    %1976 = vmatprep.subr.bf16.mxu0 0
    %1977 = vmatpush2.bf16.msra.mxu0 0
    %1978 = vmatprep.subr.bf16.mxu0 0
    %1979 = vmatpush2.bf16.msra.mxu0 0
    %1980 = vmatprep.subr.bf16.mxu0 0
    %1981 = vmatpush2.bf16.msra.mxu0 0
    %1982 = vmatprep.mubr.bf16.mxu0 0
    %1983 = vmatmul.mubr.bf16.gmra.mxu0 %v1948
    %v1984 = vpop.f32.mrf.mxu0
    %v1985 = vadd.f32 0.0, %v1984
    %v1986 = vpop.f32.mrf.mxu0
    %v1987 = vadd.f32 0.0, %v1986
    %v1988 = vpop.f32.mrf.mxu0
    %v1989 = vpop.f32.mrf.mxu0
    %1990 = vdwg.mxu0
    %v1991 = vadd.f32 %v1594, %v1985
    %v1992 = vadd.f32 %v1595, %v1987
    %v1993 = vxor.u32 %v1991, 2147483648
    %v1994 = vxor.u32 %v1992, 2147483648
    %v1995 = vmul.f32 %v1993, 1.442695
    %v1996 = vpow.pop %v1995
    %v1997 = vmul.f32 %v1994, 1.442695
    %v1998 = vpow.pop %v1997
    %v1999 = vadd.f32 %v1996, 1.0
    %v2000 = vadd.f32 %v1998, 1.0
    %v2001 = vrcp.pop %v1999
    %v2002 = vmul.f32 1.0, %v2001
    %v2003 = vrcp.pop %v2000
    %v2004 = vmul.f32 1.0, %v2003
    %v2005 = vtanh.pop %v1992
    %v2006 = vmul.f32 %v2002, %v1939
    %2008 = vrot.lane.b32.xlu0 %v2005, 64
    %v2009 = vpop.permute.xlu0 %2008
    %v2011 = vmul.f32 %v2002, %v2009
    %2013 = vrot.lane.b32.xlu0 %v2011, 64
    %v2014 = vpop.permute.xlu0 %2013
    %v2016 = vadd.f32 %v2006, %v2014
    %v2017 = vtanh.pop %v2016
    %2019 = vrot.lane.b32.xlu0 %v2017, 64
    %v2020 = vpop.permute.xlu0 %2019
    %v2022 = vmul.f32 %v2004, %v2020
    %v2023 = vpack.c.bf16 %v2022, %v2022
    %v2025 = vsel %vm433, %v2023, 0
    %2027 = vmatprep.subr.bf16.mxu0 0
    %2028 = vmatpush1.bf16.msra.mxu0 0
    %2029 = vmatprep.subr.bf16.mxu0 0
    %2030 = vmatpush1.bf16.msra.mxu0 0
    %2031 = vmatprep.subr.bf16.mxu0 0
    %2032 = vmatpush1.bf16.msra.mxu0 0
    %2033 = vmatprep.subr.bf16.mxu0 0
    %2034 = vmatpush1.bf16.msra.mxu0 0
    %2035 = vmatprep.subr.bf16.mxu0 %v1633
    %2036 = vmatpush1.bf16.msra.mxu0 %v1632
    %2037 = vmatprep.subr.bf16.mxu0 %v1631
    %2038 = vmatpush1.bf16.msra.mxu0 %v1630
    %2039 = vmatprep.subr.bf16.mxu0 %v1629
    %2040 = vmatpush1.bf16.msra.mxu0 %v1628
    %2041 = vmatprep.subr.bf16.mxu0 %v1627
    %2042 = vmatpush1.bf16.msra.mxu0 %v1626
    %2043 = vmatprep.subr.bf16.mxu0 0
    %2044 = vmatpush2.bf16.msra.mxu0 0
    %2045 = vmatprep.subr.bf16.mxu0 0
    %2046 = vmatpush2.bf16.msra.mxu0 0
    %2047 = vmatprep.subr.bf16.mxu0 0
    %2048 = vmatpush2.bf16.msra.mxu0 0
    %2049 = vmatprep.subr.bf16.mxu0 0
    %2050 = vmatpush2.bf16.msra.mxu0 0
    %2051 = vmatprep.subr.bf16.mxu0 0
    %2052 = vmatpush2.bf16.msra.mxu0 0
    %2053 = vmatprep.subr.bf16.mxu0 0
    %2054 = vmatpush2.bf16.msra.mxu0 0
    %2055 = vmatprep.subr.bf16.mxu0 0
    %2056 = vmatpush2.bf16.msra.mxu0 0
    %2057 = vmatprep.subr.bf16.mxu0 0
    %2058 = vmatpush2.bf16.msra.mxu0 0
    %2059 = vmatprep.mubr.bf16.mxu0 0
    %2060 = vmatmul.mubr.bf16.gmra.mxu0 %v2025
    %v2061 = vpop.f32.mrf.mxu0
    %v2062 = vadd.f32 0.0, %v2061
    %v2063 = vpop.f32.mrf.mxu0
    %v2064 = vadd.f32 0.0, %v2063
    %v2065 = vpop.f32.mrf.mxu0
    %v2066 = vpop.f32.mrf.mxu0
    %2067 = vdwg.mxu0
    %v2068 = vadd.f32 %v1596, %v2062
    %v2069 = vadd.f32 %v1597, %v2064
    %v2070 = vxor.u32 %v2068, 2147483648
    %v2071 = vxor.u32 %v2069, 2147483648
    %v2072 = vmul.f32 %v2070, 1.442695
    %v2073 = vpow.pop %v2072
    %v2074 = vmul.f32 %v2071, 1.442695
    %v2075 = vpow.pop %v2074
    %v2076 = vadd.f32 %v2073, 1.0
    %v2077 = vadd.f32 %v2075, 1.0
    %v2078 = vrcp.pop %v2076
    %v2079 = vmul.f32 1.0, %v2078
    %v2080 = vrcp.pop %v2077
    %v2081 = vmul.f32 1.0, %v2080
    %v2082 = vtanh.pop %v2069
    %v2083 = vmul.f32 %v2079, %v2016
    %2085 = vrot.lane.b32.xlu0 %v2082, 64
    %v2086 = vpop.permute.xlu0 %2085
    %v2088 = vmul.f32 %v2079, %v2086
    %2090 = vrot.lane.b32.xlu0 %v2088, 64
    %v2091 = vpop.permute.xlu0 %2090
    %v2093 = vadd.f32 %v2083, %v2091
    %v2094 = vtanh.pop %v2093
    %2096 = vrot.lane.b32.xlu0 %v2094, 64
    %v2097 = vpop.permute.xlu0 %2096
    %v2099 = vmul.f32 %v2081, %v2097
    %v2100 = vpack.c.bf16 %v2099, %v2099
    %v2102 = vsel %vm433, %v2100, 0
    %2104 = vmatprep.subr.bf16.mxu0 0
    %2105 = vmatpush1.bf16.msra.mxu0 0
    %2106 = vmatprep.subr.bf16.mxu0 0
    %2107 = vmatpush1.bf16.msra.mxu0 0
    %2108 = vmatprep.subr.bf16.mxu0 0
    %2109 = vmatpush1.bf16.msra.mxu0 0
    %2110 = vmatprep.subr.bf16.mxu0 0
    %2111 = vmatpush1.bf16.msra.mxu0 0
    %2112 = vmatprep.subr.bf16.mxu0 %v1633
    %2113 = vmatpush1.bf16.msra.mxu0 %v1632
    %2114 = vmatprep.subr.bf16.mxu0 %v1631
    %2115 = vmatpush1.bf16.msra.mxu0 %v1630
    %2116 = vmatprep.subr.bf16.mxu0 %v1629
    %2117 = vmatpush1.bf16.msra.mxu0 %v1628
    %2118 = vmatprep.subr.bf16.mxu0 %v1627
    %2119 = vmatpush1.bf16.msra.mxu0 %v1626
    %2120 = vmatprep.subr.bf16.mxu0 0
    %2121 = vmatpush2.bf16.msra.mxu0 0
    %2122 = vmatprep.subr.bf16.mxu0 0
    %2123 = vmatpush2.bf16.msra.mxu0 0
    %2124 = vmatprep.subr.bf16.mxu0 0
    %2125 = vmatpush2.bf16.msra.mxu0 0
    %2126 = vmatprep.subr.bf16.mxu0 0
    %2127 = vmatpush2.bf16.msra.mxu0 0
    %2128 = vmatprep.subr.bf16.mxu0 0
    %2129 = vmatpush2.bf16.msra.mxu0 0
    %2130 = vmatprep.subr.bf16.mxu0 0
    %2131 = vmatpush2.bf16.msra.mxu0 0
    %2132 = vmatprep.subr.bf16.mxu0 0
    %2133 = vmatpush2.bf16.msra.mxu0 0
    %2134 = vmatprep.subr.bf16.mxu0 0
    %2135 = vmatpush2.bf16.msra.mxu0 0
    %2136 = vmatprep.mubr.bf16.mxu0 0
    %2137 = vmatmul.mubr.bf16.gmra.mxu0 %v2102
    %v2138 = vpop.f32.mrf.mxu0
    %v2139 = vadd.f32 0.0, %v2138
    %v2140 = vpop.f32.mrf.mxu0
    %v2141 = vadd.f32 0.0, %v2140
    %v2142 = vpop.f32.mrf.mxu0
    %v2143 = vpop.f32.mrf.mxu0
    %2144 = vdwg.mxu0
    %v2145 = vadd.f32 %v1598, %v2139
    %v2146 = vadd.f32 %v1599, %v2141
    %v2147 = vxor.u32 %v2145, 2147483648
    %v2148 = vxor.u32 %v2146, 2147483648
    %v2149 = vmul.f32 %v2147, 1.442695
    %v2150 = vpow.pop %v2149
    %v2151 = vmul.f32 %v2148, 1.442695
    %v2152 = vpow.pop %v2151
    %v2153 = vadd.f32 %v2150, 1.0
    %v2154 = vadd.f32 %v2152, 1.0
    %v2155 = vrcp.pop %v2153
    %v2156 = vmul.f32 1.0, %v2155
    %v2157 = vrcp.pop %v2154
    %v2158 = vmul.f32 1.0, %v2157
    %v2159 = vtanh.pop %v2146
    %v2160 = vmul.f32 %v2156, %v2093
    %2162 = vrot.lane.b32.xlu0 %v2159, 64
    %v2163 = vpop.permute.xlu0 %2162
    %v2165 = vmul.f32 %v2156, %v2163
    %2167 = vrot.lane.b32.xlu0 %v2165, 64
    %v2168 = vpop.permute.xlu0 %2167
    %v2170 = vadd.f32 %v2160, %v2168
    %v2171 = vtanh.pop %v2170
    %2173 = vrot.lane.b32.xlu0 %v2171, 64
    %v2174 = vpop.permute.xlu0 %2173
    %v2176 = vmul.f32 %v2158, %v2174
    %v2177 = vpack.c.bf16 %v2176, %v2176
    %v2179 = vsel %vm433, %v2177, 0
    %2181 = vmatprep.subr.bf16.mxu0 0
    %2182 = vmatpush1.bf16.msra.mxu0 0
    %2183 = vmatprep.subr.bf16.mxu0 0
    %2184 = vmatpush1.bf16.msra.mxu0 0
    %2185 = vmatprep.subr.bf16.mxu0 0
    %2186 = vmatpush1.bf16.msra.mxu0 0
    %2187 = vmatprep.subr.bf16.mxu0 0
    %2188 = vmatpush1.bf16.msra.mxu0 0
    %2189 = vmatprep.subr.bf16.mxu0 %v1633
    %2190 = vmatpush1.bf16.msra.mxu0 %v1632
    %2191 = vmatprep.subr.bf16.mxu0 %v1631
    %2192 = vmatpush1.bf16.msra.mxu0 %v1630
    %2193 = vmatprep.subr.bf16.mxu0 %v1629
    %2194 = vmatpush1.bf16.msra.mxu0 %v1628
    %2195 = vmatprep.subr.bf16.mxu0 %v1627
    %2196 = vmatpush1.bf16.msra.mxu0 %v1626
    %2197 = vmatprep.subr.bf16.mxu0 0
    %2198 = vmatpush2.bf16.msra.mxu0 0
    %2199 = vmatprep.subr.bf16.mxu0 0
    %2200 = vmatpush2.bf16.msra.mxu0 0
    %2201 = vmatprep.subr.bf16.mxu0 0
    %2202 = vmatpush2.bf16.msra.mxu0 0
    %2203 = vmatprep.subr.bf16.mxu0 0
    %2204 = vmatpush2.bf16.msra.mxu0 0
    %2205 = vmatprep.subr.bf16.mxu0 0
    %2206 = vmatpush2.bf16.msra.mxu0 0
    %2207 = vmatprep.subr.bf16.mxu0 0
    %2208 = vmatpush2.bf16.msra.mxu0 0
    %2209 = vmatprep.subr.bf16.mxu0 0
    %2210 = vmatpush2.bf16.msra.mxu0 0
    %2211 = vmatprep.subr.bf16.mxu0 0
    %2212 = vmatpush2.bf16.msra.mxu0 0
    %2213 = vmatprep.mubr.bf16.mxu0 0
    %2214 = vmatmul.mubr.bf16.gmra.mxu0 %v2179
    %v2215 = vpop.f32.mrf.mxu0
    %v2216 = vadd.f32 0.0, %v2215
    %v2217 = vpop.f32.mrf.mxu0
    %v2218 = vadd.f32 0.0, %v2217
    %v2219 = vpop.f32.mrf.mxu0
    %v2220 = vpop.f32.mrf.mxu0
    %2221 = vdwg.mxu0
    %v2222 = vadd.f32 %v1600, %v2216
    %v2223 = vadd.f32 %v1601, %v2218
    %v2224 = vxor.u32 %v2222, 2147483648
    %v2225 = vxor.u32 %v2223, 2147483648
    %v2226 = vmul.f32 %v2224, 1.442695
    %v2227 = vpow.pop %v2226
    %v2228 = vmul.f32 %v2225, 1.442695
    %v2229 = vpow.pop %v2228
    %v2230 = vadd.f32 %v2227, 1.0
    %v2231 = vadd.f32 %v2229, 1.0
    %v2232 = vrcp.pop %v2230
    %v2233 = vmul.f32 1.0, %v2232
    %v2234 = vrcp.pop %v2231
    %v2235 = vmul.f32 1.0, %v2234
    %v2236 = vtanh.pop %v2223
    %v2237 = vmul.f32 %v2233, %v2170
    %2239 = vrot.lane.b32.xlu0 %v2236, 64
    %v2240 = vpop.permute.xlu0 %2239
    %v2242 = vmul.f32 %v2233, %v2240
    %2244 = vrot.lane.b32.xlu0 %v2242, 64
    %v2245 = vpop.permute.xlu0 %2244
    %v2247 = vadd.f32 %v2237, %v2245
    %v2248 = vtanh.pop %v2247
    %2250 = vrot.lane.b32.xlu0 %v2248, 64
    %v2251 = vpop.permute.xlu0 %2250
    %v2253 = vmul.f32 %v2235, %v2251
    %v2254 = vld [vmem:[%s9] sm:$0xf]
    %v2255 = vld [vmem:[%s9 + $0x4] sm:$0xf]
    %v2256 = vld [vmem:[%s9 + $0x8] sm:$0xf]
    %v2257 = vld [vmem:[%s9 + $0xc] sm:$0xf]
    %v2258 = vld [vmem:[%s9 + $0x10] sm:$0xf]
    %v2259 = vld [vmem:[%s9 + $0x14] sm:$0xf]
    %v2260 = vld [vmem:[%s9 + $0x18] sm:$0xf]
    %v2261 = vld [vmem:[%s9 + $0x1c] sm:$0xf]
    %v2262 = vpack.c.bf16 %v1791, %v1714
    %v2263 = vpack.c.bf16 %v1945, %v1868
    %v2264 = vpack.c.bf16 %v2099, %v2022
    %v2265 = vpack.c.bf16 %v2253, %v2176
    %v2266 = vpack.c.bf16 %v2176, %v2253
    %v2267 = vpack.c.bf16 %v2022, %v2099
    %v2268 = vpack.c.bf16 %v1868, %v1945
    %v2269 = vpack.c.bf16 %v1714, %v1791
    %2274 = vrot.lane.b32.xlu0 %v2266, 96
    %v2275 = vpop.permute.xlu0 %2274
    %2276 = vrot.lane.b32.xlu0 %v2267, 96
    %v2277 = vpop.permute.xlu0 %2276
    %2278 = vrot.lane.b32.xlu0 %v2268, 96
    %v2279 = vpop.permute.xlu0 %2278
    %2280 = vrot.lane.b32.xlu0 %v2269, 96
    %v2281 = vpop.permute.xlu0 %2280
    %v2286 = vunpack.c.l.b16 %v2258
    %v2287 = vunpack.c.l.b16 %v2259
    %v2288 = vunpack.c.l.b16 %v2260
    %v2289 = vunpack.c.l.b16 %v2261
    %v2290 = vpack.c.b16 %v2287, %v2286
    %v2291 = vpack.c.b16 %v2289, %v2288
    %v2295 = vsel %vm1102, %v2275, 0
    %v2298 = vsel %vm1102, %v2277, 0
    %v2301 = vsel %vm1102, %v2279, 0
    %v2304 = vsel %vm1102, %v2281, 0
    %2306 = vmatprep.subr.bf16.mxu0 0
    %2307 = vmatpush1.bf16.msra.mxu0 0
    %2308 = vmatprep.subr.bf16.mxu0 0
    %2309 = vmatpush1.bf16.msra.mxu0 0
    %2310 = vmatprep.subr.bf16.mxu0 0
    %2311 = vmatpush1.bf16.msra.mxu0 0
    %2312 = vmatprep.subr.bf16.mxu0 0
    %2313 = vmatpush1.bf16.msra.mxu0 0
    %2314 = vmatprep.subr.bf16.mxu0 0
    %2315 = vmatpush1.bf16.msra.mxu0 0
    %2316 = vmatprep.subr.bf16.mxu0 0
    %2317 = vmatpush1.bf16.msra.mxu0 0
    %2318 = vmatprep.subr.bf16.mxu0 0
    %2319 = vmatpush1.bf16.msra.mxu0 %v2291
    %2320 = vmatprep.subr.bf16.mxu0 0
    %2321 = vmatpush1.bf16.msra.mxu0 %v2290
    %2322 = vmatprep.subr.bf16.mxu0 0
    %2323 = vmatpush2.bf16.msra.mxu0 0
    %2324 = vmatprep.subr.bf16.mxu0 0
    %2325 = vmatpush2.bf16.msra.mxu0 0
    %2326 = vmatprep.subr.bf16.mxu0 0
    %2327 = vmatpush2.bf16.msra.mxu0 0
    %2328 = vmatprep.subr.bf16.mxu0 0
    %2329 = vmatpush2.bf16.msra.mxu0 0
    %2330 = vmatprep.subr.bf16.mxu0 0
    %2331 = vmatpush2.bf16.msra.mxu0 0
    %2332 = vmatprep.subr.bf16.mxu0 0
    %2333 = vmatpush2.bf16.msra.mxu0 0
    %2334 = vmatprep.subr.bf16.mxu0 0
    %2335 = vmatpush2.bf16.msra.mxu0 0
    %2336 = vmatprep.subr.bf16.mxu0 0
    %2337 = vmatpush2.bf16.msra.mxu0 0
    %2338 = vmatprep.mubr.bf16.mxu0 0
    %2339 = vmatmul.mubr.bf16.gmra.mxu0 %v2295
    %v2340 = vpop.f32.mrf.mxu0
    %v2341 = vadd.f32 0.0, %v2340
    %v2342 = vpop.f32.mrf.mxu0
    %v2343 = vpop.f32.mrf.mxu0
    %v2344 = vadd.f32 0.0, %v2343
    %v2345 = vpop.f32.mrf.mxu0
    %2346 = vmatprep.mubr.bf16.mxu0 0
    %2347 = vmatmul.mubr.bf16.gmra.mxu0 %v2298
    %v2348 = vpop.f32.mrf.mxu0
    %v2349 = vadd.f32 0.0, %v2348
    %v2350 = vpop.f32.mrf.mxu0
    %v2351 = vpop.f32.mrf.mxu0
    %v2352 = vadd.f32 0.0, %v2351
    %v2353 = vpop.f32.mrf.mxu0
    %2354 = vmatprep.mubr.bf16.mxu0 0
    %2355 = vmatmul.mubr.bf16.gmra.mxu0 %v2301
    %v2356 = vpop.f32.mrf.mxu0
    %v2357 = vadd.f32 0.0, %v2356
    %v2358 = vpop.f32.mrf.mxu0
    %v2359 = vpop.f32.mrf.mxu0
    %v2360 = vadd.f32 0.0, %v2359
    %v2361 = vpop.f32.mrf.mxu0
    %2362 = vmatprep.mubr.bf16.mxu0 0
    %2363 = vmatmul.mubr.bf16.gmra.mxu0 %v2304
    %v2364 = vpop.f32.mrf.mxu0
    %v2365 = vadd.f32 0.0, %v2364
    %v2366 = vpop.f32.mrf.mxu0
    %v2367 = vpop.f32.mrf.mxu0
    %v2368 = vadd.f32 0.0, %v2367
    %v2369 = vpop.f32.mrf.mxu0
    %2370 = vdwg.mxu0
    %v2375 = vunpack.c.l.b16 %v2254
    %v2376 = vunpack.c.l.b16 %v2255
    %v2377 = vunpack.c.l.b16 %v2256
    %v2378 = vunpack.c.l.b16 %v2257
    %v2379 = vpack.c.b16 %v2376, %v2375
    %v2380 = vpack.c.b16 %v2378, %v2377
    %v2384 = vsel %vm1102, %v2262, 0
    %v2387 = vsel %vm1102, %v2263, 0
    %v2390 = vsel %vm1102, %v2264, 0
    %v2393 = vsel %vm1102, %v2265, 0
    %2395 = vmatprep.subr.bf16.mxu0 0
    %2396 = vmatpush1.bf16.msra.mxu0 0
    %2397 = vmatprep.subr.bf16.mxu0 0
    %2398 = vmatpush1.bf16.msra.mxu0 0
    %2399 = vmatprep.subr.bf16.mxu0 0
    %2400 = vmatpush1.bf16.msra.mxu0 0
    %2401 = vmatprep.subr.bf16.mxu0 0
    %2402 = vmatpush1.bf16.msra.mxu0 0
    %2403 = vmatprep.subr.bf16.mxu0 0
    %2404 = vmatpush1.bf16.msra.mxu0 0
    %2405 = vmatprep.subr.bf16.mxu0 0
    %2406 = vmatpush1.bf16.msra.mxu0 0
    %2407 = vmatprep.subr.bf16.mxu0 0
    %2408 = vmatpush1.bf16.msra.mxu0 %v2380
    %2409 = vmatprep.subr.bf16.mxu0 0
    %2410 = vmatpush1.bf16.msra.mxu0 %v2379
    %2411 = vmatprep.subr.bf16.mxu0 0
    %2412 = vmatpush2.bf16.msra.mxu0 0
    %2413 = vmatprep.subr.bf16.mxu0 0
    %2414 = vmatpush2.bf16.msra.mxu0 0
    %2415 = vmatprep.subr.bf16.mxu0 0
    %2416 = vmatpush2.bf16.msra.mxu0 0
    %2417 = vmatprep.subr.bf16.mxu0 0
    %2418 = vmatpush2.bf16.msra.mxu0 0
    %2419 = vmatprep.subr.bf16.mxu0 0
    %2420 = vmatpush2.bf16.msra.mxu0 0
    %2421 = vmatprep.subr.bf16.mxu0 0
    %2422 = vmatpush2.bf16.msra.mxu0 0
    %2423 = vmatprep.subr.bf16.mxu0 0
    %2424 = vmatpush2.bf16.msra.mxu0 0
    %2425 = vmatprep.subr.bf16.mxu0 0
    %2426 = vmatpush2.bf16.msra.mxu0 0
    %2427 = vmatprep.mubr.bf16.mxu0 0
    %2428 = vmatmul.mubr.bf16.gmra.mxu0 %v2384
    %v2429 = vpop.f32.mrf.mxu0
    %v2430 = vadd.f32 %v2341, %v2429
    %v2431 = vpop.f32.mrf.mxu0
    %v2432 = vpop.f32.mrf.mxu0
    %v2433 = vadd.f32 %v2344, %v2432
    %v2434 = vpop.f32.mrf.mxu0
    %2435 = vmatprep.mubr.bf16.mxu0 0
    %2436 = vmatmul.mubr.bf16.gmra.mxu0 %v2387
    %v2437 = vpop.f32.mrf.mxu0
    %v2438 = vadd.f32 %v2349, %v2437
    %v2439 = vpop.f32.mrf.mxu0
    %v2440 = vpop.f32.mrf.mxu0
    %v2441 = vadd.f32 %v2352, %v2440
    %v2442 = vpop.f32.mrf.mxu0
    %2443 = vmatprep.mubr.bf16.mxu0 0
    %2444 = vmatmul.mubr.bf16.gmra.mxu0 %v2390
    %v2445 = vpop.f32.mrf.mxu0
    %v2446 = vadd.f32 %v2357, %v2445
    %v2447 = vpop.f32.mrf.mxu0
    %v2448 = vpop.f32.mrf.mxu0
    %v2449 = vadd.f32 %v2360, %v2448
    %v2450 = vpop.f32.mrf.mxu0
    %2451 = vmatprep.mubr.bf16.mxu0 0
    %2452 = vmatmul.mubr.bf16.gmra.mxu0 %v2393
    %v2453 = vpop.f32.mrf.mxu0
    %v2454 = vadd.f32 %v2365, %v2453
    %v2455 = vpop.f32.mrf.mxu0
    %v2456 = vpop.f32.mrf.mxu0
    %v2457 = vadd.f32 %v2368, %v2456
    %v2458 = vpop.f32.mrf.mxu0
    %2459 = vdwg.mxu0
    %v2460 = vld [vmem:[%s10] sm:$0x1]
    %v2462 = vlaneseq
    %v2463 = vshrl.u32 %v2462, 7
    %v2464 = vsub.s32 0, %v2463
    %v2465 = vrot.slane %v2460, %v2464
    %v2467 = vadd.f32 %v2430, %v2465
    %v2468 = vadd.f32 %v2433, %v2465
    %v2469 = vadd.f32 %v2438, %v2465
    %v2470 = vadd.f32 %v2441, %v2465
    %v2471 = vadd.f32 %v2446, %v2465
    %v2472 = vadd.f32 %v2449, %v2465
    %v2473 = vadd.f32 %v2454, %v2465
    %v2474 = vadd.f32 %v2457, %v2465
    %vm2475 = vcmask 15360
    %2476 = vst.msk [vmem:[%s11] sm:$0xff] %vm2475, %v2467
    %2477 = vst.msk [vmem:[%s11 + $0x8] sm:$0xff] %vm2475, %v2468
    %2478 = vst.msk [vmem:[%s11 + $0x10] sm:$0xff] %vm2475, %v2469
    %2479 = vst.msk [vmem:[%s11 + $0x18] sm:$0xff] %vm2475, %v2470
    %2480 = vst.msk [vmem:[%s11 + $0x20] sm:$0xff] %vm2475, %v2471
    %2481 = vst.msk [vmem:[%s11 + $0x28] sm:$0xff] %vm2475, %v2472
    %2482 = vst.msk [vmem:[%s11 + $0x30] sm:$0xff] %vm2475, %v2473
    %2483 = vst.msk [vmem:[%s11 + $0x38] sm:$0xff] %vm2475, %v2474
    // Predicated region
    $region74: #{bilstm_forward.1} parent=1 // pred_check
      _
    $region75: #{bilstm_forward.1} parent=1 // pred_check_branch
      %2485 = sbr.rel (0) target = $region77
    $region76: #{bilstm_forward.1} parent=1 // pred_region
      _
    $region77: #{bilstm_forward.1} parent=1 // pred_fallthru
      _
    // Predicated region
    $region78: #{bilstm_forward.1} parent=1 // pred_check
      _
    $region79: #{bilstm_forward.1} parent=1 // pred_check_branch
      %2487 = sbr.rel (0) target = $region81
    $region80: #{bilstm_forward.1} parent=1 // pred_region
      _
    $region81: #{bilstm_forward.1} parent=1 // pred_fallthru
      _
    %2488 = vsyncpa [#allocation3], 1
    %2489 = vsyncpa [#allocation5], 1
    %2490 = vsyncpa [#allocation8], 1
    %2491 = vsyncpa [#allocation11], 1

</llo_original>
